<compile_context>
chip_gen: v6e
topology: v6e:2x2x1
jax: 0.10.0
libtpu: 0.0.40
codegen_flags: <defaults>
</compile_context>

<pallas_src>
import functools

import jax
import jax.numpy as jnp
from jax import lax
from jax.experimental import pallas as pl
from jax.experimental.pallas import tpu as pltpu


# ----------------------------- Pallas kernel -------------------------------- #

def _rcb_fused_kernel(xe_ref, w1_ref, b1_ref, alpha_ref, w2_ref, b2_ref, mask_ref,
                      o_ref, mid_ref, *, wp):
    """Fused conv3x3 -> PReLU -> conv3x3 -> +x for one image.

    xe_ref:    (1, C, P + 2E) zero-padded image, flattened padded spatial axis with an
                              extra E-wide zero halo so every tap is a plain static slice.
    w*_ref:    (9, C, C)      per-tap (Cout, Cin) weight matrices, tap order (kh, kw).
    b*_ref:    (C, 1)         biases (broadcast over the lane-dense spatial axis).
    alpha_ref: (1, 1) SMEM    shared PReLU slope.
    mask_ref:  (1, P)         1.0 on interior (real) pixels of the padded grid, else 0.
    o_ref:     (1, C, P)      output on the padded grid (interior extracted by wrapper).
    mid_ref:   (C, P + 2E)    VMEM scratch: stage-1 activation with zero halo.
    """
    c = o_ref.shape[1]
    p = o_ref.shape[2]
    e = (mid_ref.shape[1] - p) // 2
    ntap = w1_ref.shape[0]

    def conv_taps(read, w_ref):
        acc = jnp.zeros((c, p), jnp.float32)
        for t in range(ntap):
            kh, kw = t // 3, t % 3
            off = (kh - 1) * wp + (kw - 1)
            tap = w_ref[t].astype(jnp.float32)                    # (Cout, Cin)
            acc = acc + jnp.dot(tap, read(e + off),
                                preferred_element_type=jnp.float32)
        return acc

    # ---- stage 1: conv1 + bias + PReLU (kept entirely on-chip) ----
    acc1 = conv_taps(lambda s: xe_ref[0, :, s:s + p].astype(jnp.float32), w1_ref)
    acc1 = acc1 + b1_ref[...]
    a = alpha_ref[0, 0]
    mid = jnp.where(acc1 > 0, acc1, a * acc1)
    # Zero the SAME-padding ring so conv2 sees proper zero padding.
    mid = mid * mask_ref[...]

    # Stash mid with an E-wide zero halo so conv2 taps are also plain static slices.
    mid_ref[...] = jnp.zeros_like(mid_ref)
    mid_ref[:, e:e + p] = mid

    # ---- stage 2: conv2 + bias + residual ----
    acc2 = conv_taps(lambda s: mid_ref[:, s:s + p], w2_ref)
    acc2 = acc2 + b2_ref[...]
    acc2 = acc2 + xe_ref[0, :, e:e + p].astype(jnp.float32)       # res += x
    o_ref[0] = acc2.astype(o_ref.dtype)


# ------------------------------- wrapper ------------------------------------ #

def rcb_forward(x_nchw, params):
    w1, b1, alpha, w2, b2 = (params[k] for k in ("w1", "b1", "alpha", "w2", "b2"))
    n, cin, h, w = x_nchw.shape
    cout, cin_w, kh, kw = w1.shape                 # PyTorch OIHW conv weights
    assert (cin_w, kh, kw) == (cin, 3, 3) and cout == cin

    hp, wp = h + 2, w + 2
    p = hp * wp
    e = pl.cdiv(wp + 1, 128) * 128                 # halo width, 128-aligned, >= wp + 1

    # SAME zero padding, flatten padded spatial dims, add E-wide zero halo. Pure XLA
    # glue, ~1x the input bytes (replaces the previous 2 x 9x im2col slabs in HBM).
    xpad = jnp.pad(x_nchw, ((0, 0), (0, 0), (1, 1), (1, 1)))
    xe = jnp.pad(xpad.reshape(n, cin, p), ((0, 0), (0, 0), (e, e)))

    # Per-tap (Cout, Cin) weight matrices, tap order (kh, kw) row-major.
    w1t = jnp.transpose(w1, (2, 3, 0, 1)).reshape(kh * kw, cout, cin).astype(jnp.float32)
    w2t = jnp.transpose(w2, (2, 3, 0, 1)).reshape(kh * kw, cout, cin).astype(jnp.float32)
    b1c = b1.reshape(cout, 1).astype(jnp.float32)
    b2c = b2.reshape(cout, 1).astype(jnp.float32)
    alpha2 = alpha.reshape(1, 1).astype(jnp.float32)

    # Interior mask on the flattened padded grid (1 at real pixels, 0 on the pad ring).
    rr = jnp.arange(p, dtype=jnp.int32) // wp
    cc = jnp.arange(p, dtype=jnp.int32) % wp
    interior = (rr >= 1) & (rr <= h) & (cc >= 1) & (cc <= w)
    mask = interior.astype(jnp.float32).reshape(1, p)

    # TODO(synk): for large images, tile the flattened spatial axis with a +-(W+3) halo
    # per tile and re-derive tile sizes for v5e (16 MiB scoped) / v7x (64 MiB) VMEM;
    # whole-image blocks are fine at these sizes. input_output_aliases on the residual
    # is intentionally not used here because the caller still needs x afterwards.
    out_padded = pl.pallas_call(
        functools.partial(_rcb_fused_kernel, wp=wp),
        out_shape=jax.ShapeDtypeStruct((n, cout, p), x_nchw.dtype),
        grid=(n,),
        in_specs=[
            pl.BlockSpec((1, cin, p + 2 * e), lambda i: (i, 0, 0)),
            pl.BlockSpec((kh * kw, cout, cin), lambda i: (0, 0, 0)),
            pl.BlockSpec((cout, 1), lambda i: (0, 0)),
            pl.BlockSpec(memory_space=pltpu.MemorySpace.SMEM),
            pl.BlockSpec((kh * kw, cout, cin), lambda i: (0, 0, 0)),
            pl.BlockSpec((cout, 1), lambda i: (0, 0)),
            pl.BlockSpec((1, p), lambda i: (0, 0)),
        ],
        out_specs=pl.BlockSpec((1, cout, p), lambda i: (i, 0, 0)),
        scratch_shapes=[pltpu.VMEM((cout, p + 2 * e), jnp.float32)],
        compiler_params=pltpu.CompilerParams(
            dimension_semantics=("parallel",),
            vmem_limit_bytes=32 * 1024 * 1024,
        ),
    )(xe, w1t, b1c, alpha2, w2t, b2c, mask)

    # Strip the padding ring (pure XLA slice), stay NCHW.
    out = out_padded.reshape(n, cout, hp, wp)[:, :, 1:h + 1, 1:w + 1]
    return out


# --------------------------- pure-JAX reference ------------------------------ #

def rcb_reference(x_nchw, params):
    w1, b1, alpha, w2, b2 = (params[k] for k in ("w1", "b1", "alpha", "w2", "b2"))
    dn = ("NCHW", "OIHW", "NCHW")

    def conv(z, wgt, b):
        y = lax.conv_general_dilated(z, wgt, (1, 1), "SAME", dimension_numbers=dn)
        return y + b.reshape(1, -1, 1, 1)

    y = conv(x_nchw, w1, b1)
    y = jnp.where(y > 0, y, alpha[0] * y)          # single-parameter PReLU
    return conv(y, w2, b2) + x_nchw


# --------------------------------- main -------------------------------------- #

if __name__ == "__main__":
    N, C, H, W = 2, 4, 16, 16
    K = 3

    key = jax.random.PRNGKey(0)
    k1, k2, k3, k4, kx = jax.random.split(key, 5)
    params = {
        # conv weights in PyTorch OIHW layout: (Cout, Cin, K, K); biases (Cout,)
        "w1": jax.random.normal(k1, (C, C, K, K), jnp.float32) * 0.1,
        "b1": jax.random.normal(k2, (C,), jnp.float32) * 0.1,
        "alpha": jnp.array([0.25], jnp.float32),      # nn.PReLU() default init
        "w2": jax.random.normal(k3, (C, C, K, K), jnp.float32) * 0.1,
        "b2": jax.random.normal(k4, (C,), jnp.float32) * 0.1,
    }

    x = jax.random.normal(kx, (N, C, H, W), jnp.float32)   # NCHW, like PyTorch

    out = jax.block_until_ready(rcb_forward(x, params))
    ref = jax.block_until_ready(rcb_reference(x, params))

    assert out.shape == (N, C, H, W)
    assert jnp.allclose(out, ref, atol=2e-4, rtol=2e-4), "Pallas RCB mismatch vs reference"

    print("KERNEL_OK")
</pallas_src>

<mosaic_0001>
module attributes {stable_mosaic.version = 11 : i64} {
  func.func @_rcb_fused_kernel(%arg0: i32, %arg1: memref<1x4x580xf32, #tpu.memory_space<vmem>>, %arg2: memref<9x4x4xf32, #tpu.memory_space<vmem>>, %arg3: memref<4x1xf32, #tpu.memory_space<vmem>>, %arg4: memref<1x1xf32, #tpu.memory_space<smem>>, %arg5: memref<9x4x4xf32, #tpu.memory_space<vmem>>, %arg6: memref<4x1xf32, #tpu.memory_space<vmem>>, %arg7: memref<1x324xf32, #tpu.memory_space<vmem>>, %arg8: memref<1x4x324xf32, #tpu.memory_space<vmem>>, %arg9: memref<4x580xf32, #tpu.memory_space<vmem>>) attributes {dimension_semantics = [#tpu.dimension_semantics<parallel>], iteration_bounds = array<i64: 2>, scalar_prefetch = 0 : i64, scratch_operands = 1 : i64, tpu.core_type = #tpu.core_type<tc>, window_params = [{transform_indices = @transform_0, window_bounds = array<i64: 1, 4, 580>}, {pipeline_mode = #tpu.pipeline_mode<synchronous>, transform_indices = @transform_1, window_bounds = array<i64: 9, 4, 4>}, {pipeline_mode = #tpu.pipeline_mode<synchronous>, transform_indices = @transform_2, window_bounds = array<i64: 4, 1>}, {transform_indices = @transform_3, window_bounds = array<i64: 1, 1>}, {pipeline_mode = #tpu.pipeline_mode<synchronous>, transform_indices = @transform_4, window_bounds = array<i64: 9, 4, 4>}, {pipeline_mode = #tpu.pipeline_mode<synchronous>, transform_indices = @transform_5, window_bounds = array<i64: 4, 1>}, {pipeline_mode = #tpu.pipeline_mode<synchronous>, transform_indices = @transform_6, window_bounds = array<i64: 1, 324>}, {transform_indices = @transform_7, window_bounds = array<i64: 1, 4, 324>}]} {
    %cst = arith.constant 0.000000e+00 : f32
    %0 = vector.broadcast %cst : f32 to vector<4x324xf32>
    %c0 = arith.constant 0 : index
    %c0_0 = arith.constant 0 : index
    %c0_1 = arith.constant 0 : index
    %1 = vector.load %arg2[%c0, %c0_0, %c0_1] : memref<9x4x4xf32, #tpu.memory_space<vmem>>, vector<1x4x4xf32>
    %2 = vector.shape_cast %1 : vector<1x4x4xf32> to vector<4x4xf32>
    %c0_2 = arith.constant 0 : index
    %c0_3 = arith.constant 0 : index
    %c109 = arith.constant 109 : index
    %3 = vector.load %arg1[%c0_2, %c0_3, %c109] : memref<1x4x580xf32, #tpu.memory_space<vmem>>, vector<1x4x324xf32>
    %4 = vector.shape_cast %3 : vector<1x4x324xf32> to vector<4x324xf32>
    %cst_4 = arith.constant dense<0.000000e+00> : vector<4x324xf32>
    %5 = tpu.matmul %2, %4, %cst_4 {dimension_numbers = #tpu.dot_dimension_numbers<[1], [0], [0], [1], [0, 0, 1, 1], [], []>} : vector<4x4xf32>, vector<4x324xf32>, vector<4x324xf32> -> vector<4x324xf32>
    %6 = arith.addf %0, %5 : vector<4x324xf32>
    %c1 = arith.constant 1 : index
    %c0_5 = arith.constant 0 : index
    %c0_6 = arith.constant 0 : index
    %7 = vector.load %arg2[%c1, %c0_5, %c0_6] : memref<9x4x4xf32, #tpu.memory_space<vmem>>, vector<1x4x4xf32>
    %8 = vector.shape_cast %7 : vector<1x4x4xf32> to vector<4x4xf32>
    %c0_7 = arith.constant 0 : index
    %c0_8 = arith.constant 0 : index
    %c110 = arith.constant 110 : index
    %9 = vector.load %arg1[%c0_7, %c0_8, %c110] : memref<1x4x580xf32, #tpu.memory_space<vmem>>, vector<1x4x324xf32>
    %10 = vector.shape_cast %9 : vector<1x4x324xf32> to vector<4x324xf32>
    %cst_9 = arith.constant dense<0.000000e+00> : vector<4x324xf32>
    %11 = tpu.matmul %8, %10, %cst_9 {dimension_numbers = #tpu.dot_dimension_numbers<[1], [0], [0], [1], [0, 0, 1, 1], [], []>} : vector<4x4xf32>, vector<4x324xf32>, vector<4x324xf32> -> vector<4x324xf32>
    %12 = arith.addf %6, %11 : vector<4x324xf32>
    %c2 = arith.constant 2 : index
    %c0_10 = arith.constant 0 : index
    %c0_11 = arith.constant 0 : index
    %13 = vector.load %arg2[%c2, %c0_10, %c0_11] : memref<9x4x4xf32, #tpu.memory_space<vmem>>, vector<1x4x4xf32>
    %14 = vector.shape_cast %13 : vector<1x4x4xf32> to vector<4x4xf32>
    %c0_12 = arith.constant 0 : index
    %c0_13 = arith.constant 0 : index
    %c111 = arith.constant 111 : index
    %15 = vector.load %arg1[%c0_12, %c0_13, %c111] : memref<1x4x580xf32, #tpu.memory_space<vmem>>, vector<1x4x324xf32>
    %16 = vector.shape_cast %15 : vector<1x4x324xf32> to vector<4x324xf32>
    %cst_14 = arith.constant dense<0.000000e+00> : vector<4x324xf32>
    %17 = tpu.matmul %14, %16, %cst_14 {dimension_numbers = #tpu.dot_dimension_numbers<[1], [0], [0], [1], [0, 0, 1, 1], [], []>} : vector<4x4xf32>, vector<4x324xf32>, vector<4x324xf32> -> vector<4x324xf32>
    %18 = arith.addf %12, %17 : vector<4x324xf32>
    %c3 = arith.constant 3 : index
    %c0_15 = arith.constant 0 : index
    %c0_16 = arith.constant 0 : index
    %19 = vector.load %arg2[%c3, %c0_15, %c0_16] : memref<9x4x4xf32, #tpu.memory_space<vmem>>, vector<1x4x4xf32>
    %20 = vector.shape_cast %19 : vector<1x4x4xf32> to vector<4x4xf32>
    %c0_17 = arith.constant 0 : index
    %c0_18 = arith.constant 0 : index
    %c127 = arith.constant 127 : index
    %21 = vector.load %arg1[%c0_17, %c0_18, %c127] : memref<1x4x580xf32, #tpu.memory_space<vmem>>, vector<1x4x324xf32>
    %22 = vector.shape_cast %21 : vector<1x4x324xf32> to vector<4x324xf32>
    %cst_19 = arith.constant dense<0.000000e+00> : vector<4x324xf32>
    %23 = tpu.matmul %20, %22, %cst_19 {dimension_numbers = #tpu.dot_dimension_numbers<[1], [0], [0], [1], [0, 0, 1, 1], [], []>} : vector<4x4xf32>, vector<4x324xf32>, vector<4x324xf32> -> vector<4x324xf32>
    %24 = arith.addf %18, %23 : vector<4x324xf32>
    %c4 = arith.constant 4 : index
    %c0_20 = arith.constant 0 : index
    %c0_21 = arith.constant 0 : index
    %25 = vector.load %arg2[%c4, %c0_20, %c0_21] : memref<9x4x4xf32, #tpu.memory_space<vmem>>, vector<1x4x4xf32>
    %26 = vector.shape_cast %25 : vector<1x4x4xf32> to vector<4x4xf32>
    %c0_22 = arith.constant 0 : index
    %c0_23 = arith.constant 0 : index
    %c128 = arith.constant 128 : index
    %27 = vector.load %arg1[%c0_22, %c0_23, %c128] : memref<1x4x580xf32, #tpu.memory_space<vmem>>, vector<1x4x324xf32>
    %28 = vector.shape_cast %27 : vector<1x4x324xf32> to vector<4x324xf32>
    %cst_24 = arith.constant dense<0.000000e+00> : vector<4x324xf32>
    %29 = tpu.matmul %26, %28, %cst_24 {dimension_numbers = #tpu.dot_dimension_numbers<[1], [0], [0], [1], [0, 0, 1, 1], [], []>} : vector<4x4xf32>, vector<4x324xf32>, vector<4x324xf32> -> vector<4x324xf32>
    %30 = arith.addf %24, %29 : vector<4x324xf32>
    %c5 = arith.constant 5 : index
    %c0_25 = arith.constant 0 : index
    %c0_26 = arith.constant 0 : index
    %31 = vector.load %arg2[%c5, %c0_25, %c0_26] : memref<9x4x4xf32, #tpu.memory_space<vmem>>, vector<1x4x4xf32>
    %32 = vector.shape_cast %31 : vector<1x4x4xf32> to vector<4x4xf32>
    %c0_27 = arith.constant 0 : index
    %c0_28 = arith.constant 0 : index
    %c129 = arith.constant 129 : index
    %33 = vector.load %arg1[%c0_27, %c0_28, %c129] : memref<1x4x580xf32, #tpu.memory_space<vmem>>, vector<1x4x324xf32>
    %34 = vector.shape_cast %33 : vector<1x4x324xf32> to vector<4x324xf32>
    %cst_29 = arith.constant dense<0.000000e+00> : vector<4x324xf32>
    %35 = tpu.matmul %32, %34, %cst_29 {dimension_numbers = #tpu.dot_dimension_numbers<[1], [0], [0], [1], [0, 0, 1, 1], [], []>} : vector<4x4xf32>, vector<4x324xf32>, vector<4x324xf32> -> vector<4x324xf32>
    %36 = arith.addf %30, %35 : vector<4x324xf32>
    %c6 = arith.constant 6 : index
    %c0_30 = arith.constant 0 : index
    %c0_31 = arith.constant 0 : index
    %37 = vector.load %arg2[%c6, %c0_30, %c0_31] : memref<9x4x4xf32, #tpu.memory_space<vmem>>, vector<1x4x4xf32>
    %38 = vector.shape_cast %37 : vector<1x4x4xf32> to vector<4x4xf32>
    %c0_32 = arith.constant 0 : index
    %c0_33 = arith.constant 0 : index
    %c145 = arith.constant 145 : index
    %39 = vector.load %arg1[%c0_32, %c0_33, %c145] : memref<1x4x580xf32, #tpu.memory_space<vmem>>, vector<1x4x324xf32>
    %40 = vector.shape_cast %39 : vector<1x4x324xf32> to vector<4x324xf32>
    %cst_34 = arith.constant dense<0.000000e+00> : vector<4x324xf32>
    %41 = tpu.matmul %38, %40, %cst_34 {dimension_numbers = #tpu.dot_dimension_numbers<[1], [0], [0], [1], [0, 0, 1, 1], [], []>} : vector<4x4xf32>, vector<4x324xf32>, vector<4x324xf32> -> vector<4x324xf32>
    %42 = arith.addf %36, %41 : vector<4x324xf32>
    %c7 = arith.constant 7 : index
    %c0_35 = arith.constant 0 : index
    %c0_36 = arith.constant 0 : index
    %43 = vector.load %arg2[%c7, %c0_35, %c0_36] : memref<9x4x4xf32, #tpu.memory_space<vmem>>, vector<1x4x4xf32>
    %44 = vector.shape_cast %43 : vector<1x4x4xf32> to vector<4x4xf32>
    %c0_37 = arith.constant 0 : index
    %c0_38 = arith.constant 0 : index
    %c146 = arith.constant 146 : index
    %45 = vector.load %arg1[%c0_37, %c0_38, %c146] : memref<1x4x580xf32, #tpu.memory_space<vmem>>, vector<1x4x324xf32>
    %46 = vector.shape_cast %45 : vector<1x4x324xf32> to vector<4x324xf32>
    %cst_39 = arith.constant dense<0.000000e+00> : vector<4x324xf32>
    %47 = tpu.matmul %44, %46, %cst_39 {dimension_numbers = #tpu.dot_dimension_numbers<[1], [0], [0], [1], [0, 0, 1, 1], [], []>} : vector<4x4xf32>, vector<4x324xf32>, vector<4x324xf32> -> vector<4x324xf32>
    %48 = arith.addf %42, %47 : vector<4x324xf32>
    %c8 = arith.constant 8 : index
    %c0_40 = arith.constant 0 : index
    %c0_41 = arith.constant 0 : index
    %49 = vector.load %arg2[%c8, %c0_40, %c0_41] : memref<9x4x4xf32, #tpu.memory_space<vmem>>, vector<1x4x4xf32>
    %50 = vector.shape_cast %49 : vector<1x4x4xf32> to vector<4x4xf32>
    %c0_42 = arith.constant 0 : index
    %c0_43 = arith.constant 0 : index
    %c147 = arith.constant 147 : index
    %51 = vector.load %arg1[%c0_42, %c0_43, %c147] : memref<1x4x580xf32, #tpu.memory_space<vmem>>, vector<1x4x324xf32>
    %52 = vector.shape_cast %51 : vector<1x4x324xf32> to vector<4x324xf32>
    %cst_44 = arith.constant dense<0.000000e+00> : vector<4x324xf32>
    %53 = tpu.matmul %50, %52, %cst_44 {dimension_numbers = #tpu.dot_dimension_numbers<[1], [0], [0], [1], [0, 0, 1, 1], [], []>} : vector<4x4xf32>, vector<4x324xf32>, vector<4x324xf32> -> vector<4x324xf32>
    %54 = arith.addf %48, %53 : vector<4x324xf32>
    %c0_45 = arith.constant 0 : index
    %c0_46 = arith.constant 0 : index
    %55 = vector.load %arg3[%c0_45, %c0_46] : memref<4x1xf32, #tpu.memory_space<vmem>>, vector<4x1xf32>
    %56 = vector.broadcast %55 : vector<4x1xf32> to vector<4x324xf32>
    %57 = arith.addf %54, %56 : vector<4x324xf32>
    %c0_47 = arith.constant 0 : index
    %c0_48 = arith.constant 0 : index
    %58 = memref.load %arg4[%c0_47, %c0_48] : memref<1x1xf32, #tpu.memory_space<smem>>
    %cst_49 = arith.constant 0.000000e+00 : f32
    %59 = vector.broadcast %cst_49 : f32 to vector<4x324xf32>
    %60 = arith.cmpf ogt, %57, %59 : vector<4x324xf32>
    %61 = vector.broadcast %58 : f32 to vector<4x324xf32>
    %62 = arith.mulf %61, %57 : vector<4x324xf32>
    %63 = arith.select %60, %57, %62 : vector<4x324xi1>, vector<4x324xf32>
    %c0_50 = arith.constant 0 : index
    %c0_51 = arith.constant 0 : index
    %64 = vector.load %arg7[%c0_50, %c0_51] : memref<1x324xf32, #tpu.memory_space<vmem>>, vector<1x324xf32>
    %65 = vector.broadcast %64 : vector<1x324xf32> to vector<4x324xf32>
    %66 = arith.mulf %63, %65 : vector<4x324xf32>
    %cst_52 = arith.constant 0.000000e+00 : f32
    %67 = vector.broadcast %cst_52 : f32 to vector<4x580xf32>
    %c0_53 = arith.constant 0 : index
    %c0_54 = arith.constant 0 : index
    %68 = vector.load %arg9[%c0_53, %c0_54] : memref<4x580xf32, #tpu.memory_space<vmem>>, vector<4x580xf32>
    tpu.vector_store %arg9[%c0_53, %c0_54], %67 {strides = array<i32>} : memref<4x580xf32, #tpu.memory_space<vmem>>, vector<4x580xf32>,
    %c0_55 = arith.constant 0 : index
    %c128_56 = arith.constant 128 : index
    %69 = vector.load %arg9[%c0_55, %c128_56] : memref<4x580xf32, #tpu.memory_space<vmem>>, vector<4x324xf32>
    tpu.vector_store %arg9[%c0_55, %c128_56], %66 {strides = array<i32>} : memref<4x580xf32, #tpu.memory_space<vmem>>, vector<4x324xf32>,
    %cst_57 = arith.constant 0.000000e+00 : f32
    %70 = vector.broadcast %cst_57 : f32 to vector<4x324xf32>
    %c0_58 = arith.constant 0 : index
    %c0_59 = arith.constant 0 : index
    %c0_60 = arith.constant 0 : index
    %71 = vector.load %arg5[%c0_58, %c0_59, %c0_60] : memref<9x4x4xf32, #tpu.memory_space<vmem>>, vector<1x4x4xf32>
    %72 = vector.shape_cast %71 : vector<1x4x4xf32> to vector<4x4xf32>
    %c0_61 = arith.constant 0 : index
    %c109_62 = arith.constant 109 : index
    %73 = vector.load %arg9[%c0_61, %c109_62] : memref<4x580xf32, #tpu.memory_space<vmem>>, vector<4x324xf32>
    %cst_63 = arith.constant dense<0.000000e+00> : vector<4x324xf32>
    %74 = tpu.matmul %72, %73, %cst_63 {dimension_numbers = #tpu.dot_dimension_numbers<[1], [0], [0], [1], [0, 0, 1, 1], [], []>} : vector<4x4xf32>, vector<4x324xf32>, vector<4x324xf32> -> vector<4x324xf32>
    %75 = arith.addf %70, %74 : vector<4x324xf32>
    %c1_64 = arith.constant 1 : index
    %c0_65 = arith.constant 0 : index
    %c0_66 = arith.constant 0 : index
    %76 = vector.load %arg5[%c1_64, %c0_65, %c0_66] : memref<9x4x4xf32, #tpu.memory_space<vmem>>, vector<1x4x4xf32>
    %77 = vector.shape_cast %76 : vector<1x4x4xf32> to vector<4x4xf32>
    %c0_67 = arith.constant 0 : index
    %c110_68 = arith.constant 110 : index
    %78 = vector.load %arg9[%c0_67, %c110_68] : memref<4x580xf32, #tpu.memory_space<vmem>>, vector<4x324xf32>
    %cst_69 = arith.constant dense<0.000000e+00> : vector<4x324xf32>
    %79 = tpu.matmul %77, %78, %cst_69 {dimension_numbers = #tpu.dot_dimension_numbers<[1], [0], [0], [1], [0, 0, 1, 1], [], []>} : vector<4x4xf32>, vector<4x324xf32>, vector<4x324xf32> -> vector<4x324xf32>
    %80 = arith.addf %75, %79 : vector<4x324xf32>
    %c2_70 = arith.constant 2 : index
    %c0_71 = arith.constant 0 : index
    %c0_72 = arith.constant 0 : index
    %81 = vector.load %arg5[%c2_70, %c0_71, %c0_72] : memref<9x4x4xf32, #tpu.memory_space<vmem>>, vector<1x4x4xf32>
    %82 = vector.shape_cast %81 : vector<1x4x4xf32> to vector<4x4xf32>
    %c0_73 = arith.constant 0 : index
    %c111_74 = arith.constant 111 : index
    %83 = vector.load %arg9[%c0_73, %c111_74] : memref<4x580xf32, #tpu.memory_space<vmem>>, vector<4x324xf32>
    %cst_75 = arith.constant dense<0.000000e+00> : vector<4x324xf32>
    %84 = tpu.matmul %82, %83, %cst_75 {dimension_numbers = #tpu.dot_dimension_numbers<[1], [0], [0], [1], [0, 0, 1, 1], [], []>} : vector<4x4xf32>, vector<4x324xf32>, vector<4x324xf32> -> vector<4x324xf32>
    %85 = arith.addf %80, %84 : vector<4x324xf32>
    %c3_76 = arith.constant 3 : index
    %c0_77 = arith.constant 0 : index
    %c0_78 = arith.constant 0 : index
    %86 = vector.load %arg5[%c3_76, %c0_77, %c0_78] : memref<9x4x4xf32, #tpu.memory_space<vmem>>, vector<1x4x4xf32>
    %87 = vector.shape_cast %86 : vector<1x4x4xf32> to vector<4x4xf32>
    %c0_79 = arith.constant 0 : index
    %c127_80 = arith.constant 127 : index
    %88 = vector.load %arg9[%c0_79, %c127_80] : memref<4x580xf32, #tpu.memory_space<vmem>>, vector<4x324xf32>
    %cst_81 = arith.constant dense<0.000000e+00> : vector<4x324xf32>
    %89 = tpu.matmul %87, %88, %cst_81 {dimension_numbers = #tpu.dot_dimension_numbers<[1], [0], [0], [1], [0, 0, 1, 1], [], []>} : vector<4x4xf32>, vector<4x324xf32>, vector<4x324xf32> -> vector<4x324xf32>
    %90 = arith.addf %85, %89 : vector<4x324xf32>
    %c4_82 = arith.constant 4 : index
    %c0_83 = arith.constant 0 : index
    %c0_84 = arith.constant 0 : index
    %91 = vector.load %arg5[%c4_82, %c0_83, %c0_84] : memref<9x4x4xf32, #tpu.memory_space<vmem>>, vector<1x4x4xf32>
    %92 = vector.shape_cast %91 : vector<1x4x4xf32> to vector<4x4xf32>
    %c0_85 = arith.constant 0 : index
    %c128_86 = arith.constant 128 : index
    %93 = vector.load %arg9[%c0_85, %c128_86] : memref<4x580xf32, #tpu.memory_space<vmem>>, vector<4x324xf32>
    %cst_87 = arith.constant dense<0.000000e+00> : vector<4x324xf32>
    %94 = tpu.matmul %92, %93, %cst_87 {dimension_numbers = #tpu.dot_dimension_numbers<[1], [0], [0], [1], [0, 0, 1, 1], [], []>} : vector<4x4xf32>, vector<4x324xf32>, vector<4x324xf32> -> vector<4x324xf32>
    %95 = arith.addf %90, %94 : vector<4x324xf32>
    %c5_88 = arith.constant 5 : index
    %c0_89 = arith.constant 0 : index
    %c0_90 = arith.constant 0 : index
    %96 = vector.load %arg5[%c5_88, %c0_89, %c0_90] : memref<9x4x4xf32, #tpu.memory_space<vmem>>, vector<1x4x4xf32>
    %97 = vector.shape_cast %96 : vector<1x4x4xf32> to vector<4x4xf32>
    %c0_91 = arith.constant 0 : index
    %c129_92 = arith.constant 129 : index
    %98 = vector.load %arg9[%c0_91, %c129_92] : memref<4x580xf32, #tpu.memory_space<vmem>>, vector<4x324xf32>
    %cst_93 = arith.constant dense<0.000000e+00> : vector<4x324xf32>
    %99 = tpu.matmul %97, %98, %cst_93 {dimension_numbers = #tpu.dot_dimension_numbers<[1], [0], [0], [1], [0, 0, 1, 1], [], []>} : vector<4x4xf32>, vector<4x324xf32>, vector<4x324xf32> -> vector<4x324xf32>
    %100 = arith.addf %95, %99 : vector<4x324xf32>
    %c6_94 = arith.constant 6 : index
    %c0_95 = arith.constant 0 : index
    %c0_96 = arith.constant 0 : index
    %101 = vector.load %arg5[%c6_94, %c0_95, %c0_96] : memref<9x4x4xf32, #tpu.memory_space<vmem>>, vector<1x4x4xf32>
    %102 = vector.shape_cast %101 : vector<1x4x4xf32> to vector<4x4xf32>
    %c0_97 = arith.constant 0 : index
    %c145_98 = arith.constant 145 : index
    %103 = vector.load %arg9[%c0_97, %c145_98] : memref<4x580xf32, #tpu.memory_space<vmem>>, vector<4x324xf32>
    %cst_99 = arith.constant dense<0.000000e+00> : vector<4x324xf32>
    %104 = tpu.matmul %102, %103, %cst_99 {dimension_numbers = #tpu.dot_dimension_numbers<[1], [0], [0], [1], [0, 0, 1, 1], [], []>} : vector<4x4xf32>, vector<4x324xf32>, vector<4x324xf32> -> vector<4x324xf32>
    %105 = arith.addf %100, %104 : vector<4x324xf32>
    %c7_100 = arith.constant 7 : index
    %c0_101 = arith.constant 0 : index
    %c0_102 = arith.constant 0 : index
    %106 = vector.load %arg5[%c7_100, %c0_101, %c0_102] : memref<9x4x4xf32, #tpu.memory_space<vmem>>, vector<1x4x4xf32>
    %107 = vector.shape_cast %106 : vector<1x4x4xf32> to vector<4x4xf32>
    %c0_103 = arith.constant 0 : index
    %c146_104 = arith.constant 146 : index
    %108 = vector.load %arg9[%c0_103, %c146_104] : memref<4x580xf32, #tpu.memory_space<vmem>>, vector<4x324xf32>
    %cst_105 = arith.constant dense<0.000000e+00> : vector<4x324xf32>
    %109 = tpu.matmul %107, %108, %cst_105 {dimension_numbers = #tpu.dot_dimension_numbers<[1], [0], [0], [1], [0, 0, 1, 1], [], []>} : vector<4x4xf32>, vector<4x324xf32>, vector<4x324xf32> -> vector<4x324xf32>
    %110 = arith.addf %105, %109 : vector<4x324xf32>
    %c8_106 = arith.constant 8 : index
    %c0_107 = arith.constant 0 : index
    %c0_108 = arith.constant 0 : index
    %111 = vector.load %arg5[%c8_106, %c0_107, %c0_108] : memref<9x4x4xf32, #tpu.memory_space<vmem>>, vector<1x4x4xf32>
    %112 = vector.shape_cast %111 : vector<1x4x4xf32> to vector<4x4xf32>
    %c0_109 = arith.constant 0 : index
    %c147_110 = arith.constant 147 : index
    %113 = vector.load %arg9[%c0_109, %c147_110] : memref<4x580xf32, #tpu.memory_space<vmem>>, vector<4x324xf32>
    %cst_111 = arith.constant dense<0.000000e+00> : vector<4x324xf32>
    %114 = tpu.matmul %112, %113, %cst_111 {dimension_numbers = #tpu.dot_dimension_numbers<[1], [0], [0], [1], [0, 0, 1, 1], [], []>} : vector<4x4xf32>, vector<4x324xf32>, vector<4x324xf32> -> vector<4x324xf32>
    %115 = arith.addf %110, %114 : vector<4x324xf32>
    %c0_112 = arith.constant 0 : index
    %c0_113 = arith.constant 0 : index
    %116 = vector.load %arg6[%c0_112, %c0_113] : memref<4x1xf32, #tpu.memory_space<vmem>>, vector<4x1xf32>
    %117 = vector.broadcast %116 : vector<4x1xf32> to vector<4x324xf32>
    %118 = arith.addf %115, %117 : vector<4x324xf32>
    %c0_114 = arith.constant 0 : index
    %c0_115 = arith.constant 0 : index
    %c128_116 = arith.constant 128 : index
    %119 = vector.load %arg1[%c0_114, %c0_115, %c128_116] : memref<1x4x580xf32, #tpu.memory_space<vmem>>, vector<1x4x324xf32>
    %120 = vector.shape_cast %119 : vector<1x4x324xf32> to vector<4x324xf32>
    %121 = arith.addf %118, %120 : vector<4x324xf32>
    %c0_117 = arith.constant 0 : index
    %c0_118 = arith.constant 0 : index
    %c0_119 = arith.constant 0 : index
    %122 = vector.load %arg8[%c0_117, %c0_118, %c0_119] : memref<1x4x324xf32, #tpu.memory_space<vmem>>, vector<1x4x324xf32>
    %123 = vector.shape_cast %122 : vector<1x4x324xf32> to vector<4x324xf32>
    %124 = vector.shape_cast %121 : vector<4x324xf32> to vector<1x4x324xf32>
    tpu.vector_store %arg8[%c0_117, %c0_118, %c0_119], %124 {strides = array<i32>} : memref<1x4x324xf32, #tpu.memory_space<vmem>>, vector<1x4x324xf32>,
    return
  }
  func.func @transform_0(%arg0: i32) -> (i32, i32, i32) {
    %c0_i32 = arith.constant 0 : i32
    %c0_i32_0 = arith.constant 0 : i32
    %c0_i32_1 = arith.constant 0 : i32
    return %arg0, %c0_i32, %c0_i32_0 : i32, i32, i32
  }
  func.func @transform_1(%arg0: i32) -> (i32, i32, i32) {
    %c0_i32 = arith.constant 0 : i32
    %c0_i32_0 = arith.constant 0 : i32
    %c0_i32_1 = arith.constant 0 : i32
    %c0_i32_2 = arith.constant 0 : i32
    return %c0_i32, %c0_i32_0, %c0_i32_1 : i32, i32, i32
  }
  func.func @transform_2(%arg0: i32) -> (i32, i32) {
    %c0_i32 = arith.constant 0 : i32
    %c0_i32_0 = arith.constant 0 : i32
    %c0_i32_1 = arith.constant 0 : i32
    return %c0_i32, %c0_i32_0 : i32, i32
  }
  func.func @transform_3(%arg0: i32) -> (i32, i32) {
    %c0_i32 = arith.constant 0 : i32
    %c0_i32_0 = arith.constant 0 : i32
    %c0_i32_1 = arith.constant 0 : i32
    return %c0_i32, %c0_i32_0 : i32, i32
  }
  func.func @transform_4(%arg0: i32) -> (i32, i32, i32) {
    %c0_i32 = arith.constant 0 : i32
    %c0_i32_0 = arith.constant 0 : i32
    %c0_i32_1 = arith.constant 0 : i32
    %c0_i32_2 = arith.constant 0 : i32
    return %c0_i32, %c0_i32_0, %c0_i32_1 : i32, i32, i32
  }
  func.func @transform_5(%arg0: i32) -> (i32, i32) {
    %c0_i32 = arith.constant 0 : i32
    %c0_i32_0 = arith.constant 0 : i32
    %c0_i32_1 = arith.constant 0 : i32
    return %c0_i32, %c0_i32_0 : i32, i32
  }
  func.func @transform_6(%arg0: i32) -> (i32, i32) {
    %c0_i32 = arith.constant 0 : i32
    %c0_i32_0 = arith.constant 0 : i32
    %c0_i32_1 = arith.constant 0 : i32
    return %c0_i32, %c0_i32_0 : i32, i32
  }
  func.func @transform_7(%arg0: i32) -> (i32, i32, i32) {
    %c0_i32 = arith.constant 0 : i32
    %c0_i32_0 = arith.constant 0 : i32
    %c0_i32_1 = arith.constant 0 : i32
    return %arg0, %c0_i32, %c0_i32_0 : i32, i32, i32
  }
}

</mosaic_0001>

<llo_original>
// kernel: tpu_custom_call.1
$region0: #{tpu_custom_call.1}
  #allocation0 [shape = 'u32[]', space=smem, size = 0x4, offset = 0x4, fixed_abs, tag = 'smem constant byte address 0x4 - core index']
  #allocation1 [shape = 'u32[144,128]{1,0:T(1,128)}', space=vmem, size = 0x12000, scoped, tag = 'internal scratch']
  #allocation2 [shape = 'f32[4,580]{1,0:T(4,128)}', space=vmem, size = 0x2800, scoped, tag = 'scratch operand']
  #allocation3 [shape = 'f32[1,1]{1,0:T(1,128)S(6)}', space=smem, size = 0x200, scoped, tag = 'scoped memory for tpu_custom_call.1']
  %s0 = inlined_call_operand.vmem [shape: f32[2,4,580], index: 0, kind: input, shape index: {}]
  %s1 = inlined_call_operand.vmem [shape: f32[9,4,4], index: 1, kind: input, shape index: {}]
  %s2 = inlined_call_operand.vmem [shape: f32[4,1], index: 2, kind: input, shape index: {}]
  %s3 = inlined_call_operand.<no memory space> [shape: f32[1,1], index: 3, kind: input, shape index: {}]
  %s4 = inlined_call_operand.vmem [shape: f32[9,4,4], index: 4, kind: input, shape index: {}]
  %s5 = inlined_call_operand.vmem [shape: f32[4,1], index: 5, kind: input, shape index: {}]
  %s6 = inlined_call_operand.vmem [shape: f32[1,324], index: 6, kind: input, shape index: {}]
  %s7 = inlined_call_operand.hbm [shape: f32[2,4,324], index: 7, kind: output, shape index: {}]
  %s8 = sld [smem:[#allocation0]]
  $region61: #{tpu_custom_call.1} parent=0
    _
  %s10 = ssub.s32 1, %s8
  %s11 = scalar_select 0, %s10, %s8
  %12 = sst [smem:[#allocation3]] %s3
  $region1: #{tpu_custom_call.1} parent=0
    #allocation4 [shape = 'u8[12288]{0}', space=vmem, size = 0x3000, scoped, tag = 'output window, operand 0']
    #allocation5 [shape = 's32[2]{0}', space=sflag, size = 0x8, scoped, tag = 'scoped memory for tpu_custom_call.1']
    %13 = vsyncpa [#allocation5], 0
    %s14 = scalar_lea.sflag [#allocation5], 1
    %15 = vsyncpa %s14, 0
    loop: start=0, step=1, limit=4
    $region2: #{tpu_custom_call.1} parent=1 // loop_pre_header
      _
    $region3: #{tpu_custom_call.1} parent=1 // loop_header
      %s17 = sphi 0, %s21
      %p18 = scmp.ge.s32.totalorder %s17, 4
      %s27 = sphi 0, %s29
      %s30 = sphi 0, %s27
      %s31 = sphi 0, %s30
      %s47 = sphi 0, %s31
      %s51 = sphi 0, %s51
      %s53 = sphi 0, %s51
      %s54 = sphi 0, %s53
      %s68 = sphi 0, %s54
      %s72 = sphi 0, %s72
      %s74 = sphi 0, %s72
      %s75 = sphi 0, %s74
      %s89 = sphi 0, %s75
      %s93 = sphi 0, %s93
      %s95 = sphi 0, %s93
      %s96 = sphi 0, %s95
      %s110 = sphi 0, %s96
      %s114 = sphi 0, %s114
      %s116 = sphi 0, %s114
      %s117 = sphi 0, %s116
      %s131 = sphi 0, %s117
      %s135 = sphi 0, %s135
      %s137 = sphi 0, %s135
      %s138 = sphi 0, %s137
      %s152 = sphi 0, %s138
      %s156 = sphi 0, %s156
      %s158 = sphi 0, %s156
      %s159 = sphi 0, %s158
      %s173 = sphi 0, %s159
      %s179 = sphi 0, %s181
      %s182 = sphi 0, %s179
      %s183 = sphi 0, %s182
      %s199 = sphi 0, %s183
    $region4: #{tpu_custom_call.1} parent=1 // loop_header_branch
      %20 = sbr.rel (%p18) target = $region8
    $region5: #{tpu_custom_call.1} parent=1 // loop_body
      %s22 = ssub.s32 %s17, 1
      %s23 = ssub.s32 %s17, 2
      %s24 = sadd.s32 %s17, 1
      %s25 = ssub.s32 %s17, %s24
      %p26 = scmp.eq.s32.totalorder %s25, 0
      %s28 = sadd.s32 %s27, 1
      %s29 = scalar_select %p26, %s27, %s28
      %p32 = pneg %p26
      %p33 = scmp.eq.s32.totalorder %s17, 1
      %p34 = por %p32, %p33
      %p35 = scmp.ne.s32.totalorder %s27, %s30
      %p36 = scmp.eq.s32.totalorder %s17, 0
      %p37 = por %p35, %p36
      %p38 = scmp.ne.s32.totalorder %s27, %s30
      %p39 = scmp.eq.s32.totalorder %s22, 1
      %p40 = por %p38, %p39
      %p41 = scmp.ne.s32.totalorder %s30, %s31
      %p42 = scmp.eq.s32.totalorder %s22, 0
      %p43 = por %p41, %p42
      %p44 = scmp.ne.s32.totalorder %s30, %s31
      %p45 = scmp.eq.s32.totalorder %s23, 1
      %p46 = por %p44, %p45
      %p48 = scmp.ne.s32.totalorder %s31, %s47
      %p49 = scmp.eq.s32.totalorder %s23, 0
      %p50 = por %p48, %p49
      %s52 = sadd.s32 %s51, 1
      %p55 = scmp.eq.s32.totalorder %s17, 1
      %p56 = scmp.ne.s32.totalorder %s51, %s53
      %p57 = scmp.eq.s32.totalorder %s17, 0
      %p58 = por %p56, %p57
      %p59 = scmp.ne.s32.totalorder %s51, %s53
      %p60 = scmp.eq.s32.totalorder %s22, 1
      %p61 = por %p59, %p60
      %p62 = scmp.ne.s32.totalorder %s53, %s54
      %p63 = scmp.eq.s32.totalorder %s22, 0
      %p64 = por %p62, %p63
      %p65 = scmp.ne.s32.totalorder %s53, %s54
      %p66 = scmp.eq.s32.totalorder %s23, 1
      %p67 = por %p65, %p66
      %p69 = scmp.ne.s32.totalorder %s54, %s68
      %p70 = scmp.eq.s32.totalorder %s23, 0
      %p71 = por %p69, %p70
      %s73 = sadd.s32 %s72, 1
      %p76 = scmp.eq.s32.totalorder %s17, 1
      %p77 = scmp.ne.s32.totalorder %s72, %s74
      %p78 = scmp.eq.s32.totalorder %s17, 0
      %p79 = por %p77, %p78
      %p80 = scmp.ne.s32.totalorder %s72, %s74
      %p81 = scmp.eq.s32.totalorder %s22, 1
      %p82 = por %p80, %p81
      %p83 = scmp.ne.s32.totalorder %s74, %s75
      %p84 = scmp.eq.s32.totalorder %s22, 0
      %p85 = por %p83, %p84
      %p86 = scmp.ne.s32.totalorder %s74, %s75
      %p87 = scmp.eq.s32.totalorder %s23, 1
      %p88 = por %p86, %p87
      %p90 = scmp.ne.s32.totalorder %s75, %s89
      %p91 = scmp.eq.s32.totalorder %s23, 0
      %p92 = por %p90, %p91
      %s94 = sadd.s32 %s93, 1
      %p97 = scmp.eq.s32.totalorder %s17, 1
      %p98 = scmp.ne.s32.totalorder %s93, %s95
      %p99 = scmp.eq.s32.totalorder %s17, 0
      %p100 = por %p98, %p99
      %p101 = scmp.ne.s32.totalorder %s93, %s95
      %p102 = scmp.eq.s32.totalorder %s22, 1
      %p103 = por %p101, %p102
      %p104 = scmp.ne.s32.totalorder %s95, %s96
      %p105 = scmp.eq.s32.totalorder %s22, 0
      %p106 = por %p104, %p105
      %p107 = scmp.ne.s32.totalorder %s95, %s96
      %p108 = scmp.eq.s32.totalorder %s23, 1
      %p109 = por %p107, %p108
      %p111 = scmp.ne.s32.totalorder %s96, %s110
      %p112 = scmp.eq.s32.totalorder %s23, 0
      %p113 = por %p111, %p112
      %s115 = sadd.s32 %s114, 1
      %p118 = scmp.eq.s32.totalorder %s17, 1
      %p119 = scmp.ne.s32.totalorder %s114, %s116
      %p120 = scmp.eq.s32.totalorder %s17, 0
      %p121 = por %p119, %p120
      %p122 = scmp.ne.s32.totalorder %s114, %s116
      %p123 = scmp.eq.s32.totalorder %s22, 1
      %p124 = por %p122, %p123
      %p125 = scmp.ne.s32.totalorder %s116, %s117
      %p126 = scmp.eq.s32.totalorder %s22, 0
      %p127 = por %p125, %p126
      %p128 = scmp.ne.s32.totalorder %s116, %s117
      %p129 = scmp.eq.s32.totalorder %s23, 1
      %p130 = por %p128, %p129
      %p132 = scmp.ne.s32.totalorder %s117, %s131
      %p133 = scmp.eq.s32.totalorder %s23, 0
      %p134 = por %p132, %p133
      %s136 = sadd.s32 %s135, 1
      %p139 = scmp.eq.s32.totalorder %s17, 1
      %p140 = scmp.ne.s32.totalorder %s135, %s137
      %p141 = scmp.eq.s32.totalorder %s17, 0
      %p142 = por %p140, %p141
      %p143 = scmp.ne.s32.totalorder %s135, %s137
      %p144 = scmp.eq.s32.totalorder %s22, 1
      %p145 = por %p143, %p144
      %p146 = scmp.ne.s32.totalorder %s137, %s138
      %p147 = scmp.eq.s32.totalorder %s22, 0
      %p148 = por %p146, %p147
      %p149 = scmp.ne.s32.totalorder %s137, %s138
      %p150 = scmp.eq.s32.totalorder %s23, 1
      %p151 = por %p149, %p150
      %p153 = scmp.ne.s32.totalorder %s138, %s152
      %p154 = scmp.eq.s32.totalorder %s23, 0
      %p155 = por %p153, %p154
      %s157 = sadd.s32 %s156, 1
      %p160 = scmp.eq.s32.totalorder %s17, 1
      %p161 = scmp.ne.s32.totalorder %s156, %s158
      %p162 = scmp.eq.s32.totalorder %s17, 0
      %p163 = por %p161, %p162
      %p164 = scmp.ne.s32.totalorder %s156, %s158
      %p165 = scmp.eq.s32.totalorder %s22, 1
      %p166 = por %p164, %p165
      %p167 = scmp.ne.s32.totalorder %s158, %s159
      %p168 = scmp.eq.s32.totalorder %s22, 0
      %p169 = por %p167, %p168
      %p170 = scmp.ne.s32.totalorder %s158, %s159
      %p171 = scmp.eq.s32.totalorder %s23, 1
      %p172 = por %p170, %p171
      %p174 = scmp.ne.s32.totalorder %s159, %s173
      %p175 = scmp.eq.s32.totalorder %s23, 0
      %p176 = por %p174, %p175
      %s177 = ssub.s32 %s17, %s24
      %p178 = scmp.eq.s32.totalorder %s177, 0
      %s180 = sadd.s32 %s179, 1
      %s181 = scalar_select %p178, %s179, %s180
      %p184 = pneg %p178
      %p185 = scmp.eq.s32.totalorder %s17, 1
      %p186 = por %p184, %p185
      %p187 = scmp.ne.s32.totalorder %s179, %s182
      %p188 = scmp.eq.s32.totalorder %s17, 0
      %p189 = por %p187, %p188
      %p190 = scmp.ne.s32.totalorder %s179, %s182
      %p191 = scmp.eq.s32.totalorder %s22, 1
      %p192 = por %p190, %p191
      %p193 = scmp.ne.s32.totalorder %s182, %s183
      %p194 = scmp.eq.s32.totalorder %s22, 0
      %p195 = por %p193, %p194
      %p196 = scmp.ne.s32.totalorder %s182, %s183
      %p197 = scmp.eq.s32.totalorder %s23, 1
      %p198 = por %p196, %p197
      %p200 = scmp.ne.s32.totalorder %s183, %s199
      %p201 = scmp.eq.s32.totalorder %s23, 0
      %p202 = por %p200, %p201
      %p203 = scmp.le.s32.totalorder 1, %s17
      %p204 = scmp.lt.s32.totalorder %s17, 3
      %p205 = pnand %p203, %p204
      %p206 = pneg %p205
      // Predicated region
      $region9: #{tpu_custom_call.1} parent=5 // pred_check
        _
      $region10: #{tpu_custom_call.1} parent=5 // pred_check_branch
        %208 = sbr.rel (%p205) target = $region12
      $region11: #{tpu_custom_call.1} parent=5 // pred_region
        %s209 = ssub.s32 %s17, 1
        // Predicated region
        $region13: #{tpu_custom_call.1} parent=11 // pred_check
          %p210 = pneg %p64
        $region14: #{tpu_custom_call.1} parent=11 // pred_check_branch
          %212 = sbr.rel (%p210) target = $region16
        $region15: #{tpu_custom_call.1} parent=11 // pred_region
          _
        $region16: #{tpu_custom_call.1} parent=11 // pred_fallthru
          _
        // Predicated region
        $region17: #{tpu_custom_call.1} parent=11 // pred_check
          %p213 = pneg %p85
        $region18: #{tpu_custom_call.1} parent=11 // pred_check_branch
          %215 = sbr.rel (%p213) target = $region20
        $region19: #{tpu_custom_call.1} parent=11 // pred_region
          _
        $region20: #{tpu_custom_call.1} parent=11 // pred_fallthru
          _
        // Predicated region
        $region21: #{tpu_custom_call.1} parent=11 // pred_check
          %p216 = pneg %p106
        $region22: #{tpu_custom_call.1} parent=11 // pred_check_branch
          %218 = sbr.rel (%p216) target = $region24
        $region23: #{tpu_custom_call.1} parent=11 // pred_region
          _
        $region24: #{tpu_custom_call.1} parent=11 // pred_fallthru
          _
        // Predicated region
        $region25: #{tpu_custom_call.1} parent=11 // pred_check
          %p219 = pneg %p127
        $region26: #{tpu_custom_call.1} parent=11 // pred_check_branch
          %221 = sbr.rel (%p219) target = $region28
        $region27: #{tpu_custom_call.1} parent=11 // pred_region
          _
        $region28: #{tpu_custom_call.1} parent=11 // pred_fallthru
          _
        // Predicated region
        $region29: #{tpu_custom_call.1} parent=11 // pred_check
          %p222 = pneg %p148
        $region30: #{tpu_custom_call.1} parent=11 // pred_check_branch
          %224 = sbr.rel (%p222) target = $region32
        $region31: #{tpu_custom_call.1} parent=11 // pred_region
          _
        $region32: #{tpu_custom_call.1} parent=11 // pred_fallthru
          _
        // Predicated region
        $region33: #{tpu_custom_call.1} parent=11 // pred_check
          %p225 = pneg %p169
        $region34: #{tpu_custom_call.1} parent=11 // pred_check_branch
          %227 = sbr.rel (%p225) target = $region36
        $region35: #{tpu_custom_call.1} parent=11 // pred_region
          _
        $region36: #{tpu_custom_call.1} parent=11 // pred_fallthru
          _
      $region12: #{tpu_custom_call.1} parent=5 // pred_fallthru
        _
      %p228 = scmp.lt.s32.totalorder %s17, 2
      // Predicated region
      $region37: #{tpu_custom_call.1} parent=5 // pred_check
        %p229 = pneg %p228
      $region38: #{tpu_custom_call.1} parent=5 // pred_check_branch
        %231 = sbr.rel (%p229) target = $region40
      $region39: #{tpu_custom_call.1} parent=5 // pred_region
        // Predicated region
        $region41: #{tpu_custom_call.1} parent=39 // pred_check
          %p232 = pneg %p37
        $region42: #{tpu_custom_call.1} parent=39 // pred_check_branch
          %234 = sbr.rel (%p232) target = $region44
        $region43: #{tpu_custom_call.1} parent=39 // pred_region
          %p235 = scmp.lt.s32.totalorder %s17, 1
          %s236 = scalar_select %p235, %s17, 1
          %s237 = smul.addr %s236, 5
          %s238 = smul.addr %s237, 4
          %s239 = scalar_lea.vmem %s0, %s238
        $region44: #{tpu_custom_call.1} parent=39 // pred_fallthru
          _
      $region40: #{tpu_custom_call.1} parent=5 // pred_fallthru
        _
      %p240 = scmp.le.s32.totalorder 1, %s17
      %p241 = scmp.lt.s32.totalorder %s17, 3
      %p242 = pnand %p240, %p241
      %p243 = pneg %p242
      // Predicated region
      $region45: #{tpu_custom_call.1} parent=5 // pred_check
        _
      $region46: #{tpu_custom_call.1} parent=5 // pred_check_branch
        %245 = sbr.rel (%p242) target = $region48
      $region47: #{tpu_custom_call.1} parent=5 // pred_region
        %s246 = ssub.s32 %s17, 1
        %p247 = scmp.lt.s32.totalorder %s22, 1
        %s248 = scalar_select %p247, %s22, 1
        %s249 = smul.addr %s248, 5
        %s250 = smul.addr %s249, 4
        %s251 = scalar_lea.vmem %s0, %s250
        %p252 = pneg %p43
        %p253 = pneg %p40
        %p254 = pneg %p64
        %p255 = pneg %p61
        %p256 = pneg %p85
        %p257 = pneg %p82
        %p258 = pneg %p106
        %p259 = pneg %p103
        %p260 = pneg %p127
        %p261 = pneg %p124
        %p262 = pneg %p148
        %p263 = pneg %p145
        %p264 = pneg %p169
        %p265 = pneg %p166
        %p266 = pneg %p195
        %p267 = pneg %p192
        %s268 = sand.u32 %s182, 1
        %s269 = scalar_lea.sflag [#allocation5], %s268
        %s270 = sand.u32 %s182, 1
        %s271 = smul.addr %s270, 12
        %s272 = scalar_lea.vmem [#allocation4], %s271
        %p273 = scmp.lt.s32.totalorder %s22, 1
        %s274 = scalar_select %p273, %s22, 1
        %s275 = smul.addr %s274, 5
        %s276 = smul.addr %s275, 4
        %s277 = scalar_lea.vmem %s0, %s276
        %v278 = vld [vmem:[%s1] sm:$0xf]
        %v279 = vld [vmem:[%s277] sm:$0xff]
        %v280 = vld [vmem:[%s277 + $0x8] sm:$0xff]
        %s281 = scalar_lea.vmem %s1, 4
        %v282 = vld [vmem:[%s281] sm:$0xf]
        %v285 = vcombine.high %v279, %v279
        %v286 = vcombine.high %v280, %v280
        %287 = vrot.lane.b32.xlu0 %v279, 18
        %v288 = vpop.permute.xlu0 %287
        %289 = vrot.lane.b32.xlu0 %v285, 18
        %v290 = vpop.permute.xlu0 %289
        %291 = vrot.lane.b32.xlu0 %v280, 18
        %v292 = vpop.permute.xlu0 %291
        %293 = vrot.lane.b32.xlu0 %v286, 18
        %v294 = vpop.permute.xlu0 %293
        %vm295 = vcmask 146432
        %v296 = vsel %vm295, %v288, %v290
        %v297 = vsel %vm295, %v290, %v292
        %v298 = vsel %vm295, %v292, %v294
        %vm299 = vcmask 31744
        %v301 = vsel %vm299, %v282, 0
        %vm303 = vcmask 1043456
        %v304 = vsel %vm303, %v296, 0
        %v306 = vsel %vm303, %v297, 0
        %v308 = vsel %vm303, %v298, 0
        %310 = vmatprep.subr.mxu0 0.0
        %311 = vmatpush1.msra.mxu0 0.0
        %312 = vmatprep.subr.mxu0 0.0
        %313 = vmatpush1.msra.mxu0 0.0
        %314 = vmatprep.subr.mxu0 0.0
        %315 = vmatpush1.msra.mxu0 0.0
        %316 = vmatprep.subr.mxu0 0.0
        %317 = vmatpush1.msra.mxu0 0.0
        %318 = vmatprep.subr.mxu0 0.0
        %319 = vmatpush1.msra.mxu0 0.0
        %320 = vmatprep.subr.mxu0 0.0
        %321 = vmatpush1.msra.mxu0 0.0
        %322 = vmatprep.subr.mxu0 0.0
        %323 = vmatpush1.msra.mxu0 0.0
        %324 = vmatprep.subr.mxu0 0.0
        %325 = vmatpush1.msra.mxu0 0.0
        %326 = vmatprep.subr.mxu0 0.0
        %327 = vmatpush1.msra.mxu0 0.0
        %328 = vmatprep.subr.mxu0 0.0
        %329 = vmatpush1.msra.mxu0 0.0
        %330 = vmatprep.subr.mxu0 0.0
        %331 = vmatpush1.msra.mxu0 0.0
        %332 = vmatprep.subr.mxu0 0.0
        %333 = vmatpush1.msra.mxu0 0.0
        %334 = vmatprep.subr.mxu0 0.0
        %335 = vmatpush1.msra.mxu0 0.0
        %336 = vmatprep.subr.mxu0 0.0
        %337 = vmatpush1.msra.mxu0 0.0
        %338 = vmatprep.subr.mxu0 0.0
        %339 = vmatpush1.msra.mxu0 0.0
        %340 = vmatprep.subr.mxu0 %v306
        %341 = vmatpush1.msra.mxu0 %v304
        %342 = vmatprep.subr.mxu0 0.0
        %343 = vmatpush2.msra.mxu0 0.0
        %344 = vmatprep.subr.mxu0 0.0
        %345 = vmatpush2.msra.mxu0 0.0
        %346 = vmatprep.subr.mxu0 0.0
        %347 = vmatpush2.msra.mxu0 0.0
        %348 = vmatprep.subr.mxu0 0.0
        %349 = vmatpush2.msra.mxu0 0.0
        %350 = vmatprep.subr.mxu0 0.0
        %351 = vmatpush2.msra.mxu0 0.0
        %352 = vmatprep.subr.mxu0 0.0
        %353 = vmatpush2.msra.mxu0 0.0
        %354 = vmatprep.subr.mxu0 0.0
        %355 = vmatpush2.msra.mxu0 0.0
        %356 = vmatprep.subr.mxu0 0.0
        %357 = vmatpush2.msra.mxu0 0.0
        %358 = vmatprep.subr.mxu0 0.0
        %359 = vmatpush2.msra.mxu0 0.0
        %360 = vmatprep.subr.mxu0 0.0
        %361 = vmatpush2.msra.mxu0 0.0
        %362 = vmatprep.subr.mxu0 0.0
        %363 = vmatpush2.msra.mxu0 0.0
        %364 = vmatprep.subr.mxu0 0.0
        %365 = vmatpush2.msra.mxu0 0.0
        %366 = vmatprep.subr.mxu0 0.0
        %367 = vmatpush2.msra.mxu0 0.0
        %368 = vmatprep.subr.mxu0 0.0
        %369 = vmatpush2.msra.mxu0 0.0
        %370 = vmatprep.subr.mxu0 0.0
        %371 = vmatpush2.msra.mxu0 0.0
        %372 = vmatprep.subr.mxu0 0.0
        %373 = vmatpush2.msra.mxu0 0.0
        %374 = vmatprep.mubr.f32.mxu0 0.0
        %375 = vmatmul.mubr.f32.gmra.mxu0 %v301
        %v376 = vpop.f32.mrf.mxu0
        %v377 = vadd.f32 0.0, %v376
        %v378 = vpop.f32.mrf.mxu0
        %v379 = vadd.f32 0.0, %v378
        %380 = vdwg.mxu0
        %381 = vmatprep.subr.mxu0 0.0
        %382 = vmatpush1.msra.mxu0 0.0
        %383 = vmatprep.subr.mxu0 0.0
        %384 = vmatpush1.msra.mxu0 0.0
        %385 = vmatprep.subr.mxu0 0.0
        %386 = vmatpush1.msra.mxu0 0.0
        %387 = vmatprep.subr.mxu0 0.0
        %388 = vmatpush1.msra.mxu0 0.0
        %389 = vmatprep.subr.mxu0 0.0
        %390 = vmatpush1.msra.mxu0 0.0
        %391 = vmatprep.subr.mxu0 0.0
        %392 = vmatpush1.msra.mxu0 0.0
        %393 = vmatprep.subr.mxu0 0.0
        %394 = vmatpush1.msra.mxu0 0.0
        %395 = vmatprep.subr.mxu0 0.0
        %396 = vmatpush1.msra.mxu0 0.0
        %397 = vmatprep.subr.mxu0 0.0
        %398 = vmatpush1.msra.mxu0 0.0
        %399 = vmatprep.subr.mxu0 0.0
        %400 = vmatpush1.msra.mxu0 0.0
        %401 = vmatprep.subr.mxu0 0.0
        %402 = vmatpush1.msra.mxu0 0.0
        %403 = vmatprep.subr.mxu0 0.0
        %404 = vmatpush1.msra.mxu0 0.0
        %405 = vmatprep.subr.mxu0 0.0
        %406 = vmatpush1.msra.mxu0 0.0
        %407 = vmatprep.subr.mxu0 0.0
        %408 = vmatpush1.msra.mxu0 0.0
        %409 = vmatprep.subr.mxu0 0.0
        %410 = vmatpush1.msra.mxu0 0.0
        %411 = vmatprep.subr.mxu0 0.0
        %412 = vmatpush1.msra.mxu0 %v308
        %413 = vmatprep.subr.mxu0 0.0
        %414 = vmatpush2.msra.mxu0 0.0
        %415 = vmatprep.subr.mxu0 0.0
        %416 = vmatpush2.msra.mxu0 0.0
        %417 = vmatprep.subr.mxu0 0.0
        %418 = vmatpush2.msra.mxu0 0.0
        %419 = vmatprep.subr.mxu0 0.0
        %420 = vmatpush2.msra.mxu0 0.0
        %421 = vmatprep.subr.mxu0 0.0
        %422 = vmatpush2.msra.mxu0 0.0
        %423 = vmatprep.subr.mxu0 0.0
        %424 = vmatpush2.msra.mxu0 0.0
        %425 = vmatprep.subr.mxu0 0.0
        %426 = vmatpush2.msra.mxu0 0.0
        %427 = vmatprep.subr.mxu0 0.0
        %428 = vmatpush2.msra.mxu0 0.0
        %429 = vmatprep.subr.mxu0 0.0
        %430 = vmatpush2.msra.mxu0 0.0
        %431 = vmatprep.subr.mxu0 0.0
        %432 = vmatpush2.msra.mxu0 0.0
        %433 = vmatprep.subr.mxu0 0.0
        %434 = vmatpush2.msra.mxu0 0.0
        %435 = vmatprep.subr.mxu0 0.0
        %436 = vmatpush2.msra.mxu0 0.0
        %437 = vmatprep.subr.mxu0 0.0
        %438 = vmatpush2.msra.mxu0 0.0
        %439 = vmatprep.subr.mxu0 0.0
        %440 = vmatpush2.msra.mxu0 0.0
        %441 = vmatprep.subr.mxu0 0.0
        %442 = vmatpush2.msra.mxu0 0.0
        %443 = vmatprep.subr.mxu0 0.0
        %444 = vmatpush2.msra.mxu0 0.0
        %445 = vmatprep.mubr.f32.mxu0 0.0
        %446 = vmatmul.mubr.f32.gmra.mxu0 %v301
        %v447 = vpop.f32.mrf.mxu0
        %v448 = vadd.f32 0.0, %v447
        %v449 = vpop.f32.mrf.mxu0
        %450 = vdwg.mxu0
        %451 = vrot.lane.b32.xlu0 %v279, 19
        %v452 = vpop.permute.xlu0 %451
        %453 = vrot.lane.b32.xlu0 %v285, 19
        %v454 = vpop.permute.xlu0 %453
        %455 = vrot.lane.b32.xlu0 %v280, 19
        %v456 = vpop.permute.xlu0 %455
        %457 = vrot.lane.b32.xlu0 %v286, 19
        %v458 = vpop.permute.xlu0 %457
        %vm459 = vcmask 154624
        %v460 = vsel %vm459, %v452, %v454
        %v461 = vsel %vm459, %v454, %v456
        %v462 = vsel %vm459, %v456, %v458
        %v464 = vsel %vm299, %v278, 0
        %v466 = vsel %vm303, %v460, 0
        %v468 = vsel %vm303, %v461, 0
        %v470 = vsel %vm303, %v462, 0
        %472 = vmatprep.subr.mxu0 0.0
        %473 = vmatpush1.msra.mxu0 0.0
        %474 = vmatprep.subr.mxu0 0.0
        %475 = vmatpush1.msra.mxu0 0.0
        %476 = vmatprep.subr.mxu0 0.0
        %477 = vmatpush1.msra.mxu0 0.0
        %478 = vmatprep.subr.mxu0 0.0
        %479 = vmatpush1.msra.mxu0 0.0
        %480 = vmatprep.subr.mxu0 0.0
        %481 = vmatpush1.msra.mxu0 0.0
        %482 = vmatprep.subr.mxu0 0.0
        %483 = vmatpush1.msra.mxu0 0.0
        %484 = vmatprep.subr.mxu0 0.0
        %485 = vmatpush1.msra.mxu0 0.0
        %486 = vmatprep.subr.mxu0 0.0
        %487 = vmatpush1.msra.mxu0 0.0
        %488 = vmatprep.subr.mxu0 0.0
        %489 = vmatpush1.msra.mxu0 0.0
        %490 = vmatprep.subr.mxu0 0.0
        %491 = vmatpush1.msra.mxu0 0.0
        %492 = vmatprep.subr.mxu0 0.0
        %493 = vmatpush1.msra.mxu0 0.0
        %494 = vmatprep.subr.mxu0 0.0
        %495 = vmatpush1.msra.mxu0 0.0
        %496 = vmatprep.subr.mxu0 0.0
        %497 = vmatpush1.msra.mxu0 0.0
        %498 = vmatprep.subr.mxu0 0.0
        %499 = vmatpush1.msra.mxu0 0.0
        %500 = vmatprep.subr.mxu0 0.0
        %501 = vmatpush1.msra.mxu0 0.0
        %502 = vmatprep.subr.mxu0 %v468
        %503 = vmatpush1.msra.mxu0 %v466
        %504 = vmatprep.subr.mxu0 0.0
        %505 = vmatpush2.msra.mxu0 0.0
        %506 = vmatprep.subr.mxu0 0.0
        %507 = vmatpush2.msra.mxu0 0.0
        %508 = vmatprep.subr.mxu0 0.0
        %509 = vmatpush2.msra.mxu0 0.0
        %510 = vmatprep.subr.mxu0 0.0
        %511 = vmatpush2.msra.mxu0 0.0
        %512 = vmatprep.subr.mxu0 0.0
        %513 = vmatpush2.msra.mxu0 0.0
        %514 = vmatprep.subr.mxu0 0.0
        %515 = vmatpush2.msra.mxu0 0.0
        %516 = vmatprep.subr.mxu0 0.0
        %517 = vmatpush2.msra.mxu0 0.0
        %518 = vmatprep.subr.mxu0 0.0
        %519 = vmatpush2.msra.mxu0 0.0
        %520 = vmatprep.subr.mxu0 0.0
        %521 = vmatpush2.msra.mxu0 0.0
        %522 = vmatprep.subr.mxu0 0.0
        %523 = vmatpush2.msra.mxu0 0.0
        %524 = vmatprep.subr.mxu0 0.0
        %525 = vmatpush2.msra.mxu0 0.0
        %526 = vmatprep.subr.mxu0 0.0
        %527 = vmatpush2.msra.mxu0 0.0
        %528 = vmatprep.subr.mxu0 0.0
        %529 = vmatpush2.msra.mxu0 0.0
        %530 = vmatprep.subr.mxu0 0.0
        %531 = vmatpush2.msra.mxu0 0.0
        %532 = vmatprep.subr.mxu0 0.0
        %533 = vmatpush2.msra.mxu0 0.0
        %534 = vmatprep.subr.mxu0 0.0
        %535 = vmatpush2.msra.mxu0 0.0
        %536 = vmatprep.mubr.f32.mxu0 0.0
        %537 = vmatmul.mubr.f32.gmra.mxu0 %v464
        %v538 = vpop.f32.mrf.mxu0
        %v539 = vadd.f32 %v377, %v538
        %v540 = vpop.f32.mrf.mxu0
        %v541 = vadd.f32 %v379, %v540
        %542 = vdwg.mxu0
        %543 = vmatprep.subr.mxu0 0.0
        %544 = vmatpush1.msra.mxu0 0.0
        %545 = vmatprep.subr.mxu0 0.0
        %546 = vmatpush1.msra.mxu0 0.0
        %547 = vmatprep.subr.mxu0 0.0
        %548 = vmatpush1.msra.mxu0 0.0
        %549 = vmatprep.subr.mxu0 0.0
        %550 = vmatpush1.msra.mxu0 0.0
        %551 = vmatprep.subr.mxu0 0.0
        %552 = vmatpush1.msra.mxu0 0.0
        %553 = vmatprep.subr.mxu0 0.0
        %554 = vmatpush1.msra.mxu0 0.0
        %555 = vmatprep.subr.mxu0 0.0
        %556 = vmatpush1.msra.mxu0 0.0
        %557 = vmatprep.subr.mxu0 0.0
        %558 = vmatpush1.msra.mxu0 0.0
        %559 = vmatprep.subr.mxu0 0.0
        %560 = vmatpush1.msra.mxu0 0.0
        %561 = vmatprep.subr.mxu0 0.0
        %562 = vmatpush1.msra.mxu0 0.0
        %563 = vmatprep.subr.mxu0 0.0
        %564 = vmatpush1.msra.mxu0 0.0
        %565 = vmatprep.subr.mxu0 0.0
        %566 = vmatpush1.msra.mxu0 0.0
        %567 = vmatprep.subr.mxu0 0.0
        %568 = vmatpush1.msra.mxu0 0.0
        %569 = vmatprep.subr.mxu0 0.0
        %570 = vmatpush1.msra.mxu0 0.0
        %571 = vmatprep.subr.mxu0 0.0
        %572 = vmatpush1.msra.mxu0 0.0
        %573 = vmatprep.subr.mxu0 0.0
        %574 = vmatpush1.msra.mxu0 %v470
        %575 = vmatprep.subr.mxu0 0.0
        %576 = vmatpush2.msra.mxu0 0.0
        %577 = vmatprep.subr.mxu0 0.0
        %578 = vmatpush2.msra.mxu0 0.0
        %579 = vmatprep.subr.mxu0 0.0
        %580 = vmatpush2.msra.mxu0 0.0
        %581 = vmatprep.subr.mxu0 0.0
        %582 = vmatpush2.msra.mxu0 0.0
        %583 = vmatprep.subr.mxu0 0.0
        %584 = vmatpush2.msra.mxu0 0.0
        %585 = vmatprep.subr.mxu0 0.0
        %586 = vmatpush2.msra.mxu0 0.0
        %587 = vmatprep.subr.mxu0 0.0
        %588 = vmatpush2.msra.mxu0 0.0
        %589 = vmatprep.subr.mxu0 0.0
        %590 = vmatpush2.msra.mxu0 0.0
        %591 = vmatprep.subr.mxu0 0.0
        %592 = vmatpush2.msra.mxu0 0.0
        %593 = vmatprep.subr.mxu0 0.0
        %594 = vmatpush2.msra.mxu0 0.0
        %595 = vmatprep.subr.mxu0 0.0
        %596 = vmatpush2.msra.mxu0 0.0
        %597 = vmatprep.subr.mxu0 0.0
        %598 = vmatpush2.msra.mxu0 0.0
        %599 = vmatprep.subr.mxu0 0.0
        %600 = vmatpush2.msra.mxu0 0.0
        %601 = vmatprep.subr.mxu0 0.0
        %602 = vmatpush2.msra.mxu0 0.0
        %603 = vmatprep.subr.mxu0 0.0
        %604 = vmatpush2.msra.mxu0 0.0
        %605 = vmatprep.subr.mxu0 0.0
        %606 = vmatpush2.msra.mxu0 0.0
        %607 = vmatprep.mubr.f32.mxu0 0.0
        %608 = vmatmul.mubr.f32.gmra.mxu0 %v464
        %v609 = vpop.f32.mrf.mxu0
        %v610 = vadd.f32 %v448, %v609
        %v611 = vpop.f32.mrf.mxu0
        %612 = vdwg.mxu0
        %s613 = scalar_lea.vmem %s1, 8
        %v614 = vld [vmem:[%s613] sm:$0xf]
        %v615 = vld [vmem:[%s277] sm:$0xff]
        %v616 = vld [vmem:[%s277 + $0x8] sm:$0xff]
        %v619 = vcombine.high %v615, %v615
        %v620 = vcombine.high %v616, %v616
        %621 = vrot.lane.b32.xlu0 %v615, 17
        %v622 = vpop.permute.xlu0 %621
        %623 = vrot.lane.b32.xlu0 %v619, 17
        %v624 = vpop.permute.xlu0 %623
        %625 = vrot.lane.b32.xlu0 %v616, 17
        %v626 = vpop.permute.xlu0 %625
        %627 = vrot.lane.b32.xlu0 %v620, 17
        %v628 = vpop.permute.xlu0 %627
        %vm629 = vcmask 138240
        %v630 = vsel %vm629, %v622, %v624
        %v631 = vsel %vm629, %v624, %v626
        %v632 = vsel %vm629, %v626, %v628
        %v634 = vsel %vm299, %v614, 0
        %v636 = vsel %vm303, %v630, 0
        %v638 = vsel %vm303, %v631, 0
        %v640 = vsel %vm303, %v632, 0
        %642 = vmatprep.subr.mxu0 0.0
        %643 = vmatpush1.msra.mxu0 0.0
        %644 = vmatprep.subr.mxu0 0.0
        %645 = vmatpush1.msra.mxu0 0.0
        %646 = vmatprep.subr.mxu0 0.0
        %647 = vmatpush1.msra.mxu0 0.0
        %648 = vmatprep.subr.mxu0 0.0
        %649 = vmatpush1.msra.mxu0 0.0
        %650 = vmatprep.subr.mxu0 0.0
        %651 = vmatpush1.msra.mxu0 0.0
        %652 = vmatprep.subr.mxu0 0.0
        %653 = vmatpush1.msra.mxu0 0.0
        %654 = vmatprep.subr.mxu0 0.0
        %655 = vmatpush1.msra.mxu0 0.0
        %656 = vmatprep.subr.mxu0 0.0
        %657 = vmatpush1.msra.mxu0 0.0
        %658 = vmatprep.subr.mxu0 0.0
        %659 = vmatpush1.msra.mxu0 0.0
        %660 = vmatprep.subr.mxu0 0.0
        %661 = vmatpush1.msra.mxu0 0.0
        %662 = vmatprep.subr.mxu0 0.0
        %663 = vmatpush1.msra.mxu0 0.0
        %664 = vmatprep.subr.mxu0 0.0
        %665 = vmatpush1.msra.mxu0 0.0
        %666 = vmatprep.subr.mxu0 0.0
        %667 = vmatpush1.msra.mxu0 0.0
        %668 = vmatprep.subr.mxu0 0.0
        %669 = vmatpush1.msra.mxu0 0.0
        %670 = vmatprep.subr.mxu0 0.0
        %671 = vmatpush1.msra.mxu0 0.0
        %672 = vmatprep.subr.mxu0 %v638
        %673 = vmatpush1.msra.mxu0 %v636
        %674 = vmatprep.subr.mxu0 0.0
        %675 = vmatpush2.msra.mxu0 0.0
        %676 = vmatprep.subr.mxu0 0.0
        %677 = vmatpush2.msra.mxu0 0.0
        %678 = vmatprep.subr.mxu0 0.0
        %679 = vmatpush2.msra.mxu0 0.0
        %680 = vmatprep.subr.mxu0 0.0
        %681 = vmatpush2.msra.mxu0 0.0
        %682 = vmatprep.subr.mxu0 0.0
        %683 = vmatpush2.msra.mxu0 0.0
        %684 = vmatprep.subr.mxu0 0.0
        %685 = vmatpush2.msra.mxu0 0.0
        %686 = vmatprep.subr.mxu0 0.0
        %687 = vmatpush2.msra.mxu0 0.0
        %688 = vmatprep.subr.mxu0 0.0
        %689 = vmatpush2.msra.mxu0 0.0
        %690 = vmatprep.subr.mxu0 0.0
        %691 = vmatpush2.msra.mxu0 0.0
        %692 = vmatprep.subr.mxu0 0.0
        %693 = vmatpush2.msra.mxu0 0.0
        %694 = vmatprep.subr.mxu0 0.0
        %695 = vmatpush2.msra.mxu0 0.0
        %696 = vmatprep.subr.mxu0 0.0
        %697 = vmatpush2.msra.mxu0 0.0
        %698 = vmatprep.subr.mxu0 0.0
        %699 = vmatpush2.msra.mxu0 0.0
        %700 = vmatprep.subr.mxu0 0.0
        %701 = vmatpush2.msra.mxu0 0.0
        %702 = vmatprep.subr.mxu0 0.0
        %703 = vmatpush2.msra.mxu0 0.0
        %704 = vmatprep.subr.mxu0 0.0
        %705 = vmatpush2.msra.mxu0 0.0
        %706 = vmatprep.mubr.f32.mxu0 0.0
        %707 = vmatmul.mubr.f32.gmra.mxu0 %v634
        %v708 = vpop.f32.mrf.mxu0
        %v709 = vadd.f32 0.0, %v708
        %v710 = vpop.f32.mrf.mxu0
        %v711 = vadd.f32 0.0, %v710
        %712 = vdwg.mxu0
        %713 = vmatprep.subr.mxu0 0.0
        %714 = vmatpush1.msra.mxu0 0.0
        %715 = vmatprep.subr.mxu0 0.0
        %716 = vmatpush1.msra.mxu0 0.0
        %717 = vmatprep.subr.mxu0 0.0
        %718 = vmatpush1.msra.mxu0 0.0
        %719 = vmatprep.subr.mxu0 0.0
        %720 = vmatpush1.msra.mxu0 0.0
        %721 = vmatprep.subr.mxu0 0.0
        %722 = vmatpush1.msra.mxu0 0.0
        %723 = vmatprep.subr.mxu0 0.0
        %724 = vmatpush1.msra.mxu0 0.0
        %725 = vmatprep.subr.mxu0 0.0
        %726 = vmatpush1.msra.mxu0 0.0
        %727 = vmatprep.subr.mxu0 0.0
        %728 = vmatpush1.msra.mxu0 0.0
        %729 = vmatprep.subr.mxu0 0.0
        %730 = vmatpush1.msra.mxu0 0.0
        %731 = vmatprep.subr.mxu0 0.0
        %732 = vmatpush1.msra.mxu0 0.0
        %733 = vmatprep.subr.mxu0 0.0
        %734 = vmatpush1.msra.mxu0 0.0
        %735 = vmatprep.subr.mxu0 0.0
        %736 = vmatpush1.msra.mxu0 0.0
        %737 = vmatprep.subr.mxu0 0.0
        %738 = vmatpush1.msra.mxu0 0.0
        %739 = vmatprep.subr.mxu0 0.0
        %740 = vmatpush1.msra.mxu0 0.0
        %741 = vmatprep.subr.mxu0 0.0
        %742 = vmatpush1.msra.mxu0 0.0
        %743 = vmatprep.subr.mxu0 0.0
        %744 = vmatpush1.msra.mxu0 %v640
        %745 = vmatprep.subr.mxu0 0.0
        %746 = vmatpush2.msra.mxu0 0.0
        %747 = vmatprep.subr.mxu0 0.0
        %748 = vmatpush2.msra.mxu0 0.0
        %749 = vmatprep.subr.mxu0 0.0
        %750 = vmatpush2.msra.mxu0 0.0
        %751 = vmatprep.subr.mxu0 0.0
        %752 = vmatpush2.msra.mxu0 0.0
        %753 = vmatprep.subr.mxu0 0.0
        %754 = vmatpush2.msra.mxu0 0.0
        %755 = vmatprep.subr.mxu0 0.0
        %756 = vmatpush2.msra.mxu0 0.0
        %757 = vmatprep.subr.mxu0 0.0
        %758 = vmatpush2.msra.mxu0 0.0
        %759 = vmatprep.subr.mxu0 0.0
        %760 = vmatpush2.msra.mxu0 0.0
        %761 = vmatprep.subr.mxu0 0.0
        %762 = vmatpush2.msra.mxu0 0.0
        %763 = vmatprep.subr.mxu0 0.0
        %764 = vmatpush2.msra.mxu0 0.0
        %765 = vmatprep.subr.mxu0 0.0
        %766 = vmatpush2.msra.mxu0 0.0
        %767 = vmatprep.subr.mxu0 0.0
        %768 = vmatpush2.msra.mxu0 0.0
        %769 = vmatprep.subr.mxu0 0.0
        %770 = vmatpush2.msra.mxu0 0.0
        %771 = vmatprep.subr.mxu0 0.0
        %772 = vmatpush2.msra.mxu0 0.0
        %773 = vmatprep.subr.mxu0 0.0
        %774 = vmatpush2.msra.mxu0 0.0
        %775 = vmatprep.subr.mxu0 0.0
        %776 = vmatpush2.msra.mxu0 0.0
        %777 = vmatprep.mubr.f32.mxu0 0.0
        %778 = vmatmul.mubr.f32.gmra.mxu0 %v634
        %v779 = vpop.f32.mrf.mxu0
        %v780 = vadd.f32 0.0, %v779
        %v781 = vpop.f32.mrf.mxu0
        %782 = vdwg.mxu0
        %v783 = vadd.f32 %v539, %v709
        %v784 = vadd.f32 %v541, %v711
        %v785 = vadd.f32 %v610, %v780
        %s786 = scalar_lea.vmem %s1, 12
        %v787 = vld [vmem:[%s786] sm:$0xf]
        %v788 = vld [vmem:[%s277] sm:$0xff]
        %v789 = vld [vmem:[%s277 + $0x8] sm:$0xff]
        %v792 = vcombine.high %v788, %v788
        %v793 = vcombine.high %v789, %v789
        %794 = vrot.lane.b32.xlu0 %v788, 1
        %v795 = vpop.permute.xlu0 %794
        %796 = vrot.lane.b32.xlu0 %v792, 1
        %v797 = vpop.permute.xlu0 %796
        %798 = vrot.lane.b32.xlu0 %v789, 1
        %v799 = vpop.permute.xlu0 %798
        %800 = vrot.lane.b32.xlu0 %v793, 1
        %v801 = vpop.permute.xlu0 %800
        %vm802 = vcmask 7168
        %v803 = vsel %vm802, %v795, %v797
        %v804 = vsel %vm802, %v797, %v799
        %v805 = vsel %vm802, %v799, %v801
        %v807 = vsel %vm299, %v787, 0
        %v809 = vsel %vm303, %v803, 0
        %v811 = vsel %vm303, %v804, 0
        %v813 = vsel %vm303, %v805, 0
        %815 = vmatprep.subr.mxu0 0.0
        %816 = vmatpush1.msra.mxu0 0.0
        %817 = vmatprep.subr.mxu0 0.0
        %818 = vmatpush1.msra.mxu0 0.0
        %819 = vmatprep.subr.mxu0 0.0
        %820 = vmatpush1.msra.mxu0 0.0
        %821 = vmatprep.subr.mxu0 0.0
        %822 = vmatpush1.msra.mxu0 0.0
        %823 = vmatprep.subr.mxu0 0.0
        %824 = vmatpush1.msra.mxu0 0.0
        %825 = vmatprep.subr.mxu0 0.0
        %826 = vmatpush1.msra.mxu0 0.0
        %827 = vmatprep.subr.mxu0 0.0
        %828 = vmatpush1.msra.mxu0 0.0
        %829 = vmatprep.subr.mxu0 0.0
        %830 = vmatpush1.msra.mxu0 0.0
        %831 = vmatprep.subr.mxu0 0.0
        %832 = vmatpush1.msra.mxu0 0.0
        %833 = vmatprep.subr.mxu0 0.0
        %834 = vmatpush1.msra.mxu0 0.0
        %835 = vmatprep.subr.mxu0 0.0
        %836 = vmatpush1.msra.mxu0 0.0
        %837 = vmatprep.subr.mxu0 0.0
        %838 = vmatpush1.msra.mxu0 0.0
        %839 = vmatprep.subr.mxu0 0.0
        %840 = vmatpush1.msra.mxu0 0.0
        %841 = vmatprep.subr.mxu0 0.0
        %842 = vmatpush1.msra.mxu0 0.0
        %843 = vmatprep.subr.mxu0 0.0
        %844 = vmatpush1.msra.mxu0 0.0
        %845 = vmatprep.subr.mxu0 %v811
        %846 = vmatpush1.msra.mxu0 %v809
        %847 = vmatprep.subr.mxu0 0.0
        %848 = vmatpush2.msra.mxu0 0.0
        %849 = vmatprep.subr.mxu0 0.0
        %850 = vmatpush2.msra.mxu0 0.0
        %851 = vmatprep.subr.mxu0 0.0
        %852 = vmatpush2.msra.mxu0 0.0
        %853 = vmatprep.subr.mxu0 0.0
        %854 = vmatpush2.msra.mxu0 0.0
        %855 = vmatprep.subr.mxu0 0.0
        %856 = vmatpush2.msra.mxu0 0.0
        %857 = vmatprep.subr.mxu0 0.0
        %858 = vmatpush2.msra.mxu0 0.0
        %859 = vmatprep.subr.mxu0 0.0
        %860 = vmatpush2.msra.mxu0 0.0
        %861 = vmatprep.subr.mxu0 0.0
        %862 = vmatpush2.msra.mxu0 0.0
        %863 = vmatprep.subr.mxu0 0.0
        %864 = vmatpush2.msra.mxu0 0.0
        %865 = vmatprep.subr.mxu0 0.0
        %866 = vmatpush2.msra.mxu0 0.0
        %867 = vmatprep.subr.mxu0 0.0
        %868 = vmatpush2.msra.mxu0 0.0
        %869 = vmatprep.subr.mxu0 0.0
        %870 = vmatpush2.msra.mxu0 0.0
        %871 = vmatprep.subr.mxu0 0.0
        %872 = vmatpush2.msra.mxu0 0.0
        %873 = vmatprep.subr.mxu0 0.0
        %874 = vmatpush2.msra.mxu0 0.0
        %875 = vmatprep.subr.mxu0 0.0
        %876 = vmatpush2.msra.mxu0 0.0
        %877 = vmatprep.subr.mxu0 0.0
        %878 = vmatpush2.msra.mxu0 0.0
        %879 = vmatprep.mubr.f32.mxu0 0.0
        %880 = vmatmul.mubr.f32.gmra.mxu0 %v807
        %v881 = vpop.f32.mrf.mxu0
        %v882 = vadd.f32 0.0, %v881
        %v883 = vpop.f32.mrf.mxu0
        %v884 = vadd.f32 0.0, %v883
        %885 = vdwg.mxu0
        %886 = vmatprep.subr.mxu0 0.0
        %887 = vmatpush1.msra.mxu0 0.0
        %888 = vmatprep.subr.mxu0 0.0
        %889 = vmatpush1.msra.mxu0 0.0
        %890 = vmatprep.subr.mxu0 0.0
        %891 = vmatpush1.msra.mxu0 0.0
        %892 = vmatprep.subr.mxu0 0.0
        %893 = vmatpush1.msra.mxu0 0.0
        %894 = vmatprep.subr.mxu0 0.0
        %895 = vmatpush1.msra.mxu0 0.0
        %896 = vmatprep.subr.mxu0 0.0
        %897 = vmatpush1.msra.mxu0 0.0
        %898 = vmatprep.subr.mxu0 0.0
        %899 = vmatpush1.msra.mxu0 0.0
        %900 = vmatprep.subr.mxu0 0.0
        %901 = vmatpush1.msra.mxu0 0.0
        %902 = vmatprep.subr.mxu0 0.0
        %903 = vmatpush1.msra.mxu0 0.0
        %904 = vmatprep.subr.mxu0 0.0
        %905 = vmatpush1.msra.mxu0 0.0
        %906 = vmatprep.subr.mxu0 0.0
        %907 = vmatpush1.msra.mxu0 0.0
        %908 = vmatprep.subr.mxu0 0.0
        %909 = vmatpush1.msra.mxu0 0.0
        %910 = vmatprep.subr.mxu0 0.0
        %911 = vmatpush1.msra.mxu0 0.0
        %912 = vmatprep.subr.mxu0 0.0
        %913 = vmatpush1.msra.mxu0 0.0
        %914 = vmatprep.subr.mxu0 0.0
        %915 = vmatpush1.msra.mxu0 0.0
        %916 = vmatprep.subr.mxu0 0.0
        %917 = vmatpush1.msra.mxu0 %v813
        %918 = vmatprep.subr.mxu0 0.0
        %919 = vmatpush2.msra.mxu0 0.0
        %920 = vmatprep.subr.mxu0 0.0
        %921 = vmatpush2.msra.mxu0 0.0
        %922 = vmatprep.subr.mxu0 0.0
        %923 = vmatpush2.msra.mxu0 0.0
        %924 = vmatprep.subr.mxu0 0.0
        %925 = vmatpush2.msra.mxu0 0.0
        %926 = vmatprep.subr.mxu0 0.0
        %927 = vmatpush2.msra.mxu0 0.0
        %928 = vmatprep.subr.mxu0 0.0
        %929 = vmatpush2.msra.mxu0 0.0
        %930 = vmatprep.subr.mxu0 0.0
        %931 = vmatpush2.msra.mxu0 0.0
        %932 = vmatprep.subr.mxu0 0.0
        %933 = vmatpush2.msra.mxu0 0.0
        %934 = vmatprep.subr.mxu0 0.0
        %935 = vmatpush2.msra.mxu0 0.0
        %936 = vmatprep.subr.mxu0 0.0
        %937 = vmatpush2.msra.mxu0 0.0
        %938 = vmatprep.subr.mxu0 0.0
        %939 = vmatpush2.msra.mxu0 0.0
        %940 = vmatprep.subr.mxu0 0.0
        %941 = vmatpush2.msra.mxu0 0.0
        %942 = vmatprep.subr.mxu0 0.0
        %943 = vmatpush2.msra.mxu0 0.0
        %944 = vmatprep.subr.mxu0 0.0
        %945 = vmatpush2.msra.mxu0 0.0
        %946 = vmatprep.subr.mxu0 0.0
        %947 = vmatpush2.msra.mxu0 0.0
        %948 = vmatprep.subr.mxu0 0.0
        %949 = vmatpush2.msra.mxu0 0.0
        %950 = vmatprep.mubr.f32.mxu0 0.0
        %951 = vmatmul.mubr.f32.gmra.mxu0 %v807
        %v952 = vpop.f32.mrf.mxu0
        %v953 = vadd.f32 0.0, %v952
        %v954 = vpop.f32.mrf.mxu0
        %955 = vdwg.mxu0
        %v956 = vadd.f32 %v783, %v882
        %v957 = vadd.f32 %v784, %v884
        %v958 = vadd.f32 %v785, %v953
        %s959 = scalar_lea.vmem %s1, 16
        %v960 = vld [vmem:[%s959] sm:$0xf]
        %v961 = vld [vmem:[%s277 + $0x4] sm:$0xff]
        %v962 = vld [vmem:[%s277 + $0xc] sm:$0xf]
        %v965 = vcombine.high %v961, %v961
        %v967 = vsel %vm299, %v960, 0
        %v969 = vsel %vm303, %v961, 0
        %v971 = vsel %vm303, %v965, 0
        %v973 = vsel %vm303, %v962, 0
        %975 = vmatprep.subr.mxu0 0.0
        %976 = vmatpush1.msra.mxu0 0.0
        %977 = vmatprep.subr.mxu0 0.0
        %978 = vmatpush1.msra.mxu0 0.0
        %979 = vmatprep.subr.mxu0 0.0
        %980 = vmatpush1.msra.mxu0 0.0
        %981 = vmatprep.subr.mxu0 0.0
        %982 = vmatpush1.msra.mxu0 0.0
        %983 = vmatprep.subr.mxu0 0.0
        %984 = vmatpush1.msra.mxu0 0.0
        %985 = vmatprep.subr.mxu0 0.0
        %986 = vmatpush1.msra.mxu0 0.0
        %987 = vmatprep.subr.mxu0 0.0
        %988 = vmatpush1.msra.mxu0 0.0
        %989 = vmatprep.subr.mxu0 0.0
        %990 = vmatpush1.msra.mxu0 0.0
        %991 = vmatprep.subr.mxu0 0.0
        %992 = vmatpush1.msra.mxu0 0.0
        %993 = vmatprep.subr.mxu0 0.0
        %994 = vmatpush1.msra.mxu0 0.0
        %995 = vmatprep.subr.mxu0 0.0
        %996 = vmatpush1.msra.mxu0 0.0
        %997 = vmatprep.subr.mxu0 0.0
        %998 = vmatpush1.msra.mxu0 0.0
        %999 = vmatprep.subr.mxu0 0.0
        %1000 = vmatpush1.msra.mxu0 0.0
        %1001 = vmatprep.subr.mxu0 0.0
        %1002 = vmatpush1.msra.mxu0 0.0
        %1003 = vmatprep.subr.mxu0 0.0
        %1004 = vmatpush1.msra.mxu0 0.0
        %1005 = vmatprep.subr.mxu0 %v971
        %1006 = vmatpush1.msra.mxu0 %v969
        %1007 = vmatprep.subr.mxu0 0.0
        %1008 = vmatpush2.msra.mxu0 0.0
        %1009 = vmatprep.subr.mxu0 0.0
        %1010 = vmatpush2.msra.mxu0 0.0
        %1011 = vmatprep.subr.mxu0 0.0
        %1012 = vmatpush2.msra.mxu0 0.0
        %1013 = vmatprep.subr.mxu0 0.0
        %1014 = vmatpush2.msra.mxu0 0.0
        %1015 = vmatprep.subr.mxu0 0.0
        %1016 = vmatpush2.msra.mxu0 0.0
        %1017 = vmatprep.subr.mxu0 0.0
        %1018 = vmatpush2.msra.mxu0 0.0
        %1019 = vmatprep.subr.mxu0 0.0
        %1020 = vmatpush2.msra.mxu0 0.0
        %1021 = vmatprep.subr.mxu0 0.0
        %1022 = vmatpush2.msra.mxu0 0.0
        %1023 = vmatprep.subr.mxu0 0.0
        %1024 = vmatpush2.msra.mxu0 0.0
        %1025 = vmatprep.subr.mxu0 0.0
        %1026 = vmatpush2.msra.mxu0 0.0
        %1027 = vmatprep.subr.mxu0 0.0
        %1028 = vmatpush2.msra.mxu0 0.0
        %1029 = vmatprep.subr.mxu0 0.0
        %1030 = vmatpush2.msra.mxu0 0.0
        %1031 = vmatprep.subr.mxu0 0.0
        %1032 = vmatpush2.msra.mxu0 0.0
        %1033 = vmatprep.subr.mxu0 0.0
        %1034 = vmatpush2.msra.mxu0 0.0
        %1035 = vmatprep.subr.mxu0 0.0
        %1036 = vmatpush2.msra.mxu0 0.0
        %1037 = vmatprep.subr.mxu0 0.0
        %1038 = vmatpush2.msra.mxu0 0.0
        %1039 = vmatprep.mubr.f32.mxu0 0.0
        %1040 = vmatmul.mubr.f32.gmra.mxu0 %v967
        %v1041 = vpop.f32.mrf.mxu0
        %v1042 = vadd.f32 0.0, %v1041
        %v1043 = vpop.f32.mrf.mxu0
        %v1044 = vadd.f32 0.0, %v1043
        %1045 = vdwg.mxu0
        %1046 = vmatprep.subr.mxu0 0.0
        %1047 = vmatpush1.msra.mxu0 0.0
        %1048 = vmatprep.subr.mxu0 0.0
        %1049 = vmatpush1.msra.mxu0 0.0
        %1050 = vmatprep.subr.mxu0 0.0
        %1051 = vmatpush1.msra.mxu0 0.0
        %1052 = vmatprep.subr.mxu0 0.0
        %1053 = vmatpush1.msra.mxu0 0.0
        %1054 = vmatprep.subr.mxu0 0.0
        %1055 = vmatpush1.msra.mxu0 0.0
        %1056 = vmatprep.subr.mxu0 0.0
        %1057 = vmatpush1.msra.mxu0 0.0
        %1058 = vmatprep.subr.mxu0 0.0
        %1059 = vmatpush1.msra.mxu0 0.0
        %1060 = vmatprep.subr.mxu0 0.0
        %1061 = vmatpush1.msra.mxu0 0.0
        %1062 = vmatprep.subr.mxu0 0.0
        %1063 = vmatpush1.msra.mxu0 0.0
        %1064 = vmatprep.subr.mxu0 0.0
        %1065 = vmatpush1.msra.mxu0 0.0
        %1066 = vmatprep.subr.mxu0 0.0
        %1067 = vmatpush1.msra.mxu0 0.0
        %1068 = vmatprep.subr.mxu0 0.0
        %1069 = vmatpush1.msra.mxu0 0.0
        %1070 = vmatprep.subr.mxu0 0.0
        %1071 = vmatpush1.msra.mxu0 0.0
        %1072 = vmatprep.subr.mxu0 0.0
        %1073 = vmatpush1.msra.mxu0 0.0
        %1074 = vmatprep.subr.mxu0 0.0
        %1075 = vmatpush1.msra.mxu0 0.0
        %1076 = vmatprep.subr.mxu0 0.0
        %1077 = vmatpush1.msra.mxu0 %v973
        %1078 = vmatprep.subr.mxu0 0.0
        %1079 = vmatpush2.msra.mxu0 0.0
        %1080 = vmatprep.subr.mxu0 0.0
        %1081 = vmatpush2.msra.mxu0 0.0
        %1082 = vmatprep.subr.mxu0 0.0
        %1083 = vmatpush2.msra.mxu0 0.0
        %1084 = vmatprep.subr.mxu0 0.0
        %1085 = vmatpush2.msra.mxu0 0.0
        %1086 = vmatprep.subr.mxu0 0.0
        %1087 = vmatpush2.msra.mxu0 0.0
        %1088 = vmatprep.subr.mxu0 0.0
        %1089 = vmatpush2.msra.mxu0 0.0
        %1090 = vmatprep.subr.mxu0 0.0
        %1091 = vmatpush2.msra.mxu0 0.0
        %1092 = vmatprep.subr.mxu0 0.0
        %1093 = vmatpush2.msra.mxu0 0.0
        %1094 = vmatprep.subr.mxu0 0.0
        %1095 = vmatpush2.msra.mxu0 0.0
        %1096 = vmatprep.subr.mxu0 0.0
        %1097 = vmatpush2.msra.mxu0 0.0
        %1098 = vmatprep.subr.mxu0 0.0
        %1099 = vmatpush2.msra.mxu0 0.0
        %1100 = vmatprep.subr.mxu0 0.0
        %1101 = vmatpush2.msra.mxu0 0.0
        %1102 = vmatprep.subr.mxu0 0.0
        %1103 = vmatpush2.msra.mxu0 0.0
        %1104 = vmatprep.subr.mxu0 0.0
        %1105 = vmatpush2.msra.mxu0 0.0
        %1106 = vmatprep.subr.mxu0 0.0
        %1107 = vmatpush2.msra.mxu0 0.0
        %1108 = vmatprep.subr.mxu0 0.0
        %1109 = vmatpush2.msra.mxu0 0.0
        %1110 = vmatprep.mubr.f32.mxu0 0.0
        %1111 = vmatmul.mubr.f32.gmra.mxu0 %v967
        %v1112 = vpop.f32.mrf.mxu0
        %v1113 = vadd.f32 0.0, %v1112
        %v1114 = vpop.f32.mrf.mxu0
        %1115 = vdwg.mxu0
        %v1116 = vadd.f32 %v956, %v1042
        %v1117 = vadd.f32 %v957, %v1044
        %v1118 = vadd.f32 %v958, %v1113
        %s1119 = scalar_lea.vmem %s1, 20
        %v1120 = vld [vmem:[%s1119] sm:$0xf]
        %v1121 = vld [vmem:[%s277 + $0x4] sm:$0xff]
        %v1122 = vld [vmem:[%s277 + $0xc] sm:$0xf]
        %v1125 = vcombine.high %v1121, %v1121
        %1126 = vrot.lane.b32.xlu0 %v1121, 127
        %v1127 = vpop.permute.xlu0 %1126
        %1128 = vrot.lane.b32.xlu0 %v1125, 127
        %v1129 = vpop.permute.xlu0 %1128
        %1130 = vrot.lane.b32.xlu0 %v1122, 127
        %v1131 = vpop.permute.xlu0 %1130
        %vm1132 = vcmask 1039360
        %v1133 = vsel %vm1132, %v1127, %v1129
        %v1134 = vsel %vm1132, %v1129, %v1131
        %v1136 = vsel %vm299, %v1120, 0
        %v1138 = vsel %vm303, %v1133, 0
        %v1140 = vsel %vm303, %v1134, 0
        %v1142 = vsel %vm303, %v1131, 0
        %1144 = vmatprep.subr.mxu0 0.0
        %1145 = vmatpush1.msra.mxu0 0.0
        %1146 = vmatprep.subr.mxu0 0.0
        %1147 = vmatpush1.msra.mxu0 0.0
        %1148 = vmatprep.subr.mxu0 0.0
        %1149 = vmatpush1.msra.mxu0 0.0
        %1150 = vmatprep.subr.mxu0 0.0
        %1151 = vmatpush1.msra.mxu0 0.0
        %1152 = vmatprep.subr.mxu0 0.0
        %1153 = vmatpush1.msra.mxu0 0.0
        %1154 = vmatprep.subr.mxu0 0.0
        %1155 = vmatpush1.msra.mxu0 0.0
        %1156 = vmatprep.subr.mxu0 0.0
        %1157 = vmatpush1.msra.mxu0 0.0
        %1158 = vmatprep.subr.mxu0 0.0
        %1159 = vmatpush1.msra.mxu0 0.0
        %1160 = vmatprep.subr.mxu0 0.0
        %1161 = vmatpush1.msra.mxu0 0.0
        %1162 = vmatprep.subr.mxu0 0.0
        %1163 = vmatpush1.msra.mxu0 0.0
        %1164 = vmatprep.subr.mxu0 0.0
        %1165 = vmatpush1.msra.mxu0 0.0
        %1166 = vmatprep.subr.mxu0 0.0
        %1167 = vmatpush1.msra.mxu0 0.0
        %1168 = vmatprep.subr.mxu0 0.0
        %1169 = vmatpush1.msra.mxu0 0.0
        %1170 = vmatprep.subr.mxu0 0.0
        %1171 = vmatpush1.msra.mxu0 0.0
        %1172 = vmatprep.subr.mxu0 0.0
        %1173 = vmatpush1.msra.mxu0 0.0
        %1174 = vmatprep.subr.mxu0 %v1140
        %1175 = vmatpush1.msra.mxu0 %v1138
        %1176 = vmatprep.subr.mxu0 0.0
        %1177 = vmatpush2.msra.mxu0 0.0
        %1178 = vmatprep.subr.mxu0 0.0
        %1179 = vmatpush2.msra.mxu0 0.0
        %1180 = vmatprep.subr.mxu0 0.0
        %1181 = vmatpush2.msra.mxu0 0.0
        %1182 = vmatprep.subr.mxu0 0.0
        %1183 = vmatpush2.msra.mxu0 0.0
        %1184 = vmatprep.subr.mxu0 0.0
        %1185 = vmatpush2.msra.mxu0 0.0
        %1186 = vmatprep.subr.mxu0 0.0
        %1187 = vmatpush2.msra.mxu0 0.0
        %1188 = vmatprep.subr.mxu0 0.0
        %1189 = vmatpush2.msra.mxu0 0.0
        %1190 = vmatprep.subr.mxu0 0.0
        %1191 = vmatpush2.msra.mxu0 0.0
        %1192 = vmatprep.subr.mxu0 0.0
        %1193 = vmatpush2.msra.mxu0 0.0
        %1194 = vmatprep.subr.mxu0 0.0
        %1195 = vmatpush2.msra.mxu0 0.0
        %1196 = vmatprep.subr.mxu0 0.0
        %1197 = vmatpush2.msra.mxu0 0.0
        %1198 = vmatprep.subr.mxu0 0.0
        %1199 = vmatpush2.msra.mxu0 0.0
        %1200 = vmatprep.subr.mxu0 0.0
        %1201 = vmatpush2.msra.mxu0 0.0
        %1202 = vmatprep.subr.mxu0 0.0
        %1203 = vmatpush2.msra.mxu0 0.0
        %1204 = vmatprep.subr.mxu0 0.0
        %1205 = vmatpush2.msra.mxu0 0.0
        %1206 = vmatprep.subr.mxu0 0.0
        %1207 = vmatpush2.msra.mxu0 0.0
        %1208 = vmatprep.mubr.f32.mxu0 0.0
        %1209 = vmatmul.mubr.f32.gmra.mxu0 %v1136
        %v1210 = vpop.f32.mrf.mxu0
        %v1211 = vadd.f32 0.0, %v1210
        %v1212 = vpop.f32.mrf.mxu0
        %v1213 = vadd.f32 0.0, %v1212
        %1214 = vdwg.mxu0
        %1215 = vmatprep.subr.mxu0 0.0
        %1216 = vmatpush1.msra.mxu0 0.0
        %1217 = vmatprep.subr.mxu0 0.0
        %1218 = vmatpush1.msra.mxu0 0.0
        %1219 = vmatprep.subr.mxu0 0.0
        %1220 = vmatpush1.msra.mxu0 0.0
        %1221 = vmatprep.subr.mxu0 0.0
        %1222 = vmatpush1.msra.mxu0 0.0
        %1223 = vmatprep.subr.mxu0 0.0
        %1224 = vmatpush1.msra.mxu0 0.0
        %1225 = vmatprep.subr.mxu0 0.0
        %1226 = vmatpush1.msra.mxu0 0.0
        %1227 = vmatprep.subr.mxu0 0.0
        %1228 = vmatpush1.msra.mxu0 0.0
        %1229 = vmatprep.subr.mxu0 0.0
        %1230 = vmatpush1.msra.mxu0 0.0
        %1231 = vmatprep.subr.mxu0 0.0
        %1232 = vmatpush1.msra.mxu0 0.0
        %1233 = vmatprep.subr.mxu0 0.0
        %1234 = vmatpush1.msra.mxu0 0.0
        %1235 = vmatprep.subr.mxu0 0.0
        %1236 = vmatpush1.msra.mxu0 0.0
        %1237 = vmatprep.subr.mxu0 0.0
        %1238 = vmatpush1.msra.mxu0 0.0
        %1239 = vmatprep.subr.mxu0 0.0
        %1240 = vmatpush1.msra.mxu0 0.0
        %1241 = vmatprep.subr.mxu0 0.0
        %1242 = vmatpush1.msra.mxu0 0.0
        %1243 = vmatprep.subr.mxu0 0.0
        %1244 = vmatpush1.msra.mxu0 0.0
        %1245 = vmatprep.subr.mxu0 0.0
        %1246 = vmatpush1.msra.mxu0 %v1142
        %1247 = vmatprep.subr.mxu0 0.0
        %1248 = vmatpush2.msra.mxu0 0.0
        %1249 = vmatprep.subr.mxu0 0.0
        %1250 = vmatpush2.msra.mxu0 0.0
        %1251 = vmatprep.subr.mxu0 0.0
        %1252 = vmatpush2.msra.mxu0 0.0
        %1253 = vmatprep.subr.mxu0 0.0
        %1254 = vmatpush2.msra.mxu0 0.0
        %1255 = vmatprep.subr.mxu0 0.0
        %1256 = vmatpush2.msra.mxu0 0.0
        %1257 = vmatprep.subr.mxu0 0.0
        %1258 = vmatpush2.msra.mxu0 0.0
        %1259 = vmatprep.subr.mxu0 0.0
        %1260 = vmatpush2.msra.mxu0 0.0
        %1261 = vmatprep.subr.mxu0 0.0
        %1262 = vmatpush2.msra.mxu0 0.0
        %1263 = vmatprep.subr.mxu0 0.0
        %1264 = vmatpush2.msra.mxu0 0.0
        %1265 = vmatprep.subr.mxu0 0.0
        %1266 = vmatpush2.msra.mxu0 0.0
        %1267 = vmatprep.subr.mxu0 0.0
        %1268 = vmatpush2.msra.mxu0 0.0
        %1269 = vmatprep.subr.mxu0 0.0
        %1270 = vmatpush2.msra.mxu0 0.0
        %1271 = vmatprep.subr.mxu0 0.0
        %1272 = vmatpush2.msra.mxu0 0.0
        %1273 = vmatprep.subr.mxu0 0.0
        %1274 = vmatpush2.msra.mxu0 0.0
        %1275 = vmatprep.subr.mxu0 0.0
        %1276 = vmatpush2.msra.mxu0 0.0
        %1277 = vmatprep.subr.mxu0 0.0
        %1278 = vmatpush2.msra.mxu0 0.0
        %1279 = vmatprep.mubr.f32.mxu0 0.0
        %1280 = vmatmul.mubr.f32.gmra.mxu0 %v1136
        %v1281 = vpop.f32.mrf.mxu0
        %v1282 = vadd.f32 0.0, %v1281
        %v1283 = vpop.f32.mrf.mxu0
        %1284 = vdwg.mxu0
        %v1285 = vadd.f32 %v1116, %v1211
        %v1286 = vadd.f32 %v1117, %v1213
        %v1287 = vadd.f32 %v1118, %v1282
        %s1288 = scalar_lea.vmem %s1, 24
        %v1289 = vld [vmem:[%s1288] sm:$0xf]
        %v1290 = vld [vmem:[%s277 + $0x4] sm:$0xff]
        %v1291 = vld [vmem:[%s277 + $0xc] sm:$0xf]
        %v1294 = vcombine.high %v1290, %v1290
        %1295 = vrot.lane.b32.xlu0 %v1290, 111
        %v1296 = vpop.permute.xlu0 %1295
        %1297 = vrot.lane.b32.xlu0 %v1294, 111
        %v1298 = vpop.permute.xlu0 %1297
        %1299 = vrot.lane.b32.xlu0 %v1291, 111
        %v1300 = vpop.permute.xlu0 %1299
        %vm1301 = vcmask 908288
        %v1302 = vsel %vm1301, %v1296, %v1298
        %v1303 = vsel %vm1301, %v1298, %v1300
        %v1305 = vsel %vm299, %v1289, 0
        %v1307 = vsel %vm303, %v1302, 0
        %v1309 = vsel %vm303, %v1303, 0
        %v1311 = vsel %vm303, %v1300, 0
        %1313 = vmatprep.subr.mxu0 0.0
        %1314 = vmatpush1.msra.mxu0 0.0
        %1315 = vmatprep.subr.mxu0 0.0
        %1316 = vmatpush1.msra.mxu0 0.0
        %1317 = vmatprep.subr.mxu0 0.0
        %1318 = vmatpush1.msra.mxu0 0.0
        %1319 = vmatprep.subr.mxu0 0.0
        %1320 = vmatpush1.msra.mxu0 0.0
        %1321 = vmatprep.subr.mxu0 0.0
        %1322 = vmatpush1.msra.mxu0 0.0
        %1323 = vmatprep.subr.mxu0 0.0
        %1324 = vmatpush1.msra.mxu0 0.0
        %1325 = vmatprep.subr.mxu0 0.0
        %1326 = vmatpush1.msra.mxu0 0.0
        %1327 = vmatprep.subr.mxu0 0.0
        %1328 = vmatpush1.msra.mxu0 0.0
        %1329 = vmatprep.subr.mxu0 0.0
        %1330 = vmatpush1.msra.mxu0 0.0
        %1331 = vmatprep.subr.mxu0 0.0
        %1332 = vmatpush1.msra.mxu0 0.0
        %1333 = vmatprep.subr.mxu0 0.0
        %1334 = vmatpush1.msra.mxu0 0.0
        %1335 = vmatprep.subr.mxu0 0.0
        %1336 = vmatpush1.msra.mxu0 0.0
        %1337 = vmatprep.subr.mxu0 0.0
        %1338 = vmatpush1.msra.mxu0 0.0
        %1339 = vmatprep.subr.mxu0 0.0
        %1340 = vmatpush1.msra.mxu0 0.0
        %1341 = vmatprep.subr.mxu0 0.0
        %1342 = vmatpush1.msra.mxu0 0.0
        %1343 = vmatprep.subr.mxu0 %v1309
        %1344 = vmatpush1.msra.mxu0 %v1307
        %1345 = vmatprep.subr.mxu0 0.0
        %1346 = vmatpush2.msra.mxu0 0.0
        %1347 = vmatprep.subr.mxu0 0.0
        %1348 = vmatpush2.msra.mxu0 0.0
        %1349 = vmatprep.subr.mxu0 0.0
        %1350 = vmatpush2.msra.mxu0 0.0
        %1351 = vmatprep.subr.mxu0 0.0
        %1352 = vmatpush2.msra.mxu0 0.0
        %1353 = vmatprep.subr.mxu0 0.0
        %1354 = vmatpush2.msra.mxu0 0.0
        %1355 = vmatprep.subr.mxu0 0.0
        %1356 = vmatpush2.msra.mxu0 0.0
        %1357 = vmatprep.subr.mxu0 0.0
        %1358 = vmatpush2.msra.mxu0 0.0
        %1359 = vmatprep.subr.mxu0 0.0
        %1360 = vmatpush2.msra.mxu0 0.0
        %1361 = vmatprep.subr.mxu0 0.0
        %1362 = vmatpush2.msra.mxu0 0.0
        %1363 = vmatprep.subr.mxu0 0.0
        %1364 = vmatpush2.msra.mxu0 0.0
        %1365 = vmatprep.subr.mxu0 0.0
        %1366 = vmatpush2.msra.mxu0 0.0
        %1367 = vmatprep.subr.mxu0 0.0
        %1368 = vmatpush2.msra.mxu0 0.0
        %1369 = vmatprep.subr.mxu0 0.0
        %1370 = vmatpush2.msra.mxu0 0.0
        %1371 = vmatprep.subr.mxu0 0.0
        %1372 = vmatpush2.msra.mxu0 0.0
        %1373 = vmatprep.subr.mxu0 0.0
        %1374 = vmatpush2.msra.mxu0 0.0
        %1375 = vmatprep.subr.mxu0 0.0
        %1376 = vmatpush2.msra.mxu0 0.0
        %1377 = vmatprep.mubr.f32.mxu0 0.0
        %1378 = vmatmul.mubr.f32.gmra.mxu0 %v1305
        %v1379 = vpop.f32.mrf.mxu0
        %v1380 = vadd.f32 0.0, %v1379
        %v1381 = vpop.f32.mrf.mxu0
        %v1382 = vadd.f32 0.0, %v1381
        %1383 = vdwg.mxu0
        %1384 = vmatprep.subr.mxu0 0.0
        %1385 = vmatpush1.msra.mxu0 0.0
        %1386 = vmatprep.subr.mxu0 0.0
        %1387 = vmatpush1.msra.mxu0 0.0
        %1388 = vmatprep.subr.mxu0 0.0
        %1389 = vmatpush1.msra.mxu0 0.0
        %1390 = vmatprep.subr.mxu0 0.0
        %1391 = vmatpush1.msra.mxu0 0.0
        %1392 = vmatprep.subr.mxu0 0.0
        %1393 = vmatpush1.msra.mxu0 0.0
        %1394 = vmatprep.subr.mxu0 0.0
        %1395 = vmatpush1.msra.mxu0 0.0
        %1396 = vmatprep.subr.mxu0 0.0
        %1397 = vmatpush1.msra.mxu0 0.0
        %1398 = vmatprep.subr.mxu0 0.0
        %1399 = vmatpush1.msra.mxu0 0.0
        %1400 = vmatprep.subr.mxu0 0.0
        %1401 = vmatpush1.msra.mxu0 0.0
        %1402 = vmatprep.subr.mxu0 0.0
        %1403 = vmatpush1.msra.mxu0 0.0
        %1404 = vmatprep.subr.mxu0 0.0
        %1405 = vmatpush1.msra.mxu0 0.0
        %1406 = vmatprep.subr.mxu0 0.0
        %1407 = vmatpush1.msra.mxu0 0.0
        %1408 = vmatprep.subr.mxu0 0.0
        %1409 = vmatpush1.msra.mxu0 0.0
        %1410 = vmatprep.subr.mxu0 0.0
        %1411 = vmatpush1.msra.mxu0 0.0
        %1412 = vmatprep.subr.mxu0 0.0
        %1413 = vmatpush1.msra.mxu0 0.0
        %1414 = vmatprep.subr.mxu0 0.0
        %1415 = vmatpush1.msra.mxu0 %v1311
        %1416 = vmatprep.subr.mxu0 0.0
        %1417 = vmatpush2.msra.mxu0 0.0
        %1418 = vmatprep.subr.mxu0 0.0
        %1419 = vmatpush2.msra.mxu0 0.0
        %1420 = vmatprep.subr.mxu0 0.0
        %1421 = vmatpush2.msra.mxu0 0.0
        %1422 = vmatprep.subr.mxu0 0.0
        %1423 = vmatpush2.msra.mxu0 0.0
        %1424 = vmatprep.subr.mxu0 0.0
        %1425 = vmatpush2.msra.mxu0 0.0
        %1426 = vmatprep.subr.mxu0 0.0
        %1427 = vmatpush2.msra.mxu0 0.0
        %1428 = vmatprep.subr.mxu0 0.0
        %1429 = vmatpush2.msra.mxu0 0.0
        %1430 = vmatprep.subr.mxu0 0.0
        %1431 = vmatpush2.msra.mxu0 0.0
        %1432 = vmatprep.subr.mxu0 0.0
        %1433 = vmatpush2.msra.mxu0 0.0
        %1434 = vmatprep.subr.mxu0 0.0
        %1435 = vmatpush2.msra.mxu0 0.0
        %1436 = vmatprep.subr.mxu0 0.0
        %1437 = vmatpush2.msra.mxu0 0.0
        %1438 = vmatprep.subr.mxu0 0.0
        %1439 = vmatpush2.msra.mxu0 0.0
        %1440 = vmatprep.subr.mxu0 0.0
        %1441 = vmatpush2.msra.mxu0 0.0
        %1442 = vmatprep.subr.mxu0 0.0
        %1443 = vmatpush2.msra.mxu0 0.0
        %1444 = vmatprep.subr.mxu0 0.0
        %1445 = vmatpush2.msra.mxu0 0.0
        %1446 = vmatprep.subr.mxu0 0.0
        %1447 = vmatpush2.msra.mxu0 0.0
        %1448 = vmatprep.mubr.f32.mxu0 0.0
        %1449 = vmatmul.mubr.f32.gmra.mxu0 %v1305
        %v1450 = vpop.f32.mrf.mxu0
        %v1451 = vadd.f32 0.0, %v1450
        %v1452 = vpop.f32.mrf.mxu0
        %1453 = vdwg.mxu0
        %v1454 = vadd.f32 %v1285, %v1380
        %v1455 = vadd.f32 %v1286, %v1382
        %v1456 = vadd.f32 %v1287, %v1451
        %s1457 = scalar_lea.vmem %s1, 28
        %v1458 = vld [vmem:[%s1457] sm:$0xf]
        %v1459 = vld [vmem:[%s277 + $0x4] sm:$0xff]
        %v1460 = vld [vmem:[%s277 + $0xc] sm:$0xf]
        %v1463 = vcombine.high %v1459, %v1459
        %1464 = vrot.lane.b32.xlu0 %v1459, 110
        %v1465 = vpop.permute.xlu0 %1464
        %1466 = vrot.lane.b32.xlu0 %v1463, 110
        %v1467 = vpop.permute.xlu0 %1466
        %1468 = vrot.lane.b32.xlu0 %v1460, 110
        %v1469 = vpop.permute.xlu0 %1468
        %vm1470 = vcmask 900096
        %v1471 = vsel %vm1470, %v1465, %v1467
        %v1472 = vsel %vm1470, %v1467, %v1469
        %v1474 = vsel %vm299, %v1458, 0
        %v1476 = vsel %vm303, %v1471, 0
        %v1478 = vsel %vm303, %v1472, 0
        %v1480 = vsel %vm303, %v1469, 0
        %1482 = vmatprep.subr.mxu0 0.0
        %1483 = vmatpush1.msra.mxu0 0.0
        %1484 = vmatprep.subr.mxu0 0.0
        %1485 = vmatpush1.msra.mxu0 0.0
        %1486 = vmatprep.subr.mxu0 0.0
        %1487 = vmatpush1.msra.mxu0 0.0
        %1488 = vmatprep.subr.mxu0 0.0
        %1489 = vmatpush1.msra.mxu0 0.0
        %1490 = vmatprep.subr.mxu0 0.0
        %1491 = vmatpush1.msra.mxu0 0.0
        %1492 = vmatprep.subr.mxu0 0.0
        %1493 = vmatpush1.msra.mxu0 0.0
        %1494 = vmatprep.subr.mxu0 0.0
        %1495 = vmatpush1.msra.mxu0 0.0
        %1496 = vmatprep.subr.mxu0 0.0
        %1497 = vmatpush1.msra.mxu0 0.0
        %1498 = vmatprep.subr.mxu0 0.0
        %1499 = vmatpush1.msra.mxu0 0.0
        %1500 = vmatprep.subr.mxu0 0.0
        %1501 = vmatpush1.msra.mxu0 0.0
        %1502 = vmatprep.subr.mxu0 0.0
        %1503 = vmatpush1.msra.mxu0 0.0
        %1504 = vmatprep.subr.mxu0 0.0
        %1505 = vmatpush1.msra.mxu0 0.0
        %1506 = vmatprep.subr.mxu0 0.0
        %1507 = vmatpush1.msra.mxu0 0.0
        %1508 = vmatprep.subr.mxu0 0.0
        %1509 = vmatpush1.msra.mxu0 0.0
        %1510 = vmatprep.subr.mxu0 0.0
        %1511 = vmatpush1.msra.mxu0 0.0
        %1512 = vmatprep.subr.mxu0 %v1478
        %1513 = vmatpush1.msra.mxu0 %v1476
        %1514 = vmatprep.subr.mxu0 0.0
        %1515 = vmatpush2.msra.mxu0 0.0
        %1516 = vmatprep.subr.mxu0 0.0
        %1517 = vmatpush2.msra.mxu0 0.0
        %1518 = vmatprep.subr.mxu0 0.0
        %1519 = vmatpush2.msra.mxu0 0.0
        %1520 = vmatprep.subr.mxu0 0.0
        %1521 = vmatpush2.msra.mxu0 0.0
        %1522 = vmatprep.subr.mxu0 0.0
        %1523 = vmatpush2.msra.mxu0 0.0
        %1524 = vmatprep.subr.mxu0 0.0
        %1525 = vmatpush2.msra.mxu0 0.0
        %1526 = vmatprep.subr.mxu0 0.0
        %1527 = vmatpush2.msra.mxu0 0.0
        %1528 = vmatprep.subr.mxu0 0.0
        %1529 = vmatpush2.msra.mxu0 0.0
        %1530 = vmatprep.subr.mxu0 0.0
        %1531 = vmatpush2.msra.mxu0 0.0
        %1532 = vmatprep.subr.mxu0 0.0
        %1533 = vmatpush2.msra.mxu0 0.0
        %1534 = vmatprep.subr.mxu0 0.0
        %1535 = vmatpush2.msra.mxu0 0.0
        %1536 = vmatprep.subr.mxu0 0.0
        %1537 = vmatpush2.msra.mxu0 0.0
        %1538 = vmatprep.subr.mxu0 0.0
        %1539 = vmatpush2.msra.mxu0 0.0
        %1540 = vmatprep.subr.mxu0 0.0
        %1541 = vmatpush2.msra.mxu0 0.0
        %1542 = vmatprep.subr.mxu0 0.0
        %1543 = vmatpush2.msra.mxu0 0.0
        %1544 = vmatprep.subr.mxu0 0.0
        %1545 = vmatpush2.msra.mxu0 0.0
        %1546 = vmatprep.mubr.f32.mxu0 0.0
        %1547 = vmatmul.mubr.f32.gmra.mxu0 %v1474
        %v1548 = vpop.f32.mrf.mxu0
        %v1549 = vadd.f32 0.0, %v1548
        %v1550 = vpop.f32.mrf.mxu0
        %v1551 = vadd.f32 0.0, %v1550
        %1552 = vdwg.mxu0
        %1553 = vmatprep.subr.mxu0 0.0
        %1554 = vmatpush1.msra.mxu0 0.0
        %1555 = vmatprep.subr.mxu0 0.0
        %1556 = vmatpush1.msra.mxu0 0.0
        %1557 = vmatprep.subr.mxu0 0.0
        %1558 = vmatpush1.msra.mxu0 0.0
        %1559 = vmatprep.subr.mxu0 0.0
        %1560 = vmatpush1.msra.mxu0 0.0
        %1561 = vmatprep.subr.mxu0 0.0
        %1562 = vmatpush1.msra.mxu0 0.0
        %1563 = vmatprep.subr.mxu0 0.0
        %1564 = vmatpush1.msra.mxu0 0.0
        %1565 = vmatprep.subr.mxu0 0.0
        %1566 = vmatpush1.msra.mxu0 0.0
        %1567 = vmatprep.subr.mxu0 0.0
        %1568 = vmatpush1.msra.mxu0 0.0
        %1569 = vmatprep.subr.mxu0 0.0
        %1570 = vmatpush1.msra.mxu0 0.0
        %1571 = vmatprep.subr.mxu0 0.0
        %1572 = vmatpush1.msra.mxu0 0.0
        %1573 = vmatprep.subr.mxu0 0.0
        %1574 = vmatpush1.msra.mxu0 0.0
        %1575 = vmatprep.subr.mxu0 0.0
        %1576 = vmatpush1.msra.mxu0 0.0
        %1577 = vmatprep.subr.mxu0 0.0
        %1578 = vmatpush1.msra.mxu0 0.0
        %1579 = vmatprep.subr.mxu0 0.0
        %1580 = vmatpush1.msra.mxu0 0.0
        %1581 = vmatprep.subr.mxu0 0.0
        %1582 = vmatpush1.msra.mxu0 0.0
        %1583 = vmatprep.subr.mxu0 0.0
        %1584 = vmatpush1.msra.mxu0 %v1480
        %1585 = vmatprep.subr.mxu0 0.0
        %1586 = vmatpush2.msra.mxu0 0.0
        %1587 = vmatprep.subr.mxu0 0.0
        %1588 = vmatpush2.msra.mxu0 0.0
        %1589 = vmatprep.subr.mxu0 0.0
        %1590 = vmatpush2.msra.mxu0 0.0
        %1591 = vmatprep.subr.mxu0 0.0
        %1592 = vmatpush2.msra.mxu0 0.0
        %1593 = vmatprep.subr.mxu0 0.0
        %1594 = vmatpush2.msra.mxu0 0.0
        %1595 = vmatprep.subr.mxu0 0.0
        %1596 = vmatpush2.msra.mxu0 0.0
        %1597 = vmatprep.subr.mxu0 0.0
        %1598 = vmatpush2.msra.mxu0 0.0
        %1599 = vmatprep.subr.mxu0 0.0
        %1600 = vmatpush2.msra.mxu0 0.0
        %1601 = vmatprep.subr.mxu0 0.0
        %1602 = vmatpush2.msra.mxu0 0.0
        %1603 = vmatprep.subr.mxu0 0.0
        %1604 = vmatpush2.msra.mxu0 0.0
        %1605 = vmatprep.subr.mxu0 0.0
        %1606 = vmatpush2.msra.mxu0 0.0
        %1607 = vmatprep.subr.mxu0 0.0
        %1608 = vmatpush2.msra.mxu0 0.0
        %1609 = vmatprep.subr.mxu0 0.0
        %1610 = vmatpush2.msra.mxu0 0.0
        %1611 = vmatprep.subr.mxu0 0.0
        %1612 = vmatpush2.msra.mxu0 0.0
        %1613 = vmatprep.subr.mxu0 0.0
        %1614 = vmatpush2.msra.mxu0 0.0
        %1615 = vmatprep.subr.mxu0 0.0
        %1616 = vmatpush2.msra.mxu0 0.0
        %1617 = vmatprep.mubr.f32.mxu0 0.0
        %1618 = vmatmul.mubr.f32.gmra.mxu0 %v1474
        %v1619 = vpop.f32.mrf.mxu0
        %v1620 = vadd.f32 0.0, %v1619
        %v1621 = vpop.f32.mrf.mxu0
        %1622 = vdwg.mxu0
        %v1623 = vadd.f32 %v1454, %v1549
        %v1624 = vadd.f32 %v1455, %v1551
        %v1625 = vadd.f32 %v1456, %v1620
        %s1626 = scalar_lea.vmem %s1, 32
        %v1627 = vld [vmem:[%s1626] sm:$0xf]
        %v1628 = vld [vmem:[%s277 + $0x4] sm:$0xff]
        %v1629 = vld [vmem:[%s277 + $0xc] sm:$0xf]
        %v1632 = vcombine.high %v1628, %v1628
        %1633 = vrot.lane.b32.xlu0 %v1628, 109
        %v1634 = vpop.permute.xlu0 %1633
        %1635 = vrot.lane.b32.xlu0 %v1632, 109
        %v1636 = vpop.permute.xlu0 %1635
        %1637 = vrot.lane.b32.xlu0 %v1629, 109
        %v1638 = vpop.permute.xlu0 %1637
        %vm1639 = vcmask 891904
        %v1640 = vsel %vm1639, %v1634, %v1636
        %v1641 = vsel %vm1639, %v1636, %v1638
        %v1643 = vsel %vm299, %v1627, 0
        %v1645 = vsel %vm303, %v1640, 0
        %v1647 = vsel %vm303, %v1641, 0
        %v1649 = vsel %vm303, %v1638, 0
        %1651 = vmatprep.subr.mxu0 0.0
        %1652 = vmatpush1.msra.mxu0 0.0
        %1653 = vmatprep.subr.mxu0 0.0
        %1654 = vmatpush1.msra.mxu0 0.0
        %1655 = vmatprep.subr.mxu0 0.0
        %1656 = vmatpush1.msra.mxu0 0.0
        %1657 = vmatprep.subr.mxu0 0.0
        %1658 = vmatpush1.msra.mxu0 0.0
        %1659 = vmatprep.subr.mxu0 0.0
        %1660 = vmatpush1.msra.mxu0 0.0
        %1661 = vmatprep.subr.mxu0 0.0
        %1662 = vmatpush1.msra.mxu0 0.0
        %1663 = vmatprep.subr.mxu0 0.0
        %1664 = vmatpush1.msra.mxu0 0.0
        %1665 = vmatprep.subr.mxu0 0.0
        %1666 = vmatpush1.msra.mxu0 0.0
        %1667 = vmatprep.subr.mxu0 0.0
        %1668 = vmatpush1.msra.mxu0 0.0
        %1669 = vmatprep.subr.mxu0 0.0
        %1670 = vmatpush1.msra.mxu0 0.0
        %1671 = vmatprep.subr.mxu0 0.0
        %1672 = vmatpush1.msra.mxu0 0.0
        %1673 = vmatprep.subr.mxu0 0.0
        %1674 = vmatpush1.msra.mxu0 0.0
        %1675 = vmatprep.subr.mxu0 0.0
        %1676 = vmatpush1.msra.mxu0 0.0
        %1677 = vmatprep.subr.mxu0 0.0
        %1678 = vmatpush1.msra.mxu0 0.0
        %1679 = vmatprep.subr.mxu0 0.0
        %1680 = vmatpush1.msra.mxu0 0.0
        %1681 = vmatprep.subr.mxu0 %v1647
        %1682 = vmatpush1.msra.mxu0 %v1645
        %1683 = vmatprep.subr.mxu0 0.0
        %1684 = vmatpush2.msra.mxu0 0.0
        %1685 = vmatprep.subr.mxu0 0.0
        %1686 = vmatpush2.msra.mxu0 0.0
        %1687 = vmatprep.subr.mxu0 0.0
        %1688 = vmatpush2.msra.mxu0 0.0
        %1689 = vmatprep.subr.mxu0 0.0
        %1690 = vmatpush2.msra.mxu0 0.0
        %1691 = vmatprep.subr.mxu0 0.0
        %1692 = vmatpush2.msra.mxu0 0.0
        %1693 = vmatprep.subr.mxu0 0.0
        %1694 = vmatpush2.msra.mxu0 0.0
        %1695 = vmatprep.subr.mxu0 0.0
        %1696 = vmatpush2.msra.mxu0 0.0
        %1697 = vmatprep.subr.mxu0 0.0
        %1698 = vmatpush2.msra.mxu0 0.0
        %1699 = vmatprep.subr.mxu0 0.0
        %1700 = vmatpush2.msra.mxu0 0.0
        %1701 = vmatprep.subr.mxu0 0.0
        %1702 = vmatpush2.msra.mxu0 0.0
        %1703 = vmatprep.subr.mxu0 0.0
        %1704 = vmatpush2.msra.mxu0 0.0
        %1705 = vmatprep.subr.mxu0 0.0
        %1706 = vmatpush2.msra.mxu0 0.0
        %1707 = vmatprep.subr.mxu0 0.0
        %1708 = vmatpush2.msra.mxu0 0.0
        %1709 = vmatprep.subr.mxu0 0.0
        %1710 = vmatpush2.msra.mxu0 0.0
        %1711 = vmatprep.subr.mxu0 0.0
        %1712 = vmatpush2.msra.mxu0 0.0
        %1713 = vmatprep.subr.mxu0 0.0
        %1714 = vmatpush2.msra.mxu0 0.0
        %1715 = vmatprep.mubr.f32.mxu0 0.0
        %1716 = vmatmul.mubr.f32.gmra.mxu0 %v1643
        %v1717 = vpop.f32.mrf.mxu0
        %v1718 = vadd.f32 0.0, %v1717
        %v1719 = vpop.f32.mrf.mxu0
        %v1720 = vadd.f32 0.0, %v1719
        %1721 = vdwg.mxu0
        %1722 = vmatprep.subr.mxu0 0.0
        %1723 = vmatpush1.msra.mxu0 0.0
        %1724 = vmatprep.subr.mxu0 0.0
        %1725 = vmatpush1.msra.mxu0 0.0
        %1726 = vmatprep.subr.mxu0 0.0
        %1727 = vmatpush1.msra.mxu0 0.0
        %1728 = vmatprep.subr.mxu0 0.0
        %1729 = vmatpush1.msra.mxu0 0.0
        %1730 = vmatprep.subr.mxu0 0.0
        %1731 = vmatpush1.msra.mxu0 0.0
        %1732 = vmatprep.subr.mxu0 0.0
        %1733 = vmatpush1.msra.mxu0 0.0
        %1734 = vmatprep.subr.mxu0 0.0
        %1735 = vmatpush1.msra.mxu0 0.0
        %1736 = vmatprep.subr.mxu0 0.0
        %1737 = vmatpush1.msra.mxu0 0.0
        %1738 = vmatprep.subr.mxu0 0.0
        %1739 = vmatpush1.msra.mxu0 0.0
        %1740 = vmatprep.subr.mxu0 0.0
        %1741 = vmatpush1.msra.mxu0 0.0
        %1742 = vmatprep.subr.mxu0 0.0
        %1743 = vmatpush1.msra.mxu0 0.0
        %1744 = vmatprep.subr.mxu0 0.0
        %1745 = vmatpush1.msra.mxu0 0.0
        %1746 = vmatprep.subr.mxu0 0.0
        %1747 = vmatpush1.msra.mxu0 0.0
        %1748 = vmatprep.subr.mxu0 0.0
        %1749 = vmatpush1.msra.mxu0 0.0
        %1750 = vmatprep.subr.mxu0 0.0
        %1751 = vmatpush1.msra.mxu0 0.0
        %1752 = vmatprep.subr.mxu0 0.0
        %1753 = vmatpush1.msra.mxu0 %v1649
        %1754 = vmatprep.subr.mxu0 0.0
        %1755 = vmatpush2.msra.mxu0 0.0
        %1756 = vmatprep.subr.mxu0 0.0
        %1757 = vmatpush2.msra.mxu0 0.0
        %1758 = vmatprep.subr.mxu0 0.0
        %1759 = vmatpush2.msra.mxu0 0.0
        %1760 = vmatprep.subr.mxu0 0.0
        %1761 = vmatpush2.msra.mxu0 0.0
        %1762 = vmatprep.subr.mxu0 0.0
        %1763 = vmatpush2.msra.mxu0 0.0
        %1764 = vmatprep.subr.mxu0 0.0
        %1765 = vmatpush2.msra.mxu0 0.0
        %1766 = vmatprep.subr.mxu0 0.0
        %1767 = vmatpush2.msra.mxu0 0.0
        %1768 = vmatprep.subr.mxu0 0.0
        %1769 = vmatpush2.msra.mxu0 0.0
        %1770 = vmatprep.subr.mxu0 0.0
        %1771 = vmatpush2.msra.mxu0 0.0
        %1772 = vmatprep.subr.mxu0 0.0
        %1773 = vmatpush2.msra.mxu0 0.0
        %1774 = vmatprep.subr.mxu0 0.0
        %1775 = vmatpush2.msra.mxu0 0.0
        %1776 = vmatprep.subr.mxu0 0.0
        %1777 = vmatpush2.msra.mxu0 0.0
        %1778 = vmatprep.subr.mxu0 0.0
        %1779 = vmatpush2.msra.mxu0 0.0
        %1780 = vmatprep.subr.mxu0 0.0
        %1781 = vmatpush2.msra.mxu0 0.0
        %1782 = vmatprep.subr.mxu0 0.0
        %1783 = vmatpush2.msra.mxu0 0.0
        %1784 = vmatprep.subr.mxu0 0.0
        %1785 = vmatpush2.msra.mxu0 0.0
        %1786 = vmatprep.mubr.f32.mxu0 0.0
        %1787 = vmatmul.mubr.f32.gmra.mxu0 %v1643
        %v1788 = vpop.f32.mrf.mxu0
        %v1789 = vadd.f32 0.0, %v1788
        %v1790 = vpop.f32.mrf.mxu0
        %1791 = vdwg.mxu0
        %v1792 = vadd.f32 %v1623, %v1718
        %v1793 = vadd.f32 %v1624, %v1720
        %v1794 = vadd.f32 %v1625, %v1789
        %v1795 = vld [vmem:[%s2] sm:$0xf]
        %1797 = vset.pattern.permute.xlu0 0
        %1798 = vperm.xlu0 %1797, %v1795
        %v1799 = vpop.permute.xlu0 %1798
        %v1801 = vadd.f32 %v1792, %v1799
        %v1802 = vadd.f32 %v1793, %v1799
        %v1803 = vadd.f32 %v1794, %v1799
        %s1804 = sld [smem:[#allocation3]]
        %vm1805 = vcmp.gt.f32.partialorder %v1801, 0.0
        %vm1806 = vcmp.gt.f32.partialorder %v1802, 0.0
        %vm1807 = vcmp.gt.f32.partialorder %v1803, 0.0
        %v1808 = vstv %s1804
        %v1809 = vmul.f32 %v1808, %v1801
        %v1810 = vmul.f32 %v1808, %v1802
        %v1811 = vmul.f32 %v1808, %v1803
        %v1812 = vsel %vm1805, %v1801, %v1809
        %v1813 = vsel %vm1806, %v1802, %v1810
        %v1814 = vsel %vm1807, %v1803, %v1811
        %v1815 = vld [vmem:[%s6] sm:$0x7]
        %v1817 = vlaneseq
        %v1818 = vshrl.u32 %v1817, 7
        %v1819 = vsub.s32 0, %v1818
        %v1820 = vrot.slane %v1815, %v1819
        %v1821 = vlaneseq
        %v1822 = vshrl.u32 %v1821, 7
        %v1823 = vsub.s32 1, %v1822
        %v1824 = vrot.slane %v1815, %v1823
        %v1825 = vlaneseq
        %v1826 = vshrl.u32 %v1825, 7
        %v1827 = vsub.s32 2, %v1826
        %v1828 = vrot.slane %v1815, %v1827
        %v1832 = vmul.f32 %v1812, %v1820
        %v1833 = vmul.f32 %v1813, %v1824
        %v1834 = vmul.f32 %v1814, %v1828
        %1835 = vst [vmem:[#allocation2] sm:$0xff] 0.0
        %1836 = vst [vmem:[#allocation2 + $0x8] sm:$0xff] 0.0
        %vm1837 = vcmask 551936
        %1838 = vst.msk [vmem:[#allocation2 + $0x10] sm:$0xf] %vm1837, 0.0
        %v1841 = vcombine.low %v1832, %v1833
        %1843 = vst [vmem:[#allocation2 + $0x4] sm:$0xff] %v1841
        %1844 = vst.msk [vmem:[#allocation2 + $0xc] sm:$0xf] %vm1837, %v1834
        %v1845 = vld [vmem:[%s4] sm:$0xf]
        %v1846 = vld [vmem:[#allocation2] sm:$0xff]
        %v1847 = vld [vmem:[#allocation2 + $0x8] sm:$0xff]
        %s1848 = scalar_lea.vmem %s4, 4
        %v1849 = vld [vmem:[%s1848] sm:$0xf]
        %v1852 = vcombine.high %v1846, %v1846
        %v1853 = vcombine.high %v1847, %v1847
        %1854 = vrot.lane.b32.xlu0 %v1846, 18
        %v1855 = vpop.permute.xlu0 %1854
        %1856 = vrot.lane.b32.xlu0 %v1852, 18
        %v1857 = vpop.permute.xlu0 %1856
        %1858 = vrot.lane.b32.xlu0 %v1847, 18
        %v1859 = vpop.permute.xlu0 %1858
        %1860 = vrot.lane.b32.xlu0 %v1853, 18
        %v1861 = vpop.permute.xlu0 %1860
        %v1862 = vsel %vm295, %v1855, %v1857
        %v1863 = vsel %vm295, %v1857, %v1859
        %v1864 = vsel %vm295, %v1859, %v1861
        %v1866 = vsel %vm299, %v1849, 0
        %v1868 = vsel %vm303, %v1862, 0
        %v1870 = vsel %vm303, %v1863, 0
        %v1872 = vsel %vm303, %v1864, 0
        %1874 = vmatprep.subr.mxu0 0.0
        %1875 = vmatpush1.msra.mxu0 0.0
        %1876 = vmatprep.subr.mxu0 0.0
        %1877 = vmatpush1.msra.mxu0 0.0
        %1878 = vmatprep.subr.mxu0 0.0
        %1879 = vmatpush1.msra.mxu0 0.0
        %1880 = vmatprep.subr.mxu0 0.0
        %1881 = vmatpush1.msra.mxu0 0.0
        %1882 = vmatprep.subr.mxu0 0.0
        %1883 = vmatpush1.msra.mxu0 0.0
        %1884 = vmatprep.subr.mxu0 0.0
        %1885 = vmatpush1.msra.mxu0 0.0
        %1886 = vmatprep.subr.mxu0 0.0
        %1887 = vmatpush1.msra.mxu0 0.0
        %1888 = vmatprep.subr.mxu0 0.0
        %1889 = vmatpush1.msra.mxu0 0.0
        %1890 = vmatprep.subr.mxu0 0.0
        %1891 = vmatpush1.msra.mxu0 0.0
        %1892 = vmatprep.subr.mxu0 0.0
        %1893 = vmatpush1.msra.mxu0 0.0
        %1894 = vmatprep.subr.mxu0 0.0
        %1895 = vmatpush1.msra.mxu0 0.0
        %1896 = vmatprep.subr.mxu0 0.0
        %1897 = vmatpush1.msra.mxu0 0.0
        %1898 = vmatprep.subr.mxu0 0.0
        %1899 = vmatpush1.msra.mxu0 0.0
        %1900 = vmatprep.subr.mxu0 0.0
        %1901 = vmatpush1.msra.mxu0 0.0
        %1902 = vmatprep.subr.mxu0 0.0
        %1903 = vmatpush1.msra.mxu0 0.0
        %1904 = vmatprep.subr.mxu0 %v1870
        %1905 = vmatpush1.msra.mxu0 %v1868
        %1906 = vmatprep.subr.mxu0 0.0
        %1907 = vmatpush2.msra.mxu0 0.0
        %1908 = vmatprep.subr.mxu0 0.0
        %1909 = vmatpush2.msra.mxu0 0.0
        %1910 = vmatprep.subr.mxu0 0.0
        %1911 = vmatpush2.msra.mxu0 0.0
        %1912 = vmatprep.subr.mxu0 0.0
        %1913 = vmatpush2.msra.mxu0 0.0
        %1914 = vmatprep.subr.mxu0 0.0
        %1915 = vmatpush2.msra.mxu0 0.0
        %1916 = vmatprep.subr.mxu0 0.0
        %1917 = vmatpush2.msra.mxu0 0.0
        %1918 = vmatprep.subr.mxu0 0.0
        %1919 = vmatpush2.msra.mxu0 0.0
        %1920 = vmatprep.subr.mxu0 0.0
        %1921 = vmatpush2.msra.mxu0 0.0
        %1922 = vmatprep.subr.mxu0 0.0
        %1923 = vmatpush2.msra.mxu0 0.0
        %1924 = vmatprep.subr.mxu0 0.0
        %1925 = vmatpush2.msra.mxu0 0.0
        %1926 = vmatprep.subr.mxu0 0.0
        %1927 = vmatpush2.msra.mxu0 0.0
        %1928 = vmatprep.subr.mxu0 0.0
        %1929 = vmatpush2.msra.mxu0 0.0
        %1930 = vmatprep.subr.mxu0 0.0
        %1931 = vmatpush2.msra.mxu0 0.0
        %1932 = vmatprep.subr.mxu0 0.0
        %1933 = vmatpush2.msra.mxu0 0.0
        %1934 = vmatprep.subr.mxu0 0.0
        %1935 = vmatpush2.msra.mxu0 0.0
        %1936 = vmatprep.subr.mxu0 0.0
        %1937 = vmatpush2.msra.mxu0 0.0
        %1938 = vmatprep.mubr.f32.mxu0 0.0
        %1939 = vmatmul.mubr.f32.gmra.mxu0 %v1866
        %v1940 = vpop.f32.mrf.mxu0
        %v1941 = vadd.f32 0.0, %v1940
        %v1942 = vpop.f32.mrf.mxu0
        %v1943 = vadd.f32 0.0, %v1942
        %1944 = vdwg.mxu0
        %1945 = vmatprep.subr.mxu0 0.0
        %1946 = vmatpush1.msra.mxu0 0.0
        %1947 = vmatprep.subr.mxu0 0.0
        %1948 = vmatpush1.msra.mxu0 0.0
        %1949 = vmatprep.subr.mxu0 0.0
        %1950 = vmatpush1.msra.mxu0 0.0
        %1951 = vmatprep.subr.mxu0 0.0
        %1952 = vmatpush1.msra.mxu0 0.0
        %1953 = vmatprep.subr.mxu0 0.0
        %1954 = vmatpush1.msra.mxu0 0.0
        %1955 = vmatprep.subr.mxu0 0.0
        %1956 = vmatpush1.msra.mxu0 0.0
        %1957 = vmatprep.subr.mxu0 0.0
        %1958 = vmatpush1.msra.mxu0 0.0
        %1959 = vmatprep.subr.mxu0 0.0
        %1960 = vmatpush1.msra.mxu0 0.0
        %1961 = vmatprep.subr.mxu0 0.0
        %1962 = vmatpush1.msra.mxu0 0.0
        %1963 = vmatprep.subr.mxu0 0.0
        %1964 = vmatpush1.msra.mxu0 0.0
        %1965 = vmatprep.subr.mxu0 0.0
        %1966 = vmatpush1.msra.mxu0 0.0
        %1967 = vmatprep.subr.mxu0 0.0
        %1968 = vmatpush1.msra.mxu0 0.0
        %1969 = vmatprep.subr.mxu0 0.0
        %1970 = vmatpush1.msra.mxu0 0.0
        %1971 = vmatprep.subr.mxu0 0.0
        %1972 = vmatpush1.msra.mxu0 0.0
        %1973 = vmatprep.subr.mxu0 0.0
        %1974 = vmatpush1.msra.mxu0 0.0
        %1975 = vmatprep.subr.mxu0 0.0
        %1976 = vmatpush1.msra.mxu0 %v1872
        %1977 = vmatprep.subr.mxu0 0.0
        %1978 = vmatpush2.msra.mxu0 0.0
        %1979 = vmatprep.subr.mxu0 0.0
        %1980 = vmatpush2.msra.mxu0 0.0
        %1981 = vmatprep.subr.mxu0 0.0
        %1982 = vmatpush2.msra.mxu0 0.0
        %1983 = vmatprep.subr.mxu0 0.0
        %1984 = vmatpush2.msra.mxu0 0.0
        %1985 = vmatprep.subr.mxu0 0.0
        %1986 = vmatpush2.msra.mxu0 0.0
        %1987 = vmatprep.subr.mxu0 0.0
        %1988 = vmatpush2.msra.mxu0 0.0
        %1989 = vmatprep.subr.mxu0 0.0
        %1990 = vmatpush2.msra.mxu0 0.0
        %1991 = vmatprep.subr.mxu0 0.0
        %1992 = vmatpush2.msra.mxu0 0.0
        %1993 = vmatprep.subr.mxu0 0.0
        %1994 = vmatpush2.msra.mxu0 0.0
        %1995 = vmatprep.subr.mxu0 0.0
        %1996 = vmatpush2.msra.mxu0 0.0
        %1997 = vmatprep.subr.mxu0 0.0
        %1998 = vmatpush2.msra.mxu0 0.0
        %1999 = vmatprep.subr.mxu0 0.0
        %2000 = vmatpush2.msra.mxu0 0.0
        %2001 = vmatprep.subr.mxu0 0.0
        %2002 = vmatpush2.msra.mxu0 0.0
        %2003 = vmatprep.subr.mxu0 0.0
        %2004 = vmatpush2.msra.mxu0 0.0
        %2005 = vmatprep.subr.mxu0 0.0
        %2006 = vmatpush2.msra.mxu0 0.0
        %2007 = vmatprep.subr.mxu0 0.0
        %2008 = vmatpush2.msra.mxu0 0.0
        %2009 = vmatprep.mubr.f32.mxu0 0.0
        %2010 = vmatmul.mubr.f32.gmra.mxu0 %v1866
        %v2011 = vpop.f32.mrf.mxu0
        %v2012 = vadd.f32 0.0, %v2011
        %v2013 = vpop.f32.mrf.mxu0
        %2014 = vdwg.mxu0
        %2015 = vrot.lane.b32.xlu0 %v1846, 19
        %v2016 = vpop.permute.xlu0 %2015
        %2017 = vrot.lane.b32.xlu0 %v1852, 19
        %v2018 = vpop.permute.xlu0 %2017
        %2019 = vrot.lane.b32.xlu0 %v1847, 19
        %v2020 = vpop.permute.xlu0 %2019
        %2021 = vrot.lane.b32.xlu0 %v1853, 19
        %v2022 = vpop.permute.xlu0 %2021
        %v2023 = vsel %vm459, %v2016, %v2018
        %v2024 = vsel %vm459, %v2018, %v2020
        %v2025 = vsel %vm459, %v2020, %v2022
        %v2027 = vsel %vm299, %v1845, 0
        %v2029 = vsel %vm303, %v2023, 0
        %v2031 = vsel %vm303, %v2024, 0
        %v2033 = vsel %vm303, %v2025, 0
        %2035 = vmatprep.subr.mxu0 0.0
        %2036 = vmatpush1.msra.mxu0 0.0
        %2037 = vmatprep.subr.mxu0 0.0
        %2038 = vmatpush1.msra.mxu0 0.0
        %2039 = vmatprep.subr.mxu0 0.0
        %2040 = vmatpush1.msra.mxu0 0.0
        %2041 = vmatprep.subr.mxu0 0.0
        %2042 = vmatpush1.msra.mxu0 0.0
        %2043 = vmatprep.subr.mxu0 0.0
        %2044 = vmatpush1.msra.mxu0 0.0
        %2045 = vmatprep.subr.mxu0 0.0
        %2046 = vmatpush1.msra.mxu0 0.0
        %2047 = vmatprep.subr.mxu0 0.0
        %2048 = vmatpush1.msra.mxu0 0.0
        %2049 = vmatprep.subr.mxu0 0.0
        %2050 = vmatpush1.msra.mxu0 0.0
        %2051 = vmatprep.subr.mxu0 0.0
        %2052 = vmatpush1.msra.mxu0 0.0
        %2053 = vmatprep.subr.mxu0 0.0
        %2054 = vmatpush1.msra.mxu0 0.0
        %2055 = vmatprep.subr.mxu0 0.0
        %2056 = vmatpush1.msra.mxu0 0.0
        %2057 = vmatprep.subr.mxu0 0.0
        %2058 = vmatpush1.msra.mxu0 0.0
        %2059 = vmatprep.subr.mxu0 0.0
        %2060 = vmatpush1.msra.mxu0 0.0
        %2061 = vmatprep.subr.mxu0 0.0
        %2062 = vmatpush1.msra.mxu0 0.0
        %2063 = vmatprep.subr.mxu0 0.0
        %2064 = vmatpush1.msra.mxu0 0.0
        %2065 = vmatprep.subr.mxu0 %v2031
        %2066 = vmatpush1.msra.mxu0 %v2029
        %2067 = vmatprep.subr.mxu0 0.0
        %2068 = vmatpush2.msra.mxu0 0.0
        %2069 = vmatprep.subr.mxu0 0.0
        %2070 = vmatpush2.msra.mxu0 0.0
        %2071 = vmatprep.subr.mxu0 0.0
        %2072 = vmatpush2.msra.mxu0 0.0
        %2073 = vmatprep.subr.mxu0 0.0
        %2074 = vmatpush2.msra.mxu0 0.0
        %2075 = vmatprep.subr.mxu0 0.0
        %2076 = vmatpush2.msra.mxu0 0.0
        %2077 = vmatprep.subr.mxu0 0.0
        %2078 = vmatpush2.msra.mxu0 0.0
        %2079 = vmatprep.subr.mxu0 0.0
        %2080 = vmatpush2.msra.mxu0 0.0
        %2081 = vmatprep.subr.mxu0 0.0
        %2082 = vmatpush2.msra.mxu0 0.0
        %2083 = vmatprep.subr.mxu0 0.0
        %2084 = vmatpush2.msra.mxu0 0.0
        %2085 = vmatprep.subr.mxu0 0.0
        %2086 = vmatpush2.msra.mxu0 0.0
        %2087 = vmatprep.subr.mxu0 0.0
        %2088 = vmatpush2.msra.mxu0 0.0
        %2089 = vmatprep.subr.mxu0 0.0
        %2090 = vmatpush2.msra.mxu0 0.0
        %2091 = vmatprep.subr.mxu0 0.0
        %2092 = vmatpush2.msra.mxu0 0.0
        %2093 = vmatprep.subr.mxu0 0.0
        %2094 = vmatpush2.msra.mxu0 0.0
        %2095 = vmatprep.subr.mxu0 0.0
        %2096 = vmatpush2.msra.mxu0 0.0
        %2097 = vmatprep.subr.mxu0 0.0
        %2098 = vmatpush2.msra.mxu0 0.0
        %2099 = vmatprep.mubr.f32.mxu0 0.0
        %2100 = vmatmul.mubr.f32.gmra.mxu0 %v2027
        %v2101 = vpop.f32.mrf.mxu0
        %v2102 = vadd.f32 %v1941, %v2101
        %v2103 = vpop.f32.mrf.mxu0
        %v2104 = vadd.f32 %v1943, %v2103
        %2105 = vdwg.mxu0
        %2106 = vmatprep.subr.mxu0 0.0
        %2107 = vmatpush1.msra.mxu0 0.0
        %2108 = vmatprep.subr.mxu0 0.0
        %2109 = vmatpush1.msra.mxu0 0.0
        %2110 = vmatprep.subr.mxu0 0.0
        %2111 = vmatpush1.msra.mxu0 0.0
        %2112 = vmatprep.subr.mxu0 0.0
        %2113 = vmatpush1.msra.mxu0 0.0
        %2114 = vmatprep.subr.mxu0 0.0
        %2115 = vmatpush1.msra.mxu0 0.0
        %2116 = vmatprep.subr.mxu0 0.0
        %2117 = vmatpush1.msra.mxu0 0.0
        %2118 = vmatprep.subr.mxu0 0.0
        %2119 = vmatpush1.msra.mxu0 0.0
        %2120 = vmatprep.subr.mxu0 0.0
        %2121 = vmatpush1.msra.mxu0 0.0
        %2122 = vmatprep.subr.mxu0 0.0
        %2123 = vmatpush1.msra.mxu0 0.0
        %2124 = vmatprep.subr.mxu0 0.0
        %2125 = vmatpush1.msra.mxu0 0.0
        %2126 = vmatprep.subr.mxu0 0.0
        %2127 = vmatpush1.msra.mxu0 0.0
        %2128 = vmatprep.subr.mxu0 0.0
        %2129 = vmatpush1.msra.mxu0 0.0
        %2130 = vmatprep.subr.mxu0 0.0
        %2131 = vmatpush1.msra.mxu0 0.0
        %2132 = vmatprep.subr.mxu0 0.0
        %2133 = vmatpush1.msra.mxu0 0.0
        %2134 = vmatprep.subr.mxu0 0.0
        %2135 = vmatpush1.msra.mxu0 0.0
        %2136 = vmatprep.subr.mxu0 0.0
        %2137 = vmatpush1.msra.mxu0 %v2033
        %2138 = vmatprep.subr.mxu0 0.0
        %2139 = vmatpush2.msra.mxu0 0.0
        %2140 = vmatprep.subr.mxu0 0.0
        %2141 = vmatpush2.msra.mxu0 0.0
        %2142 = vmatprep.subr.mxu0 0.0
        %2143 = vmatpush2.msra.mxu0 0.0
        %2144 = vmatprep.subr.mxu0 0.0
        %2145 = vmatpush2.msra.mxu0 0.0
        %2146 = vmatprep.subr.mxu0 0.0
        %2147 = vmatpush2.msra.mxu0 0.0
        %2148 = vmatprep.subr.mxu0 0.0
        %2149 = vmatpush2.msra.mxu0 0.0
        %2150 = vmatprep.subr.mxu0 0.0
        %2151 = vmatpush2.msra.mxu0 0.0
        %2152 = vmatprep.subr.mxu0 0.0
        %2153 = vmatpush2.msra.mxu0 0.0
        %2154 = vmatprep.subr.mxu0 0.0
        %2155 = vmatpush2.msra.mxu0 0.0
        %2156 = vmatprep.subr.mxu0 0.0
        %2157 = vmatpush2.msra.mxu0 0.0
        %2158 = vmatprep.subr.mxu0 0.0
        %2159 = vmatpush2.msra.mxu0 0.0
        %2160 = vmatprep.subr.mxu0 0.0
        %2161 = vmatpush2.msra.mxu0 0.0
        %2162 = vmatprep.subr.mxu0 0.0
        %2163 = vmatpush2.msra.mxu0 0.0
        %2164 = vmatprep.subr.mxu0 0.0
        %2165 = vmatpush2.msra.mxu0 0.0
        %2166 = vmatprep.subr.mxu0 0.0
        %2167 = vmatpush2.msra.mxu0 0.0
        %2168 = vmatprep.subr.mxu0 0.0
        %2169 = vmatpush2.msra.mxu0 0.0
        %2170 = vmatprep.mubr.f32.mxu0 0.0
        %2171 = vmatmul.mubr.f32.gmra.mxu0 %v2027
        %v2172 = vpop.f32.mrf.mxu0
        %v2173 = vadd.f32 %v2012, %v2172
        %v2174 = vpop.f32.mrf.mxu0
        %2175 = vdwg.mxu0
        %s2176 = scalar_lea.vmem %s4, 8
        %v2177 = vld [vmem:[%s2176] sm:$0xf]
        %v2178 = vld [vmem:[#allocation2] sm:$0xff]
        %v2179 = vld [vmem:[#allocation2 + $0x8] sm:$0xff]
        %v2182 = vcombine.high %v2178, %v2178
        %v2183 = vcombine.high %v2179, %v2179
        %2184 = vrot.lane.b32.xlu0 %v2178, 17
        %v2185 = vpop.permute.xlu0 %2184
        %2186 = vrot.lane.b32.xlu0 %v2182, 17
        %v2187 = vpop.permute.xlu0 %2186
        %2188 = vrot.lane.b32.xlu0 %v2179, 17
        %v2189 = vpop.permute.xlu0 %2188
        %2190 = vrot.lane.b32.xlu0 %v2183, 17
        %v2191 = vpop.permute.xlu0 %2190
        %v2192 = vsel %vm629, %v2185, %v2187
        %v2193 = vsel %vm629, %v2187, %v2189
        %v2194 = vsel %vm629, %v2189, %v2191
        %v2196 = vsel %vm299, %v2177, 0
        %v2198 = vsel %vm303, %v2192, 0
        %v2200 = vsel %vm303, %v2193, 0
        %v2202 = vsel %vm303, %v2194, 0
        %2204 = vmatprep.subr.mxu0 0.0
        %2205 = vmatpush1.msra.mxu0 0.0
        %2206 = vmatprep.subr.mxu0 0.0
        %2207 = vmatpush1.msra.mxu0 0.0
        %2208 = vmatprep.subr.mxu0 0.0
        %2209 = vmatpush1.msra.mxu0 0.0
        %2210 = vmatprep.subr.mxu0 0.0
        %2211 = vmatpush1.msra.mxu0 0.0
        %2212 = vmatprep.subr.mxu0 0.0
        %2213 = vmatpush1.msra.mxu0 0.0
        %2214 = vmatprep.subr.mxu0 0.0
        %2215 = vmatpush1.msra.mxu0 0.0
        %2216 = vmatprep.subr.mxu0 0.0
        %2217 = vmatpush1.msra.mxu0 0.0
        %2218 = vmatprep.subr.mxu0 0.0
        %2219 = vmatpush1.msra.mxu0 0.0
        %2220 = vmatprep.subr.mxu0 0.0
        %2221 = vmatpush1.msra.mxu0 0.0
        %2222 = vmatprep.subr.mxu0 0.0
        %2223 = vmatpush1.msra.mxu0 0.0
        %2224 = vmatprep.subr.mxu0 0.0
        %2225 = vmatpush1.msra.mxu0 0.0
        %2226 = vmatprep.subr.mxu0 0.0
        %2227 = vmatpush1.msra.mxu0 0.0
        %2228 = vmatprep.subr.mxu0 0.0
        %2229 = vmatpush1.msra.mxu0 0.0
        %2230 = vmatprep.subr.mxu0 0.0
        %2231 = vmatpush1.msra.mxu0 0.0
        %2232 = vmatprep.subr.mxu0 0.0
        %2233 = vmatpush1.msra.mxu0 0.0
        %2234 = vmatprep.subr.mxu0 %v2200
        %2235 = vmatpush1.msra.mxu0 %v2198
        %2236 = vmatprep.subr.mxu0 0.0
        %2237 = vmatpush2.msra.mxu0 0.0
        %2238 = vmatprep.subr.mxu0 0.0
        %2239 = vmatpush2.msra.mxu0 0.0
        %2240 = vmatprep.subr.mxu0 0.0
        %2241 = vmatpush2.msra.mxu0 0.0
        %2242 = vmatprep.subr.mxu0 0.0
        %2243 = vmatpush2.msra.mxu0 0.0
        %2244 = vmatprep.subr.mxu0 0.0
        %2245 = vmatpush2.msra.mxu0 0.0
        %2246 = vmatprep.subr.mxu0 0.0
        %2247 = vmatpush2.msra.mxu0 0.0
        %2248 = vmatprep.subr.mxu0 0.0
        %2249 = vmatpush2.msra.mxu0 0.0
        %2250 = vmatprep.subr.mxu0 0.0
        %2251 = vmatpush2.msra.mxu0 0.0
        %2252 = vmatprep.subr.mxu0 0.0
        %2253 = vmatpush2.msra.mxu0 0.0
        %2254 = vmatprep.subr.mxu0 0.0
        %2255 = vmatpush2.msra.mxu0 0.0
        %2256 = vmatprep.subr.mxu0 0.0
        %2257 = vmatpush2.msra.mxu0 0.0
        %2258 = vmatprep.subr.mxu0 0.0
        %2259 = vmatpush2.msra.mxu0 0.0
        %2260 = vmatprep.subr.mxu0 0.0
        %2261 = vmatpush2.msra.mxu0 0.0
        %2262 = vmatprep.subr.mxu0 0.0
        %2263 = vmatpush2.msra.mxu0 0.0
        %2264 = vmatprep.subr.mxu0 0.0
        %2265 = vmatpush2.msra.mxu0 0.0
        %2266 = vmatprep.subr.mxu0 0.0
        %2267 = vmatpush2.msra.mxu0 0.0
        %2268 = vmatprep.mubr.f32.mxu0 0.0
        %2269 = vmatmul.mubr.f32.gmra.mxu0 %v2196
        %v2270 = vpop.f32.mrf.mxu0
        %v2271 = vadd.f32 0.0, %v2270
        %v2272 = vpop.f32.mrf.mxu0
        %v2273 = vadd.f32 0.0, %v2272
        %2274 = vdwg.mxu0
        %2275 = vmatprep.subr.mxu0 0.0
        %2276 = vmatpush1.msra.mxu0 0.0
        %2277 = vmatprep.subr.mxu0 0.0
        %2278 = vmatpush1.msra.mxu0 0.0
        %2279 = vmatprep.subr.mxu0 0.0
        %2280 = vmatpush1.msra.mxu0 0.0
        %2281 = vmatprep.subr.mxu0 0.0
        %2282 = vmatpush1.msra.mxu0 0.0
        %2283 = vmatprep.subr.mxu0 0.0
        %2284 = vmatpush1.msra.mxu0 0.0
        %2285 = vmatprep.subr.mxu0 0.0
        %2286 = vmatpush1.msra.mxu0 0.0
        %2287 = vmatprep.subr.mxu0 0.0
        %2288 = vmatpush1.msra.mxu0 0.0
        %2289 = vmatprep.subr.mxu0 0.0
        %2290 = vmatpush1.msra.mxu0 0.0
        %2291 = vmatprep.subr.mxu0 0.0
        %2292 = vmatpush1.msra.mxu0 0.0
        %2293 = vmatprep.subr.mxu0 0.0
        %2294 = vmatpush1.msra.mxu0 0.0
        %2295 = vmatprep.subr.mxu0 0.0
        %2296 = vmatpush1.msra.mxu0 0.0
        %2297 = vmatprep.subr.mxu0 0.0
        %2298 = vmatpush1.msra.mxu0 0.0
        %2299 = vmatprep.subr.mxu0 0.0
        %2300 = vmatpush1.msra.mxu0 0.0
        %2301 = vmatprep.subr.mxu0 0.0
        %2302 = vmatpush1.msra.mxu0 0.0
        %2303 = vmatprep.subr.mxu0 0.0
        %2304 = vmatpush1.msra.mxu0 0.0
        %2305 = vmatprep.subr.mxu0 0.0
        %2306 = vmatpush1.msra.mxu0 %v2202
        %2307 = vmatprep.subr.mxu0 0.0
        %2308 = vmatpush2.msra.mxu0 0.0
        %2309 = vmatprep.subr.mxu0 0.0
        %2310 = vmatpush2.msra.mxu0 0.0
        %2311 = vmatprep.subr.mxu0 0.0
        %2312 = vmatpush2.msra.mxu0 0.0
        %2313 = vmatprep.subr.mxu0 0.0
        %2314 = vmatpush2.msra.mxu0 0.0
        %2315 = vmatprep.subr.mxu0 0.0
        %2316 = vmatpush2.msra.mxu0 0.0
        %2317 = vmatprep.subr.mxu0 0.0
        %2318 = vmatpush2.msra.mxu0 0.0
        %2319 = vmatprep.subr.mxu0 0.0
        %2320 = vmatpush2.msra.mxu0 0.0
        %2321 = vmatprep.subr.mxu0 0.0
        %2322 = vmatpush2.msra.mxu0 0.0
        %2323 = vmatprep.subr.mxu0 0.0
        %2324 = vmatpush2.msra.mxu0 0.0
        %2325 = vmatprep.subr.mxu0 0.0
        %2326 = vmatpush2.msra.mxu0 0.0
        %2327 = vmatprep.subr.mxu0 0.0
        %2328 = vmatpush2.msra.mxu0 0.0
        %2329 = vmatprep.subr.mxu0 0.0
        %2330 = vmatpush2.msra.mxu0 0.0
        %2331 = vmatprep.subr.mxu0 0.0
        %2332 = vmatpush2.msra.mxu0 0.0
        %2333 = vmatprep.subr.mxu0 0.0
        %2334 = vmatpush2.msra.mxu0 0.0
        %2335 = vmatprep.subr.mxu0 0.0
        %2336 = vmatpush2.msra.mxu0 0.0
        %2337 = vmatprep.subr.mxu0 0.0
        %2338 = vmatpush2.msra.mxu0 0.0
        %2339 = vmatprep.mubr.f32.mxu0 0.0
        %2340 = vmatmul.mubr.f32.gmra.mxu0 %v2196
        %v2341 = vpop.f32.mrf.mxu0
        %v2342 = vadd.f32 0.0, %v2341
        %v2343 = vpop.f32.mrf.mxu0
        %2344 = vdwg.mxu0
        %v2345 = vadd.f32 %v2102, %v2271
        %v2346 = vadd.f32 %v2104, %v2273
        %v2347 = vadd.f32 %v2173, %v2342
        %s2348 = scalar_lea.vmem %s4, 12
        %v2349 = vld [vmem:[%s2348] sm:$0xf]
        %v2350 = vld [vmem:[#allocation2] sm:$0xff]
        %v2351 = vld [vmem:[#allocation2 + $0x8] sm:$0xff]
        %v2354 = vcombine.high %v2350, %v2350
        %v2355 = vcombine.high %v2351, %v2351
        %2356 = vrot.lane.b32.xlu0 %v2350, 1
        %v2357 = vpop.permute.xlu0 %2356
        %2358 = vrot.lane.b32.xlu0 %v2354, 1
        %v2359 = vpop.permute.xlu0 %2358
        %2360 = vrot.lane.b32.xlu0 %v2351, 1
        %v2361 = vpop.permute.xlu0 %2360
        %2362 = vrot.lane.b32.xlu0 %v2355, 1
        %v2363 = vpop.permute.xlu0 %2362
        %v2364 = vsel %vm802, %v2357, %v2359
        %v2365 = vsel %vm802, %v2359, %v2361
        %v2366 = vsel %vm802, %v2361, %v2363
        %v2368 = vsel %vm299, %v2349, 0
        %v2370 = vsel %vm303, %v2364, 0
        %v2372 = vsel %vm303, %v2365, 0
        %v2374 = vsel %vm303, %v2366, 0
        %2376 = vmatprep.subr.mxu0 0.0
        %2377 = vmatpush1.msra.mxu0 0.0
        %2378 = vmatprep.subr.mxu0 0.0
        %2379 = vmatpush1.msra.mxu0 0.0
        %2380 = vmatprep.subr.mxu0 0.0
        %2381 = vmatpush1.msra.mxu0 0.0
        %2382 = vmatprep.subr.mxu0 0.0
        %2383 = vmatpush1.msra.mxu0 0.0
        %2384 = vmatprep.subr.mxu0 0.0
        %2385 = vmatpush1.msra.mxu0 0.0
        %2386 = vmatprep.subr.mxu0 0.0
        %2387 = vmatpush1.msra.mxu0 0.0
        %2388 = vmatprep.subr.mxu0 0.0
        %2389 = vmatpush1.msra.mxu0 0.0
        %2390 = vmatprep.subr.mxu0 0.0
        %2391 = vmatpush1.msra.mxu0 0.0
        %2392 = vmatprep.subr.mxu0 0.0
        %2393 = vmatpush1.msra.mxu0 0.0
        %2394 = vmatprep.subr.mxu0 0.0
        %2395 = vmatpush1.msra.mxu0 0.0
        %2396 = vmatprep.subr.mxu0 0.0
        %2397 = vmatpush1.msra.mxu0 0.0
        %2398 = vmatprep.subr.mxu0 0.0
        %2399 = vmatpush1.msra.mxu0 0.0
        %2400 = vmatprep.subr.mxu0 0.0
        %2401 = vmatpush1.msra.mxu0 0.0
        %2402 = vmatprep.subr.mxu0 0.0
        %2403 = vmatpush1.msra.mxu0 0.0
        %2404 = vmatprep.subr.mxu0 0.0
        %2405 = vmatpush1.msra.mxu0 0.0
        %2406 = vmatprep.subr.mxu0 %v2372
        %2407 = vmatpush1.msra.mxu0 %v2370
        %2408 = vmatprep.subr.mxu0 0.0
        %2409 = vmatpush2.msra.mxu0 0.0
        %2410 = vmatprep.subr.mxu0 0.0
        %2411 = vmatpush2.msra.mxu0 0.0
        %2412 = vmatprep.subr.mxu0 0.0
        %2413 = vmatpush2.msra.mxu0 0.0
        %2414 = vmatprep.subr.mxu0 0.0
        %2415 = vmatpush2.msra.mxu0 0.0
        %2416 = vmatprep.subr.mxu0 0.0
        %2417 = vmatpush2.msra.mxu0 0.0
        %2418 = vmatprep.subr.mxu0 0.0
        %2419 = vmatpush2.msra.mxu0 0.0
        %2420 = vmatprep.subr.mxu0 0.0
        %2421 = vmatpush2.msra.mxu0 0.0
        %2422 = vmatprep.subr.mxu0 0.0
        %2423 = vmatpush2.msra.mxu0 0.0
        %2424 = vmatprep.subr.mxu0 0.0
        %2425 = vmatpush2.msra.mxu0 0.0
        %2426 = vmatprep.subr.mxu0 0.0
        %2427 = vmatpush2.msra.mxu0 0.0
        %2428 = vmatprep.subr.mxu0 0.0
        %2429 = vmatpush2.msra.mxu0 0.0
        %2430 = vmatprep.subr.mxu0 0.0
        %2431 = vmatpush2.msra.mxu0 0.0
        %2432 = vmatprep.subr.mxu0 0.0
        %2433 = vmatpush2.msra.mxu0 0.0
        %2434 = vmatprep.subr.mxu0 0.0
        %2435 = vmatpush2.msra.mxu0 0.0
        %2436 = vmatprep.subr.mxu0 0.0
        %2437 = vmatpush2.msra.mxu0 0.0
        %2438 = vmatprep.subr.mxu0 0.0
        %2439 = vmatpush2.msra.mxu0 0.0
        %2440 = vmatprep.mubr.f32.mxu0 0.0
        %2441 = vmatmul.mubr.f32.gmra.mxu0 %v2368
        %v2442 = vpop.f32.mrf.mxu0
        %v2443 = vadd.f32 0.0, %v2442
        %v2444 = vpop.f32.mrf.mxu0
        %v2445 = vadd.f32 0.0, %v2444
        %2446 = vdwg.mxu0
        %2447 = vmatprep.subr.mxu0 0.0
        %2448 = vmatpush1.msra.mxu0 0.0
        %2449 = vmatprep.subr.mxu0 0.0
        %2450 = vmatpush1.msra.mxu0 0.0
        %2451 = vmatprep.subr.mxu0 0.0
        %2452 = vmatpush1.msra.mxu0 0.0
        %2453 = vmatprep.subr.mxu0 0.0
        %2454 = vmatpush1.msra.mxu0 0.0
        %2455 = vmatprep.subr.mxu0 0.0
        %2456 = vmatpush1.msra.mxu0 0.0
        %2457 = vmatprep.subr.mxu0 0.0
        %2458 = vmatpush1.msra.mxu0 0.0
        %2459 = vmatprep.subr.mxu0 0.0
        %2460 = vmatpush1.msra.mxu0 0.0
        %2461 = vmatprep.subr.mxu0 0.0
        %2462 = vmatpush1.msra.mxu0 0.0
        %2463 = vmatprep.subr.mxu0 0.0
        %2464 = vmatpush1.msra.mxu0 0.0
        %2465 = vmatprep.subr.mxu0 0.0
        %2466 = vmatpush1.msra.mxu0 0.0
        %2467 = vmatprep.subr.mxu0 0.0
        %2468 = vmatpush1.msra.mxu0 0.0
        %2469 = vmatprep.subr.mxu0 0.0
        %2470 = vmatpush1.msra.mxu0 0.0
        %2471 = vmatprep.subr.mxu0 0.0
        %2472 = vmatpush1.msra.mxu0 0.0
        %2473 = vmatprep.subr.mxu0 0.0
        %2474 = vmatpush1.msra.mxu0 0.0
        %2475 = vmatprep.subr.mxu0 0.0
        %2476 = vmatpush1.msra.mxu0 0.0
        %2477 = vmatprep.subr.mxu0 0.0
        %2478 = vmatpush1.msra.mxu0 %v2374
        %2479 = vmatprep.subr.mxu0 0.0
        %2480 = vmatpush2.msra.mxu0 0.0
        %2481 = vmatprep.subr.mxu0 0.0
        %2482 = vmatpush2.msra.mxu0 0.0
        %2483 = vmatprep.subr.mxu0 0.0
        %2484 = vmatpush2.msra.mxu0 0.0
        %2485 = vmatprep.subr.mxu0 0.0
        %2486 = vmatpush2.msra.mxu0 0.0
        %2487 = vmatprep.subr.mxu0 0.0
        %2488 = vmatpush2.msra.mxu0 0.0
        %2489 = vmatprep.subr.mxu0 0.0
        %2490 = vmatpush2.msra.mxu0 0.0
        %2491 = vmatprep.subr.mxu0 0.0
        %2492 = vmatpush2.msra.mxu0 0.0
        %2493 = vmatprep.subr.mxu0 0.0
        %2494 = vmatpush2.msra.mxu0 0.0
        %2495 = vmatprep.subr.mxu0 0.0
        %2496 = vmatpush2.msra.mxu0 0.0
        %2497 = vmatprep.subr.mxu0 0.0
        %2498 = vmatpush2.msra.mxu0 0.0
        %2499 = vmatprep.subr.mxu0 0.0
        %2500 = vmatpush2.msra.mxu0 0.0
        %2501 = vmatprep.subr.mxu0 0.0
        %2502 = vmatpush2.msra.mxu0 0.0
        %2503 = vmatprep.subr.mxu0 0.0
        %2504 = vmatpush2.msra.mxu0 0.0
        %2505 = vmatprep.subr.mxu0 0.0
        %2506 = vmatpush2.msra.mxu0 0.0
        %2507 = vmatprep.subr.mxu0 0.0
        %2508 = vmatpush2.msra.mxu0 0.0
        %2509 = vmatprep.subr.mxu0 0.0
        %2510 = vmatpush2.msra.mxu0 0.0
        %2511 = vmatprep.mubr.f32.mxu0 0.0
        %2512 = vmatmul.mubr.f32.gmra.mxu0 %v2368
        %v2513 = vpop.f32.mrf.mxu0
        %v2514 = vadd.f32 0.0, %v2513
        %v2515 = vpop.f32.mrf.mxu0
        %2516 = vdwg.mxu0
        %v2517 = vadd.f32 %v2345, %v2443
        %v2518 = vadd.f32 %v2346, %v2445
        %v2519 = vadd.f32 %v2347, %v2514
        %s2520 = scalar_lea.vmem %s4, 16
        %v2521 = vld [vmem:[%s2520] sm:$0xf]
        %v2522 = vld [vmem:[#allocation2 + $0x4] sm:$0xff]
        %v2523 = vld [vmem:[#allocation2 + $0xc] sm:$0xf]
        %v2526 = vcombine.high %v2522, %v2522
        %v2528 = vsel %vm299, %v2521, 0
        %v2530 = vsel %vm303, %v2522, 0
        %v2532 = vsel %vm303, %v2526, 0
        %v2534 = vsel %vm303, %v2523, 0
        %2536 = vmatprep.subr.mxu0 0.0
        %2537 = vmatpush1.msra.mxu0 0.0
        %2538 = vmatprep.subr.mxu0 0.0
        %2539 = vmatpush1.msra.mxu0 0.0
        %2540 = vmatprep.subr.mxu0 0.0
        %2541 = vmatpush1.msra.mxu0 0.0
        %2542 = vmatprep.subr.mxu0 0.0
        %2543 = vmatpush1.msra.mxu0 0.0
        %2544 = vmatprep.subr.mxu0 0.0
        %2545 = vmatpush1.msra.mxu0 0.0
        %2546 = vmatprep.subr.mxu0 0.0
        %2547 = vmatpush1.msra.mxu0 0.0
        %2548 = vmatprep.subr.mxu0 0.0
        %2549 = vmatpush1.msra.mxu0 0.0
        %2550 = vmatprep.subr.mxu0 0.0
        %2551 = vmatpush1.msra.mxu0 0.0
        %2552 = vmatprep.subr.mxu0 0.0
        %2553 = vmatpush1.msra.mxu0 0.0
        %2554 = vmatprep.subr.mxu0 0.0
        %2555 = vmatpush1.msra.mxu0 0.0
        %2556 = vmatprep.subr.mxu0 0.0
        %2557 = vmatpush1.msra.mxu0 0.0
        %2558 = vmatprep.subr.mxu0 0.0
        %2559 = vmatpush1.msra.mxu0 0.0
        %2560 = vmatprep.subr.mxu0 0.0
        %2561 = vmatpush1.msra.mxu0 0.0
        %2562 = vmatprep.subr.mxu0 0.0
        %2563 = vmatpush1.msra.mxu0 0.0
        %2564 = vmatprep.subr.mxu0 0.0
        %2565 = vmatpush1.msra.mxu0 0.0
        %2566 = vmatprep.subr.mxu0 %v2532
        %2567 = vmatpush1.msra.mxu0 %v2530
        %2568 = vmatprep.subr.mxu0 0.0
        %2569 = vmatpush2.msra.mxu0 0.0
        %2570 = vmatprep.subr.mxu0 0.0
        %2571 = vmatpush2.msra.mxu0 0.0
        %2572 = vmatprep.subr.mxu0 0.0
        %2573 = vmatpush2.msra.mxu0 0.0
        %2574 = vmatprep.subr.mxu0 0.0
        %2575 = vmatpush2.msra.mxu0 0.0
        %2576 = vmatprep.subr.mxu0 0.0
        %2577 = vmatpush2.msra.mxu0 0.0
        %2578 = vmatprep.subr.mxu0 0.0
        %2579 = vmatpush2.msra.mxu0 0.0
        %2580 = vmatprep.subr.mxu0 0.0
        %2581 = vmatpush2.msra.mxu0 0.0
        %2582 = vmatprep.subr.mxu0 0.0
        %2583 = vmatpush2.msra.mxu0 0.0
        %2584 = vmatprep.subr.mxu0 0.0
        %2585 = vmatpush2.msra.mxu0 0.0
        %2586 = vmatprep.subr.mxu0 0.0
        %2587 = vmatpush2.msra.mxu0 0.0
        %2588 = vmatprep.subr.mxu0 0.0
        %2589 = vmatpush2.msra.mxu0 0.0
        %2590 = vmatprep.subr.mxu0 0.0
        %2591 = vmatpush2.msra.mxu0 0.0
        %2592 = vmatprep.subr.mxu0 0.0
        %2593 = vmatpush2.msra.mxu0 0.0
        %2594 = vmatprep.subr.mxu0 0.0
        %2595 = vmatpush2.msra.mxu0 0.0
        %2596 = vmatprep.subr.mxu0 0.0
        %2597 = vmatpush2.msra.mxu0 0.0
        %2598 = vmatprep.subr.mxu0 0.0
        %2599 = vmatpush2.msra.mxu0 0.0
        %2600 = vmatprep.mubr.f32.mxu0 0.0
        %2601 = vmatmul.mubr.f32.gmra.mxu0 %v2528
        %v2602 = vpop.f32.mrf.mxu0
        %v2603 = vadd.f32 0.0, %v2602
        %v2604 = vpop.f32.mrf.mxu0
        %v2605 = vadd.f32 0.0, %v2604
        %2606 = vdwg.mxu0
        %2607 = vmatprep.subr.mxu0 0.0
        %2608 = vmatpush1.msra.mxu0 0.0
        %2609 = vmatprep.subr.mxu0 0.0
        %2610 = vmatpush1.msra.mxu0 0.0
        %2611 = vmatprep.subr.mxu0 0.0
        %2612 = vmatpush1.msra.mxu0 0.0
        %2613 = vmatprep.subr.mxu0 0.0
        %2614 = vmatpush1.msra.mxu0 0.0
        %2615 = vmatprep.subr.mxu0 0.0
        %2616 = vmatpush1.msra.mxu0 0.0
        %2617 = vmatprep.subr.mxu0 0.0
        %2618 = vmatpush1.msra.mxu0 0.0
        %2619 = vmatprep.subr.mxu0 0.0
        %2620 = vmatpush1.msra.mxu0 0.0
        %2621 = vmatprep.subr.mxu0 0.0
        %2622 = vmatpush1.msra.mxu0 0.0
        %2623 = vmatprep.subr.mxu0 0.0
        %2624 = vmatpush1.msra.mxu0 0.0
        %2625 = vmatprep.subr.mxu0 0.0
        %2626 = vmatpush1.msra.mxu0 0.0
        %2627 = vmatprep.subr.mxu0 0.0
        %2628 = vmatpush1.msra.mxu0 0.0
        %2629 = vmatprep.subr.mxu0 0.0
        %2630 = vmatpush1.msra.mxu0 0.0
        %2631 = vmatprep.subr.mxu0 0.0
        %2632 = vmatpush1.msra.mxu0 0.0
        %2633 = vmatprep.subr.mxu0 0.0
        %2634 = vmatpush1.msra.mxu0 0.0
        %2635 = vmatprep.subr.mxu0 0.0
        %2636 = vmatpush1.msra.mxu0 0.0
        %2637 = vmatprep.subr.mxu0 0.0
        %2638 = vmatpush1.msra.mxu0 %v2534
        %2639 = vmatprep.subr.mxu0 0.0
        %2640 = vmatpush2.msra.mxu0 0.0
        %2641 = vmatprep.subr.mxu0 0.0
        %2642 = vmatpush2.msra.mxu0 0.0
        %2643 = vmatprep.subr.mxu0 0.0
        %2644 = vmatpush2.msra.mxu0 0.0
        %2645 = vmatprep.subr.mxu0 0.0
        %2646 = vmatpush2.msra.mxu0 0.0
        %2647 = vmatprep.subr.mxu0 0.0
        %2648 = vmatpush2.msra.mxu0 0.0
        %2649 = vmatprep.subr.mxu0 0.0
        %2650 = vmatpush2.msra.mxu0 0.0
        %2651 = vmatprep.subr.mxu0 0.0
        %2652 = vmatpush2.msra.mxu0 0.0
        %2653 = vmatprep.subr.mxu0 0.0
        %2654 = vmatpush2.msra.mxu0 0.0
        %2655 = vmatprep.subr.mxu0 0.0
        %2656 = vmatpush2.msra.mxu0 0.0
        %2657 = vmatprep.subr.mxu0 0.0
        %2658 = vmatpush2.msra.mxu0 0.0
        %2659 = vmatprep.subr.mxu0 0.0
        %2660 = vmatpush2.msra.mxu0 0.0
        %2661 = vmatprep.subr.mxu0 0.0
        %2662 = vmatpush2.msra.mxu0 0.0
        %2663 = vmatprep.subr.mxu0 0.0
        %2664 = vmatpush2.msra.mxu0 0.0
        %2665 = vmatprep.subr.mxu0 0.0
        %2666 = vmatpush2.msra.mxu0 0.0
        %2667 = vmatprep.subr.mxu0 0.0
        %2668 = vmatpush2.msra.mxu0 0.0
        %2669 = vmatprep.subr.mxu0 0.0
        %2670 = vmatpush2.msra.mxu0 0.0
        %2671 = vmatprep.mubr.f32.mxu0 0.0
        %2672 = vmatmul.mubr.f32.gmra.mxu0 %v2528
        %v2673 = vpop.f32.mrf.mxu0
        %v2674 = vadd.f32 0.0, %v2673
        %v2675 = vpop.f32.mrf.mxu0
        %2676 = vdwg.mxu0
        %v2677 = vadd.f32 %v2517, %v2603
        %v2678 = vadd.f32 %v2518, %v2605
        %v2679 = vadd.f32 %v2519, %v2674
        %s2680 = scalar_lea.vmem %s4, 20
        %v2681 = vld [vmem:[%s2680] sm:$0xf]
        %v2682 = vld [vmem:[#allocation2 + $0x4] sm:$0xff]
        %v2683 = vld [vmem:[#allocation2 + $0xc] sm:$0xf]
        %v2686 = vcombine.high %v2682, %v2682
        %2687 = vrot.lane.b32.xlu0 %v2682, 127
        %v2688 = vpop.permute.xlu0 %2687
        %2689 = vrot.lane.b32.xlu0 %v2686, 127
        %v2690 = vpop.permute.xlu0 %2689
        %2691 = vrot.lane.b32.xlu0 %v2683, 127
        %v2692 = vpop.permute.xlu0 %2691
        %v2693 = vsel %vm1132, %v2688, %v2690
        %v2694 = vsel %vm1132, %v2690, %v2692
        %v2696 = vsel %vm299, %v2681, 0
        %v2698 = vsel %vm303, %v2693, 0
        %v2700 = vsel %vm303, %v2694, 0
        %v2702 = vsel %vm303, %v2692, 0
        %2704 = vmatprep.subr.mxu0 0.0
        %2705 = vmatpush1.msra.mxu0 0.0
        %2706 = vmatprep.subr.mxu0 0.0
        %2707 = vmatpush1.msra.mxu0 0.0
        %2708 = vmatprep.subr.mxu0 0.0
        %2709 = vmatpush1.msra.mxu0 0.0
        %2710 = vmatprep.subr.mxu0 0.0
        %2711 = vmatpush1.msra.mxu0 0.0
        %2712 = vmatprep.subr.mxu0 0.0
        %2713 = vmatpush1.msra.mxu0 0.0
        %2714 = vmatprep.subr.mxu0 0.0
        %2715 = vmatpush1.msra.mxu0 0.0
        %2716 = vmatprep.subr.mxu0 0.0
        %2717 = vmatpush1.msra.mxu0 0.0
        %2718 = vmatprep.subr.mxu0 0.0
        %2719 = vmatpush1.msra.mxu0 0.0
        %2720 = vmatprep.subr.mxu0 0.0
        %2721 = vmatpush1.msra.mxu0 0.0
        %2722 = vmatprep.subr.mxu0 0.0
        %2723 = vmatpush1.msra.mxu0 0.0
        %2724 = vmatprep.subr.mxu0 0.0
        %2725 = vmatpush1.msra.mxu0 0.0
        %2726 = vmatprep.subr.mxu0 0.0
        %2727 = vmatpush1.msra.mxu0 0.0
        %2728 = vmatprep.subr.mxu0 0.0
        %2729 = vmatpush1.msra.mxu0 0.0
        %2730 = vmatprep.subr.mxu0 0.0
        %2731 = vmatpush1.msra.mxu0 0.0
        %2732 = vmatprep.subr.mxu0 0.0
        %2733 = vmatpush1.msra.mxu0 0.0
        %2734 = vmatprep.subr.mxu0 %v2700
        %2735 = vmatpush1.msra.mxu0 %v2698
        %2736 = vmatprep.subr.mxu0 0.0
        %2737 = vmatpush2.msra.mxu0 0.0
        %2738 = vmatprep.subr.mxu0 0.0
        %2739 = vmatpush2.msra.mxu0 0.0
        %2740 = vmatprep.subr.mxu0 0.0
        %2741 = vmatpush2.msra.mxu0 0.0
        %2742 = vmatprep.subr.mxu0 0.0
        %2743 = vmatpush2.msra.mxu0 0.0
        %2744 = vmatprep.subr.mxu0 0.0
        %2745 = vmatpush2.msra.mxu0 0.0
        %2746 = vmatprep.subr.mxu0 0.0
        %2747 = vmatpush2.msra.mxu0 0.0
        %2748 = vmatprep.subr.mxu0 0.0
        %2749 = vmatpush2.msra.mxu0 0.0
        %2750 = vmatprep.subr.mxu0 0.0
        %2751 = vmatpush2.msra.mxu0 0.0
        %2752 = vmatprep.subr.mxu0 0.0
        %2753 = vmatpush2.msra.mxu0 0.0
        %2754 = vmatprep.subr.mxu0 0.0
        %2755 = vmatpush2.msra.mxu0 0.0
        %2756 = vmatprep.subr.mxu0 0.0
        %2757 = vmatpush2.msra.mxu0 0.0
        %2758 = vmatprep.subr.mxu0 0.0
        %2759 = vmatpush2.msra.mxu0 0.0
        %2760 = vmatprep.subr.mxu0 0.0
        %2761 = vmatpush2.msra.mxu0 0.0
        %2762 = vmatprep.subr.mxu0 0.0
        %2763 = vmatpush2.msra.mxu0 0.0
        %2764 = vmatprep.subr.mxu0 0.0
        %2765 = vmatpush2.msra.mxu0 0.0
        %2766 = vmatprep.subr.mxu0 0.0
        %2767 = vmatpush2.msra.mxu0 0.0
        %2768 = vmatprep.mubr.f32.mxu0 0.0
        %2769 = vmatmul.mubr.f32.gmra.mxu0 %v2696
        %v2770 = vpop.f32.mrf.mxu0
        %v2771 = vadd.f32 0.0, %v2770
        %v2772 = vpop.f32.mrf.mxu0
        %v2773 = vadd.f32 0.0, %v2772
        %2774 = vdwg.mxu0
        %2775 = vmatprep.subr.mxu0 0.0
        %2776 = vmatpush1.msra.mxu0 0.0
        %2777 = vmatprep.subr.mxu0 0.0
        %2778 = vmatpush1.msra.mxu0 0.0
        %2779 = vmatprep.subr.mxu0 0.0
        %2780 = vmatpush1.msra.mxu0 0.0
        %2781 = vmatprep.subr.mxu0 0.0
        %2782 = vmatpush1.msra.mxu0 0.0
        %2783 = vmatprep.subr.mxu0 0.0
        %2784 = vmatpush1.msra.mxu0 0.0
        %2785 = vmatprep.subr.mxu0 0.0
        %2786 = vmatpush1.msra.mxu0 0.0
        %2787 = vmatprep.subr.mxu0 0.0
        %2788 = vmatpush1.msra.mxu0 0.0
        %2789 = vmatprep.subr.mxu0 0.0
        %2790 = vmatpush1.msra.mxu0 0.0
        %2791 = vmatprep.subr.mxu0 0.0
        %2792 = vmatpush1.msra.mxu0 0.0
        %2793 = vmatprep.subr.mxu0 0.0
        %2794 = vmatpush1.msra.mxu0 0.0
        %2795 = vmatprep.subr.mxu0 0.0
        %2796 = vmatpush1.msra.mxu0 0.0
        %2797 = vmatprep.subr.mxu0 0.0
        %2798 = vmatpush1.msra.mxu0 0.0
        %2799 = vmatprep.subr.mxu0 0.0
        %2800 = vmatpush1.msra.mxu0 0.0
        %2801 = vmatprep.subr.mxu0 0.0
        %2802 = vmatpush1.msra.mxu0 0.0
        %2803 = vmatprep.subr.mxu0 0.0
        %2804 = vmatpush1.msra.mxu0 0.0
        %2805 = vmatprep.subr.mxu0 0.0
        %2806 = vmatpush1.msra.mxu0 %v2702
        %2807 = vmatprep.subr.mxu0 0.0
        %2808 = vmatpush2.msra.mxu0 0.0
        %2809 = vmatprep.subr.mxu0 0.0
        %2810 = vmatpush2.msra.mxu0 0.0
        %2811 = vmatprep.subr.mxu0 0.0
        %2812 = vmatpush2.msra.mxu0 0.0
        %2813 = vmatprep.subr.mxu0 0.0
        %2814 = vmatpush2.msra.mxu0 0.0
        %2815 = vmatprep.subr.mxu0 0.0
        %2816 = vmatpush2.msra.mxu0 0.0
        %2817 = vmatprep.subr.mxu0 0.0
        %2818 = vmatpush2.msra.mxu0 0.0
        %2819 = vmatprep.subr.mxu0 0.0
        %2820 = vmatpush2.msra.mxu0 0.0
        %2821 = vmatprep.subr.mxu0 0.0
        %2822 = vmatpush2.msra.mxu0 0.0
        %2823 = vmatprep.subr.mxu0 0.0
        %2824 = vmatpush2.msra.mxu0 0.0
        %2825 = vmatprep.subr.mxu0 0.0
        %2826 = vmatpush2.msra.mxu0 0.0
        %2827 = vmatprep.subr.mxu0 0.0
        %2828 = vmatpush2.msra.mxu0 0.0
        %2829 = vmatprep.subr.mxu0 0.0
        %2830 = vmatpush2.msra.mxu0 0.0
        %2831 = vmatprep.subr.mxu0 0.0
        %2832 = vmatpush2.msra.mxu0 0.0
        %2833 = vmatprep.subr.mxu0 0.0
        %2834 = vmatpush2.msra.mxu0 0.0
        %2835 = vmatprep.subr.mxu0 0.0
        %2836 = vmatpush2.msra.mxu0 0.0
        %2837 = vmatprep.subr.mxu0 0.0
        %2838 = vmatpush2.msra.mxu0 0.0
        %2839 = vmatprep.mubr.f32.mxu0 0.0
        %2840 = vmatmul.mubr.f32.gmra.mxu0 %v2696
        %v2841 = vpop.f32.mrf.mxu0
        %v2842 = vadd.f32 0.0, %v2841
        %v2843 = vpop.f32.mrf.mxu0
        %2844 = vdwg.mxu0
        %v2845 = vadd.f32 %v2677, %v2771
        %v2846 = vadd.f32 %v2678, %v2773
        %v2847 = vadd.f32 %v2679, %v2842
        %s2848 = scalar_lea.vmem %s4, 24
        %v2849 = vld [vmem:[%s2848] sm:$0xf]
        %v2850 = vld [vmem:[#allocation2 + $0x4] sm:$0xff]
        %v2851 = vld [vmem:[#allocation2 + $0xc] sm:$0xf]
        %v2854 = vcombine.high %v2850, %v2850
        %2855 = vrot.lane.b32.xlu0 %v2850, 111
        %v2856 = vpop.permute.xlu0 %2855
        %2857 = vrot.lane.b32.xlu0 %v2854, 111
        %v2858 = vpop.permute.xlu0 %2857
        %2859 = vrot.lane.b32.xlu0 %v2851, 111
        %v2860 = vpop.permute.xlu0 %2859
        %v2861 = vsel %vm1301, %v2856, %v2858
        %v2862 = vsel %vm1301, %v2858, %v2860
        %v2864 = vsel %vm299, %v2849, 0
        %v2866 = vsel %vm303, %v2861, 0
        %v2868 = vsel %vm303, %v2862, 0
        %v2870 = vsel %vm303, %v2860, 0
        %2872 = vmatprep.subr.mxu0 0.0
        %2873 = vmatpush1.msra.mxu0 0.0
        %2874 = vmatprep.subr.mxu0 0.0
        %2875 = vmatpush1.msra.mxu0 0.0
        %2876 = vmatprep.subr.mxu0 0.0
        %2877 = vmatpush1.msra.mxu0 0.0
        %2878 = vmatprep.subr.mxu0 0.0
        %2879 = vmatpush1.msra.mxu0 0.0
        %2880 = vmatprep.subr.mxu0 0.0
        %2881 = vmatpush1.msra.mxu0 0.0
        %2882 = vmatprep.subr.mxu0 0.0
        %2883 = vmatpush1.msra.mxu0 0.0
        %2884 = vmatprep.subr.mxu0 0.0
        %2885 = vmatpush1.msra.mxu0 0.0
        %2886 = vmatprep.subr.mxu0 0.0
        %2887 = vmatpush1.msra.mxu0 0.0
        %2888 = vmatprep.subr.mxu0 0.0
        %2889 = vmatpush1.msra.mxu0 0.0
        %2890 = vmatprep.subr.mxu0 0.0
        %2891 = vmatpush1.msra.mxu0 0.0
        %2892 = vmatprep.subr.mxu0 0.0
        %2893 = vmatpush1.msra.mxu0 0.0
        %2894 = vmatprep.subr.mxu0 0.0
        %2895 = vmatpush1.msra.mxu0 0.0
        %2896 = vmatprep.subr.mxu0 0.0
        %2897 = vmatpush1.msra.mxu0 0.0
        %2898 = vmatprep.subr.mxu0 0.0
        %2899 = vmatpush1.msra.mxu0 0.0
        %2900 = vmatprep.subr.mxu0 0.0
        %2901 = vmatpush1.msra.mxu0 0.0
        %2902 = vmatprep.subr.mxu0 %v2868
        %2903 = vmatpush1.msra.mxu0 %v2866
        %2904 = vmatprep.subr.mxu0 0.0
        %2905 = vmatpush2.msra.mxu0 0.0
        %2906 = vmatprep.subr.mxu0 0.0
        %2907 = vmatpush2.msra.mxu0 0.0
        %2908 = vmatprep.subr.mxu0 0.0
        %2909 = vmatpush2.msra.mxu0 0.0
        %2910 = vmatprep.subr.mxu0 0.0
        %2911 = vmatpush2.msra.mxu0 0.0
        %2912 = vmatprep.subr.mxu0 0.0
        %2913 = vmatpush2.msra.mxu0 0.0
        %2914 = vmatprep.subr.mxu0 0.0
        %2915 = vmatpush2.msra.mxu0 0.0
        %2916 = vmatprep.subr.mxu0 0.0
        %2917 = vmatpush2.msra.mxu0 0.0
        %2918 = vmatprep.subr.mxu0 0.0
        %2919 = vmatpush2.msra.mxu0 0.0
        %2920 = vmatprep.subr.mxu0 0.0
        %2921 = vmatpush2.msra.mxu0 0.0
        %2922 = vmatprep.subr.mxu0 0.0
        %2923 = vmatpush2.msra.mxu0 0.0
        %2924 = vmatprep.subr.mxu0 0.0
        %2925 = vmatpush2.msra.mxu0 0.0
        %2926 = vmatprep.subr.mxu0 0.0
        %2927 = vmatpush2.msra.mxu0 0.0
        %2928 = vmatprep.subr.mxu0 0.0
        %2929 = vmatpush2.msra.mxu0 0.0
        %2930 = vmatprep.subr.mxu0 0.0
        %2931 = vmatpush2.msra.mxu0 0.0
        %2932 = vmatprep.subr.mxu0 0.0
        %2933 = vmatpush2.msra.mxu0 0.0
        %2934 = vmatprep.subr.mxu0 0.0
        %2935 = vmatpush2.msra.mxu0 0.0
        %2936 = vmatprep.mubr.f32.mxu0 0.0
        %2937 = vmatmul.mubr.f32.gmra.mxu0 %v2864
        %v2938 = vpop.f32.mrf.mxu0
        %v2939 = vadd.f32 0.0, %v2938
        %v2940 = vpop.f32.mrf.mxu0
        %v2941 = vadd.f32 0.0, %v2940
        %2942 = vdwg.mxu0
        %2943 = vmatprep.subr.mxu0 0.0
        %2944 = vmatpush1.msra.mxu0 0.0
        %2945 = vmatprep.subr.mxu0 0.0
        %2946 = vmatpush1.msra.mxu0 0.0
        %2947 = vmatprep.subr.mxu0 0.0
        %2948 = vmatpush1.msra.mxu0 0.0
        %2949 = vmatprep.subr.mxu0 0.0
        %2950 = vmatpush1.msra.mxu0 0.0
        %2951 = vmatprep.subr.mxu0 0.0
        %2952 = vmatpush1.msra.mxu0 0.0
        %2953 = vmatprep.subr.mxu0 0.0
        %2954 = vmatpush1.msra.mxu0 0.0
        %2955 = vmatprep.subr.mxu0 0.0
        %2956 = vmatpush1.msra.mxu0 0.0
        %2957 = vmatprep.subr.mxu0 0.0
        %2958 = vmatpush1.msra.mxu0 0.0
        %2959 = vmatprep.subr.mxu0 0.0
        %2960 = vmatpush1.msra.mxu0 0.0
        %2961 = vmatprep.subr.mxu0 0.0
        %2962 = vmatpush1.msra.mxu0 0.0
        %2963 = vmatprep.subr.mxu0 0.0
        %2964 = vmatpush1.msra.mxu0 0.0
        %2965 = vmatprep.subr.mxu0 0.0
        %2966 = vmatpush1.msra.mxu0 0.0
        %2967 = vmatprep.subr.mxu0 0.0
        %2968 = vmatpush1.msra.mxu0 0.0
        %2969 = vmatprep.subr.mxu0 0.0
        %2970 = vmatpush1.msra.mxu0 0.0
        %2971 = vmatprep.subr.mxu0 0.0
        %2972 = vmatpush1.msra.mxu0 0.0
        %2973 = vmatprep.subr.mxu0 0.0
        %2974 = vmatpush1.msra.mxu0 %v2870
        %2975 = vmatprep.subr.mxu0 0.0
        %2976 = vmatpush2.msra.mxu0 0.0
        %2977 = vmatprep.subr.mxu0 0.0
        %2978 = vmatpush2.msra.mxu0 0.0
        %2979 = vmatprep.subr.mxu0 0.0
        %2980 = vmatpush2.msra.mxu0 0.0
        %2981 = vmatprep.subr.mxu0 0.0
        %2982 = vmatpush2.msra.mxu0 0.0
        %2983 = vmatprep.subr.mxu0 0.0
        %2984 = vmatpush2.msra.mxu0 0.0
        %2985 = vmatprep.subr.mxu0 0.0
        %2986 = vmatpush2.msra.mxu0 0.0
        %2987 = vmatprep.subr.mxu0 0.0
        %2988 = vmatpush2.msra.mxu0 0.0
        %2989 = vmatprep.subr.mxu0 0.0
        %2990 = vmatpush2.msra.mxu0 0.0
        %2991 = vmatprep.subr.mxu0 0.0
        %2992 = vmatpush2.msra.mxu0 0.0
        %2993 = vmatprep.subr.mxu0 0.0
        %2994 = vmatpush2.msra.mxu0 0.0
        %2995 = vmatprep.subr.mxu0 0.0
        %2996 = vmatpush2.msra.mxu0 0.0
        %2997 = vmatprep.subr.mxu0 0.0
        %2998 = vmatpush2.msra.mxu0 0.0
        %2999 = vmatprep.subr.mxu0 0.0
        %3000 = vmatpush2.msra.mxu0 0.0
        %3001 = vmatprep.subr.mxu0 0.0
        %3002 = vmatpush2.msra.mxu0 0.0
        %3003 = vmatprep.subr.mxu0 0.0
        %3004 = vmatpush2.msra.mxu0 0.0
        %3005 = vmatprep.subr.mxu0 0.0
        %3006 = vmatpush2.msra.mxu0 0.0
        %3007 = vmatprep.mubr.f32.mxu0 0.0
        %3008 = vmatmul.mubr.f32.gmra.mxu0 %v2864
        %v3009 = vpop.f32.mrf.mxu0
        %v3010 = vadd.f32 0.0, %v3009
        %v3011 = vpop.f32.mrf.mxu0
        %3012 = vdwg.mxu0
        %v3013 = vadd.f32 %v2845, %v2939
        %v3014 = vadd.f32 %v2846, %v2941
        %v3015 = vadd.f32 %v2847, %v3010
        %s3016 = scalar_lea.vmem %s4, 28
        %v3017 = vld [vmem:[%s3016] sm:$0xf]
        %v3018 = vld [vmem:[#allocation2 + $0x4] sm:$0xff]
        %v3019 = vld [vmem:[#allocation2 + $0xc] sm:$0xf]
        %v3022 = vcombine.high %v3018, %v3018
        %3023 = vrot.lane.b32.xlu0 %v3018, 110
        %v3024 = vpop.permute.xlu0 %3023
        %3025 = vrot.lane.b32.xlu0 %v3022, 110
        %v3026 = vpop.permute.xlu0 %3025
        %3027 = vrot.lane.b32.xlu0 %v3019, 110
        %v3028 = vpop.permute.xlu0 %3027
        %v3029 = vsel %vm1470, %v3024, %v3026
        %v3030 = vsel %vm1470, %v3026, %v3028
        %v3032 = vsel %vm299, %v3017, 0
        %v3034 = vsel %vm303, %v3029, 0
        %v3036 = vsel %vm303, %v3030, 0
        %v3038 = vsel %vm303, %v3028, 0
        %3040 = vmatprep.subr.mxu0 0.0
        %3041 = vmatpush1.msra.mxu0 0.0
        %3042 = vmatprep.subr.mxu0 0.0
        %3043 = vmatpush1.msra.mxu0 0.0
        %3044 = vmatprep.subr.mxu0 0.0
        %3045 = vmatpush1.msra.mxu0 0.0
        %3046 = vmatprep.subr.mxu0 0.0
        %3047 = vmatpush1.msra.mxu0 0.0
        %3048 = vmatprep.subr.mxu0 0.0
        %3049 = vmatpush1.msra.mxu0 0.0
        %3050 = vmatprep.subr.mxu0 0.0
        %3051 = vmatpush1.msra.mxu0 0.0
        %3052 = vmatprep.subr.mxu0 0.0
        %3053 = vmatpush1.msra.mxu0 0.0
        %3054 = vmatprep.subr.mxu0 0.0
        %3055 = vmatpush1.msra.mxu0 0.0
        %3056 = vmatprep.subr.mxu0 0.0
        %3057 = vmatpush1.msra.mxu0 0.0
        %3058 = vmatprep.subr.mxu0 0.0
        %3059 = vmatpush1.msra.mxu0 0.0
        %3060 = vmatprep.subr.mxu0 0.0
        %3061 = vmatpush1.msra.mxu0 0.0
        %3062 = vmatprep.subr.mxu0 0.0
        %3063 = vmatpush1.msra.mxu0 0.0
        %3064 = vmatprep.subr.mxu0 0.0
        %3065 = vmatpush1.msra.mxu0 0.0
        %3066 = vmatprep.subr.mxu0 0.0
        %3067 = vmatpush1.msra.mxu0 0.0
        %3068 = vmatprep.subr.mxu0 0.0
        %3069 = vmatpush1.msra.mxu0 0.0
        %3070 = vmatprep.subr.mxu0 %v3036
        %3071 = vmatpush1.msra.mxu0 %v3034
        %3072 = vmatprep.subr.mxu0 0.0
        %3073 = vmatpush2.msra.mxu0 0.0
        %3074 = vmatprep.subr.mxu0 0.0
        %3075 = vmatpush2.msra.mxu0 0.0
        %3076 = vmatprep.subr.mxu0 0.0
        %3077 = vmatpush2.msra.mxu0 0.0
        %3078 = vmatprep.subr.mxu0 0.0
        %3079 = vmatpush2.msra.mxu0 0.0
        %3080 = vmatprep.subr.mxu0 0.0
        %3081 = vmatpush2.msra.mxu0 0.0
        %3082 = vmatprep.subr.mxu0 0.0
        %3083 = vmatpush2.msra.mxu0 0.0
        %3084 = vmatprep.subr.mxu0 0.0
        %3085 = vmatpush2.msra.mxu0 0.0
        %3086 = vmatprep.subr.mxu0 0.0
        %3087 = vmatpush2.msra.mxu0 0.0
        %3088 = vmatprep.subr.mxu0 0.0
        %3089 = vmatpush2.msra.mxu0 0.0
        %3090 = vmatprep.subr.mxu0 0.0
        %3091 = vmatpush2.msra.mxu0 0.0
        %3092 = vmatprep.subr.mxu0 0.0
        %3093 = vmatpush2.msra.mxu0 0.0
        %3094 = vmatprep.subr.mxu0 0.0
        %3095 = vmatpush2.msra.mxu0 0.0
        %3096 = vmatprep.subr.mxu0 0.0
        %3097 = vmatpush2.msra.mxu0 0.0
        %3098 = vmatprep.subr.mxu0 0.0
        %3099 = vmatpush2.msra.mxu0 0.0
        %3100 = vmatprep.subr.mxu0 0.0
        %3101 = vmatpush2.msra.mxu0 0.0
        %3102 = vmatprep.subr.mxu0 0.0
        %3103 = vmatpush2.msra.mxu0 0.0
        %3104 = vmatprep.mubr.f32.mxu0 0.0
        %3105 = vmatmul.mubr.f32.gmra.mxu0 %v3032
        %v3106 = vpop.f32.mrf.mxu0
        %v3107 = vadd.f32 0.0, %v3106
        %v3108 = vpop.f32.mrf.mxu0
        %v3109 = vadd.f32 0.0, %v3108
        %3110 = vdwg.mxu0
        %3111 = vmatprep.subr.mxu0 0.0
        %3112 = vmatpush1.msra.mxu0 0.0
        %3113 = vmatprep.subr.mxu0 0.0
        %3114 = vmatpush1.msra.mxu0 0.0
        %3115 = vmatprep.subr.mxu0 0.0
        %3116 = vmatpush1.msra.mxu0 0.0
        %3117 = vmatprep.subr.mxu0 0.0
        %3118 = vmatpush1.msra.mxu0 0.0
        %3119 = vmatprep.subr.mxu0 0.0
        %3120 = vmatpush1.msra.mxu0 0.0
        %3121 = vmatprep.subr.mxu0 0.0
        %3122 = vmatpush1.msra.mxu0 0.0
        %3123 = vmatprep.subr.mxu0 0.0
        %3124 = vmatpush1.msra.mxu0 0.0
        %3125 = vmatprep.subr.mxu0 0.0
        %3126 = vmatpush1.msra.mxu0 0.0
        %3127 = vmatprep.subr.mxu0 0.0
        %3128 = vmatpush1.msra.mxu0 0.0
        %3129 = vmatprep.subr.mxu0 0.0
        %3130 = vmatpush1.msra.mxu0 0.0
        %3131 = vmatprep.subr.mxu0 0.0
        %3132 = vmatpush1.msra.mxu0 0.0
        %3133 = vmatprep.subr.mxu0 0.0
        %3134 = vmatpush1.msra.mxu0 0.0
        %3135 = vmatprep.subr.mxu0 0.0
        %3136 = vmatpush1.msra.mxu0 0.0
        %3137 = vmatprep.subr.mxu0 0.0
        %3138 = vmatpush1.msra.mxu0 0.0
        %3139 = vmatprep.subr.mxu0 0.0
        %3140 = vmatpush1.msra.mxu0 0.0
        %3141 = vmatprep.subr.mxu0 0.0
        %3142 = vmatpush1.msra.mxu0 %v3038
        %3143 = vmatprep.subr.mxu0 0.0
        %3144 = vmatpush2.msra.mxu0 0.0
        %3145 = vmatprep.subr.mxu0 0.0
        %3146 = vmatpush2.msra.mxu0 0.0
        %3147 = vmatprep.subr.mxu0 0.0
        %3148 = vmatpush2.msra.mxu0 0.0
        %3149 = vmatprep.subr.mxu0 0.0
        %3150 = vmatpush2.msra.mxu0 0.0
        %3151 = vmatprep.subr.mxu0 0.0
        %3152 = vmatpush2.msra.mxu0 0.0
        %3153 = vmatprep.subr.mxu0 0.0
        %3154 = vmatpush2.msra.mxu0 0.0
        %3155 = vmatprep.subr.mxu0 0.0
        %3156 = vmatpush2.msra.mxu0 0.0
        %3157 = vmatprep.subr.mxu0 0.0
        %3158 = vmatpush2.msra.mxu0 0.0
        %3159 = vmatprep.subr.mxu0 0.0
        %3160 = vmatpush2.msra.mxu0 0.0
        %3161 = vmatprep.subr.mxu0 0.0
        %3162 = vmatpush2.msra.mxu0 0.0
        %3163 = vmatprep.subr.mxu0 0.0
        %3164 = vmatpush2.msra.mxu0 0.0
        %3165 = vmatprep.subr.mxu0 0.0
        %3166 = vmatpush2.msra.mxu0 0.0
        %3167 = vmatprep.subr.mxu0 0.0
        %3168 = vmatpush2.msra.mxu0 0.0
        %3169 = vmatprep.subr.mxu0 0.0
        %3170 = vmatpush2.msra.mxu0 0.0
        %3171 = vmatprep.subr.mxu0 0.0
        %3172 = vmatpush2.msra.mxu0 0.0
        %3173 = vmatprep.subr.mxu0 0.0
        %3174 = vmatpush2.msra.mxu0 0.0
        %3175 = vmatprep.mubr.f32.mxu0 0.0
        %3176 = vmatmul.mubr.f32.gmra.mxu0 %v3032
        %v3177 = vpop.f32.mrf.mxu0
        %v3178 = vadd.f32 0.0, %v3177
        %v3179 = vpop.f32.mrf.mxu0
        %3180 = vdwg.mxu0
        %v3181 = vadd.f32 %v3013, %v3107
        %v3182 = vadd.f32 %v3014, %v3109
        %v3183 = vadd.f32 %v3015, %v3178
        %s3184 = scalar_lea.vmem %s4, 32
        %v3185 = vld [vmem:[%s3184] sm:$0xf]
        %v3186 = vld [vmem:[#allocation2 + $0x4] sm:$0xff]
        %v3187 = vld [vmem:[#allocation2 + $0xc] sm:$0xf]
        %v3190 = vcombine.high %v3186, %v3186
        %3191 = vrot.lane.b32.xlu0 %v3186, 109
        %v3192 = vpop.permute.xlu0 %3191
        %3193 = vrot.lane.b32.xlu0 %v3190, 109
        %v3194 = vpop.permute.xlu0 %3193
        %3195 = vrot.lane.b32.xlu0 %v3187, 109
        %v3196 = vpop.permute.xlu0 %3195
        %v3197 = vsel %vm1639, %v3192, %v3194
        %v3198 = vsel %vm1639, %v3194, %v3196
        %v3200 = vsel %vm299, %v3185, 0
        %v3202 = vsel %vm303, %v3197, 0
        %v3204 = vsel %vm303, %v3198, 0
        %v3206 = vsel %vm303, %v3196, 0
        %3208 = vmatprep.subr.mxu0 0.0
        %3209 = vmatpush1.msra.mxu0 0.0
        %3210 = vmatprep.subr.mxu0 0.0
        %3211 = vmatpush1.msra.mxu0 0.0
        %3212 = vmatprep.subr.mxu0 0.0
        %3213 = vmatpush1.msra.mxu0 0.0
        %3214 = vmatprep.subr.mxu0 0.0
        %3215 = vmatpush1.msra.mxu0 0.0
        %3216 = vmatprep.subr.mxu0 0.0
        %3217 = vmatpush1.msra.mxu0 0.0
        %3218 = vmatprep.subr.mxu0 0.0
        %3219 = vmatpush1.msra.mxu0 0.0
        %3220 = vmatprep.subr.mxu0 0.0
        %3221 = vmatpush1.msra.mxu0 0.0
        %3222 = vmatprep.subr.mxu0 0.0
        %3223 = vmatpush1.msra.mxu0 0.0
        %3224 = vmatprep.subr.mxu0 0.0
        %3225 = vmatpush1.msra.mxu0 0.0
        %3226 = vmatprep.subr.mxu0 0.0
        %3227 = vmatpush1.msra.mxu0 0.0
        %3228 = vmatprep.subr.mxu0 0.0
        %3229 = vmatpush1.msra.mxu0 0.0
        %3230 = vmatprep.subr.mxu0 0.0
        %3231 = vmatpush1.msra.mxu0 0.0
        %3232 = vmatprep.subr.mxu0 0.0
        %3233 = vmatpush1.msra.mxu0 0.0
        %3234 = vmatprep.subr.mxu0 0.0
        %3235 = vmatpush1.msra.mxu0 0.0
        %3236 = vmatprep.subr.mxu0 0.0
        %3237 = vmatpush1.msra.mxu0 0.0
        %3238 = vmatprep.subr.mxu0 %v3204
        %3239 = vmatpush1.msra.mxu0 %v3202
        %3240 = vmatprep.subr.mxu0 0.0
        %3241 = vmatpush2.msra.mxu0 0.0
        %3242 = vmatprep.subr.mxu0 0.0
        %3243 = vmatpush2.msra.mxu0 0.0
        %3244 = vmatprep.subr.mxu0 0.0
        %3245 = vmatpush2.msra.mxu0 0.0
        %3246 = vmatprep.subr.mxu0 0.0
        %3247 = vmatpush2.msra.mxu0 0.0
        %3248 = vmatprep.subr.mxu0 0.0
        %3249 = vmatpush2.msra.mxu0 0.0
        %3250 = vmatprep.subr.mxu0 0.0
        %3251 = vmatpush2.msra.mxu0 0.0
        %3252 = vmatprep.subr.mxu0 0.0
        %3253 = vmatpush2.msra.mxu0 0.0
        %3254 = vmatprep.subr.mxu0 0.0
        %3255 = vmatpush2.msra.mxu0 0.0
        %3256 = vmatprep.subr.mxu0 0.0
        %3257 = vmatpush2.msra.mxu0 0.0
        %3258 = vmatprep.subr.mxu0 0.0
        %3259 = vmatpush2.msra.mxu0 0.0
        %3260 = vmatprep.subr.mxu0 0.0
        %3261 = vmatpush2.msra.mxu0 0.0
        %3262 = vmatprep.subr.mxu0 0.0
        %3263 = vmatpush2.msra.mxu0 0.0
        %3264 = vmatprep.subr.mxu0 0.0
        %3265 = vmatpush2.msra.mxu0 0.0
        %3266 = vmatprep.subr.mxu0 0.0
        %3267 = vmatpush2.msra.mxu0 0.0
        %3268 = vmatprep.subr.mxu0 0.0
        %3269 = vmatpush2.msra.mxu0 0.0
        %3270 = vmatprep.subr.mxu0 0.0
        %3271 = vmatpush2.msra.mxu0 0.0
        %3272 = vmatprep.mubr.f32.mxu0 0.0
        %3273 = vmatmul.mubr.f32.gmra.mxu0 %v3200
        %v3274 = vpop.f32.mrf.mxu0
        %v3275 = vadd.f32 0.0, %v3274
        %v3276 = vpop.f32.mrf.mxu0
        %v3277 = vadd.f32 0.0, %v3276
        %3278 = vdwg.mxu0
        %3279 = vmatprep.subr.mxu0 0.0
        %3280 = vmatpush1.msra.mxu0 0.0
        %3281 = vmatprep.subr.mxu0 0.0
        %3282 = vmatpush1.msra.mxu0 0.0
        %3283 = vmatprep.subr.mxu0 0.0
        %3284 = vmatpush1.msra.mxu0 0.0
        %3285 = vmatprep.subr.mxu0 0.0
        %3286 = vmatpush1.msra.mxu0 0.0
        %3287 = vmatprep.subr.mxu0 0.0
        %3288 = vmatpush1.msra.mxu0 0.0
        %3289 = vmatprep.subr.mxu0 0.0
        %3290 = vmatpush1.msra.mxu0 0.0
        %3291 = vmatprep.subr.mxu0 0.0
        %3292 = vmatpush1.msra.mxu0 0.0
        %3293 = vmatprep.subr.mxu0 0.0
        %3294 = vmatpush1.msra.mxu0 0.0
        %3295 = vmatprep.subr.mxu0 0.0
        %3296 = vmatpush1.msra.mxu0 0.0
        %3297 = vmatprep.subr.mxu0 0.0
        %3298 = vmatpush1.msra.mxu0 0.0
        %3299 = vmatprep.subr.mxu0 0.0
        %3300 = vmatpush1.msra.mxu0 0.0
        %3301 = vmatprep.subr.mxu0 0.0
        %3302 = vmatpush1.msra.mxu0 0.0
        %3303 = vmatprep.subr.mxu0 0.0
        %3304 = vmatpush1.msra.mxu0 0.0
        %3305 = vmatprep.subr.mxu0 0.0
        %3306 = vmatpush1.msra.mxu0 0.0
        %3307 = vmatprep.subr.mxu0 0.0
        %3308 = vmatpush1.msra.mxu0 0.0
        %3309 = vmatprep.subr.mxu0 0.0
        %3310 = vmatpush1.msra.mxu0 %v3206
        %3311 = vmatprep.subr.mxu0 0.0
        %3312 = vmatpush2.msra.mxu0 0.0
        %3313 = vmatprep.subr.mxu0 0.0
        %3314 = vmatpush2.msra.mxu0 0.0
        %3315 = vmatprep.subr.mxu0 0.0
        %3316 = vmatpush2.msra.mxu0 0.0
        %3317 = vmatprep.subr.mxu0 0.0
        %3318 = vmatpush2.msra.mxu0 0.0
        %3319 = vmatprep.subr.mxu0 0.0
        %3320 = vmatpush2.msra.mxu0 0.0
        %3321 = vmatprep.subr.mxu0 0.0
        %3322 = vmatpush2.msra.mxu0 0.0
        %3323 = vmatprep.subr.mxu0 0.0
        %3324 = vmatpush2.msra.mxu0 0.0
        %3325 = vmatprep.subr.mxu0 0.0
        %3326 = vmatpush2.msra.mxu0 0.0
        %3327 = vmatprep.subr.mxu0 0.0
        %3328 = vmatpush2.msra.mxu0 0.0
        %3329 = vmatprep.subr.mxu0 0.0
        %3330 = vmatpush2.msra.mxu0 0.0
        %3331 = vmatprep.subr.mxu0 0.0
        %3332 = vmatpush2.msra.mxu0 0.0
        %3333 = vmatprep.subr.mxu0 0.0
        %3334 = vmatpush2.msra.mxu0 0.0
        %3335 = vmatprep.subr.mxu0 0.0
        %3336 = vmatpush2.msra.mxu0 0.0
        %3337 = vmatprep.subr.mxu0 0.0
        %3338 = vmatpush2.msra.mxu0 0.0
        %3339 = vmatprep.subr.mxu0 0.0
        %3340 = vmatpush2.msra.mxu0 0.0
        %3341 = vmatprep.subr.mxu0 0.0
        %3342 = vmatpush2.msra.mxu0 0.0
        %3343 = vmatprep.mubr.f32.mxu0 0.0
        %3344 = vmatmul.mubr.f32.gmra.mxu0 %v3200
        %v3345 = vpop.f32.mrf.mxu0
        %v3346 = vadd.f32 0.0, %v3345
        %v3347 = vpop.f32.mrf.mxu0
        %3348 = vdwg.mxu0
        %v3349 = vadd.f32 %v3181, %v3275
        %v3350 = vadd.f32 %v3182, %v3277
        %v3351 = vadd.f32 %v3183, %v3346
        %v3352 = vld [vmem:[%s5] sm:$0xf]
        %3354 = vset.pattern.permute.xlu0 0
        %3355 = vperm.xlu0 %3354, %v3352
        %v3356 = vpop.permute.xlu0 %3355
        %v3358 = vadd.f32 %v3349, %v3356
        %v3359 = vadd.f32 %v3350, %v3356
        %v3360 = vadd.f32 %v3351, %v3356
        %v3361 = vld [vmem:[%s277 + $0x4] sm:$0xff]
        %v3362 = vld [vmem:[%s277 + $0xc] sm:$0xf]
        %v3364 = vcombine.high %v3361, %v3361
        %v3366 = vadd.f32 %v3358, %v3361
        %v3367 = vadd.f32 %v3359, %v3364
        %v3368 = vadd.f32 %v3360, %v3362
        %v3371 = vcombine.low %v3366, %v3367
        %3373 = vst [vmem:[%s272] sm:$0xff] %v3371
        %3374 = vst.msk [vmem:[%s272 + $0x8] sm:$0xf] %vm1837, %v3368
        %s3375 = sand.u32 %s182, 1
        %s3376 = scalar_lea.sflag [#allocation5], %s3375
        %s3377 = sand.u32 %s182, 1
        %s3378 = smul.addr %s3377, 12
        %s3379 = scalar_lea.vmem [#allocation4], %s3378
        // Predicated region
        $region49: #{tpu_custom_call.1} parent=47 // pred_check
          %p3380 = pneg %p192
        $region50: #{tpu_custom_call.1} parent=47 // pred_check_branch
          %3382 = sbr.rel (%p3380) target = $region52
        $region51: #{tpu_custom_call.1} parent=47 // pred_region
          %s3384 = ssub.s32 192, 192
          %3385 = vsyncadd %s3376, %s3384
          %s3386 = smul.addr %s22, 3
          %s3387 = smul.addr %s3386, 64
          %s3388 = scalar_lea.hbm %s7, %s3387
          %s3390 = sshll.u32 %s3379, 4
          %s3391 = int_to_ptr.vmem [resolvable:$true] %s3390
          %3393 = dma.vmem_to_hbm [thread:$0]  %s3391, 192, %s3388, %s3376
        $region52: #{tpu_custom_call.1} parent=47 // pred_fallthru
          _
      $region48: #{tpu_custom_call.1} parent=5 // pred_fallthru
        _
      %p3394 = scmp.le.s32.totalorder 2, %s17
      // Predicated region
      $region53: #{tpu_custom_call.1} parent=5 // pred_check
        %p3395 = pneg %p3394
      $region54: #{tpu_custom_call.1} parent=5 // pred_check_branch
        %3397 = sbr.rel (%p3395) target = $region56
      $region55: #{tpu_custom_call.1} parent=5 // pred_region
        %s3398 = ssub.s32 %s17, 2
        // Predicated region
        $region57: #{tpu_custom_call.1} parent=55 // pred_check
          %p3399 = pneg %p198
        $region58: #{tpu_custom_call.1} parent=55 // pred_check_branch
          %3401 = sbr.rel (%p3399) target = $region60
        $region59: #{tpu_custom_call.1} parent=55 // pred_region
          %s3402 = sand.u32 %s183, 1
          %s3403 = scalar_lea.sflag [#allocation5], %s3402
          %s3404 = sand.u32 %s183, 1
          %s3405 = smul.addr %s3404, 12
          %s3406 = scalar_lea.vmem [#allocation4], %s3405
          %3407 = dma.done %s3403, 192
        $region60: #{tpu_custom_call.1} parent=55 // pred_fallthru
          _
      $region56: #{tpu_custom_call.1} parent=5 // pred_fallthru
        _
    $region6: #{tpu_custom_call.1} parent=1 // loop_footer
      %s21 = sadd.s32 1, %s17
    $region7: #{tpu_custom_call.1} parent=1 // loop_footer_branch
      %16 = sbr.rel target = $region3
    $region8: #{tpu_custom_call.1} parent=1 // loop_exit
      _
    %3408 = vsyncpa [#allocation5], 1
    %s3409 = scalar_lea.sflag [#allocation5], 1
    %3410 = vsyncpa %s3409, 1

</llo_original>
